<compile_context>
chip_gen: v5e
topology: v5e:2x2
jax: 0.10.0
libtpu: 0.0.40
codegen_flags: <defaults>
</compile_context>

<pallas_src>
import functools
import math

import jax
import jax.numpy as jnp
import numpy as np
from jax.experimental import pallas as pl
from jax.experimental.pallas import tpu as pltpu


def _layernorm(x, gamma, beta, eps=1e-6):
    # eps=1e-6 matches nn.LayerNorm(embed_dim, eps=1e-06) in the module.
    mu = jnp.mean(x, axis=-1, keepdims=True)
    xc = x - mu
    var = jnp.mean(xc * xc, axis=-1, keepdims=True)
    return xc * jax.lax.rsqrt(var + eps) * gamma + beta


def _transformer_block_kernel(
        x_ref,
        ln1_g_ref, ln1_b_ref,
        wqkv_ref, bqkv_ref, wo_ref, bo_ref,
        ln2_g_ref, ln2_b_ref,
        w1_ref, b1_ref, w2_ref, b2_ref,
        out_ref,
        *, num_heads):
    x = x_ref[...]                                   # (S, E) f32
    S, E = x.shape
    head_dim = E // num_heads

    # ---- attention pre-norm (f32 VPU) ----
    xn = _layernorm(x, ln1_g_ref[...], ln1_b_ref[...])

    # ---- fused QKV projection: (S,E)@(E,3E), bf16 operands, f32 acc.
    #      The 1/sqrt(head_dim) scale is already folded into the Q columns.
    qkv = jnp.dot(xn.astype(wqkv_ref.dtype), wqkv_ref[...],
                  preferred_element_type=jnp.float32) + bqkv_ref[...]
    q = qkv[:, 0 * E:1 * E].astype(jnp.bfloat16)
    k = qkv[:, 1 * E:2 * E].astype(jnp.bfloat16)
    v = qkv[:, 2 * E:3 * E].astype(jnp.bfloat16)

    # ---- per-head attention; accumulate the output projection per head so no
    #      (S,E) concat / 32-lane relayout is needed.  (With head_dim=32 the
    #      score matmuls are inherently shallow on the 256-deep MXU; the win
    #      here is bf16 + dense scheduling, not retiling.)
    attn_acc = jnp.zeros((S, E), jnp.float32)
    for h in range(num_heads):
        lo = h * head_dim
        qh = q[:, lo:lo + head_dim]                  # (S, hd) bf16
        kh = k[:, lo:lo + head_dim]
        vh = v[:, lo:lo + head_dim]
        # scores = qh @ kh^T (contract head_dim; no explicit transpose)
        scores = jax.lax.dot_general(
            qh, kh, (((1,), (1,)), ((), ())),
            preferred_element_type=jnp.float32)      # (S, S) f32
        m = jnp.max(scores, axis=-1, keepdims=True)
        e = jnp.exp(scores - m)                      # f32 EUP
        inv_l = pl.reciprocal(jnp.sum(e, axis=-1, keepdims=True), approx=True)
        # normalize after the p@v matmul: one (S, hd) scale instead of (S, S).
        ctx_h = jnp.dot(e.astype(jnp.bfloat16), vh,
                        preferred_element_type=jnp.float32) * inv_l
        # attn_dropout = identity (eval mode).
        attn_acc = attn_acc + jnp.dot(
            ctx_h.astype(jnp.bfloat16), wo_ref[lo:lo + head_dim, :],
            preferred_element_type=jnp.float32)

    x1 = x + attn_acc + bo_ref[...]                  # residual 1 (proj_dropout = id)

    # ---- MLP pre-norm + feed-forward (bf16 MXU operands, f32 acc) ----
    xn2 = _layernorm(x1, ln2_g_ref[...], ln2_b_ref[...])
    h1 = jnp.dot(xn2.astype(w1_ref.dtype), w1_ref[...],
                 preferred_element_type=jnp.float32) + b1_ref[...]
    h1 = jnp.maximum(h1, 0.0)                        # ReLU (mlp dropout = id)
    mlp_out = jnp.dot(h1.astype(w2_ref.dtype), w2_ref[...],
                      preferred_element_type=jnp.float32) + b2_ref[...]

    out_ref[...] = (x1 + mlp_out).astype(out_ref.dtype)   # residual 2


def prepare_params(params, *, num_heads):
    """One-time parameter preparation (hoisted off the kernel launch path):
    fuse Q/K/V into one lane-dense (E, 3E) bf16 operand, fold the attention
    scale into Q, cast all matmul weights to bf16, keep biases/LN params f32.
    Linear weights are given as (in, out) = torch weight.T."""
    (ln1_g, ln1_b, wq, bq, wk, bk, wv, bv, wo, bo,
     ln2_g, ln2_b, w1, b1, w2, b2) = params
    E = wq.shape[0]
    assert E % num_heads == 0
    scale = 1.0 / math.sqrt(E // num_heads)
    row = lambda b: b.reshape(1, -1).astype(jnp.float32)
    wqkv = jnp.concatenate([wq * scale, wk, wv], axis=1).astype(jnp.bfloat16)
    bqkv = jnp.concatenate([bq * scale, bk, bv], axis=0).reshape(1, -1)
    return dict(
        ln1_g=row(ln1_g), ln1_b=row(ln1_b),
        wqkv=wqkv, bqkv=bqkv.astype(jnp.float32),
        wo=wo.astype(jnp.bfloat16), bo=row(bo),
        ln2_g=row(ln2_g), ln2_b=row(ln2_b),
        w1=w1.astype(jnp.bfloat16), b1=row(b1),
        w2=w2.astype(jnp.bfloat16), b2=row(b2),
    )


def transformer_block_forward(x, prep, *, num_heads):
    """x: (B, S, E) f32; prep: output of prepare_params."""
    B, S, E = x.shape
    DFF = prep["w1"].shape[1]

    kernel = functools.partial(_transformer_block_kernel, num_heads=num_heads)

    # Constant-index parameters: fetched once, single-buffered.
    def wspec(shape):
        return pl.BlockSpec(shape, lambda b: (0, 0),
                            pipeline_mode=pl.Buffered(1))

    out = pl.pallas_call(
        kernel,
        out_shape=jax.ShapeDtypeStruct((B, S, E), x.dtype),
        grid_spec=pltpu.PrefetchScalarGridSpec(
            num_scalar_prefetch=0,
            grid=(B,),
            in_specs=[
                # leading batch dim squeezed -> kernel sees (S, E)
                pl.BlockSpec((None, S, E), lambda b: (b, 0, 0)),  # x
                wspec((1, E)),            # ln1 gamma
                wspec((1, E)),            # ln1 beta
                wspec((E, 3 * E)),        # wqkv (bf16, scale folded into Q)
                wspec((1, 3 * E)),        # bqkv (f32)
                wspec((E, E)),            # wo   (bf16)
                wspec((1, E)),            # bo
                wspec((1, E)),            # ln2 gamma
                wspec((1, E)),            # ln2 beta
                wspec((E, DFF)),          # w1   (bf16)
                wspec((1, DFF)),          # b1
                wspec((DFF, E)),          # w2   (bf16)
                wspec((1, E)),            # b2
            ],
            out_specs=pl.BlockSpec((None, S, E), lambda b: (b, 0, 0)),
        ),
        # v7x: the two TCs split the batch grid; on v5e/v6e (one TC) this is a
        # harmless serial 2-step loop.
        compiler_params=pltpu.CompilerParams(
            dimension_semantics=("parallel",)),
    )(x, prep["ln1_g"], prep["ln1_b"], prep["wqkv"], prep["bqkv"],
      prep["wo"], prep["bo"], prep["ln2_g"], prep["ln2_b"],
      prep["w1"], prep["b1"], prep["w2"], prep["b2"])

    # vis=False in the PyTorch module -> attention weights are None.
    return out, None


def _reference_forward(x, params, *, num_heads):
    (ln1_g, ln1_b, wq, bq, wk, bk, wv, bv, wo, bo,
     ln2_g, ln2_b, w1, b1, w2, b2) = params
    B, S, E = x.shape
    hd = E // num_heads

    def ln(t, g, b):
        mu = jnp.mean(t, axis=-1, keepdims=True)
        var = jnp.mean((t - mu) ** 2, axis=-1, keepdims=True)
        return (t - mu) / jnp.sqrt(var + 1e-6) * g + b

    h = x
    xn = ln(x, ln1_g, ln1_b)
    q = xn @ wq + bq
    k = xn @ wk + bk
    v = xn @ wv + bv

    def split(t):
        return t.reshape(B, S, num_heads, hd).transpose(0, 2, 1, 3)

    qh, kh, vh = split(q), split(k), split(v)
    scores = jnp.einsum('bhqd,bhkd->bhqk', qh, kh) / math.sqrt(hd)
    probs = jax.nn.softmax(scores, axis=-1)
    ctx = jnp.einsum('bhqk,bhkd->bhqd', probs, vh)
    ctx = ctx.transpose(0, 2, 1, 3).reshape(B, S, E)
    x1 = h + (ctx @ wo + bo)
    xn2 = ln(x1, ln2_g, ln2_b)
    mlp = jnp.maximum(xn2 @ w1 + b1, 0.0) @ w2 + b2
    return x1 + mlp


if __name__ == "__main__":
    # small shapes: batch=2, seq=128, embed_dim=128, heads=4, d_ff=1024 (from module)
    B, S, E, H, DFF = 2, 128, 128, 4, 1024

    key = jax.random.PRNGKey(0)
    keys = jax.random.split(key, 13)

    def lin_init(kw, kb, fan_in, shape_w):
        # torch nn.Linear default init: uniform(+-1/sqrt(fan_in)); weight stored (in,out)
        bound = 1.0 / math.sqrt(fan_in)
        w = jax.random.uniform(kw, shape_w, jnp.float32, -bound, bound)
        b = jax.random.uniform(kb, (shape_w[1],), jnp.float32, -bound, bound)
        return w, b

    wq, bq = lin_init(keys[0], keys[1], E, (E, E))
    wk, bk = lin_init(keys[2], keys[3], E, (E, E))
    wv, bv = lin_init(keys[4], keys[5], E, (E, E))
    wo, bo = lin_init(keys[6], keys[7], E, (E, E))
    w1, b1 = lin_init(keys[8], keys[9], E, (E, DFF))
    w2, b2 = lin_init(keys[10], keys[11], DFF, (DFF, E))
    ln1_g = jnp.ones((E,), jnp.float32)
    ln1_b = jnp.zeros((E,), jnp.float32)
    ln2_g = jnp.ones((E,), jnp.float32)
    ln2_b = jnp.zeros((E,), jnp.float32)

    x = jax.random.normal(keys[12], (B, S, E), jnp.float32)

    params = (ln1_g, ln1_b, wq, bq, wk, bk, wv, bv, wo, bo,
              ln2_g, ln2_b, w1, b1, w2, b2)

    prep = jax.tree_util.tree_map(jax.block_until_ready,
                                  prepare_params(params, num_heads=H))

    y, weights = transformer_block_forward(x, prep, num_heads=H)
    y = jax.block_until_ready(y)

    y_ref = jax.block_until_ready(_reference_forward(x, params, num_heads=H))
    assert y.shape == (B, S, E)
    assert weights is None
    # bf16 MXU operands + approx reciprocal: expect ~1e-2 rel error vs f32 ref.
    assert np.allclose(np.asarray(y), np.asarray(y_ref), rtol=2e-2, atol=2e-2)

    print("KERNEL_OK")
</pallas_src>

<mosaic_0001>
module attributes {stable_mosaic.version = 11 : i64} {
  func.func @_transformer_block_kernel(%arg0: i32, %arg1: memref<1x128x128xf32, #tpu.memory_space<vmem>>, %arg2: memref<1x128xf32, #tpu.memory_space<vmem>>, %arg3: memref<1x128xf32, #tpu.memory_space<vmem>>, %arg4: memref<128x384xbf16, #tpu.memory_space<vmem>>, %arg5: memref<1x384xf32, #tpu.memory_space<vmem>>, %arg6: memref<128x128xbf16, #tpu.memory_space<vmem>>, %arg7: memref<1x128xf32, #tpu.memory_space<vmem>>, %arg8: memref<1x128xf32, #tpu.memory_space<vmem>>, %arg9: memref<1x128xf32, #tpu.memory_space<vmem>>, %arg10: memref<128x1024xbf16, #tpu.memory_space<vmem>>, %arg11: memref<1x1024xf32, #tpu.memory_space<vmem>>, %arg12: memref<1024x128xbf16, #tpu.memory_space<vmem>>, %arg13: memref<1x128xf32, #tpu.memory_space<vmem>>, %arg14: memref<1x128x128xf32, #tpu.memory_space<vmem>>) attributes {dimension_semantics = [#tpu.dimension_semantics<parallel>], iteration_bounds = array<i64: 2>, scalar_prefetch = 0 : i64, scratch_operands = 0 : i64, tpu.core_type = #tpu.core_type<tc>, window_params = [{transform_indices = @transform_0, window_bounds = array<i64: 1, 128, 128>}, {pipeline_mode = #tpu.pipeline_mode<synchronous>, transform_indices = @transform_1, window_bounds = array<i64: 1, 128>}, {pipeline_mode = #tpu.pipeline_mode<synchronous>, transform_indices = @transform_2, window_bounds = array<i64: 1, 128>}, {pipeline_mode = #tpu.pipeline_mode<synchronous>, transform_indices = @transform_3, window_bounds = array<i64: 128, 384>}, {pipeline_mode = #tpu.pipeline_mode<synchronous>, transform_indices = @transform_4, window_bounds = array<i64: 1, 384>}, {pipeline_mode = #tpu.pipeline_mode<synchronous>, transform_indices = @transform_5, window_bounds = array<i64: 128, 128>}, {pipeline_mode = #tpu.pipeline_mode<synchronous>, transform_indices = @transform_6, window_bounds = array<i64: 1, 128>}, {pipeline_mode = #tpu.pipeline_mode<synchronous>, transform_indices = @transform_7, window_bounds = array<i64: 1, 128>}, {pipeline_mode = #tpu.pipeline_mode<synchronous>, transform_indices = @transform_8, window_bounds = array<i64: 1, 128>}, {pipeline_mode = #tpu.pipeline_mode<synchronous>, transform_indices = @transform_9, window_bounds = array<i64: 128, 1024>}, {pipeline_mode = #tpu.pipeline_mode<synchronous>, transform_indices = @transform_10, window_bounds = array<i64: 1, 1024>}, {pipeline_mode = #tpu.pipeline_mode<synchronous>, transform_indices = @transform_11, window_bounds = array<i64: 1024, 128>}, {pipeline_mode = #tpu.pipeline_mode<synchronous>, transform_indices = @transform_12, window_bounds = array<i64: 1, 128>}, {transform_indices = @transform_13, window_bounds = array<i64: 1, 128, 128>}]} {
    %c0 = arith.constant 0 : index
    %c0_0 = arith.constant 0 : index
    %c0_1 = arith.constant 0 : index
    %0 = vector.load %arg1[%c0, %c0_0, %c0_1] : memref<1x128x128xf32, #tpu.memory_space<vmem>>, vector<1x128x128xf32>
    %1 = vector.shape_cast %0 : vector<1x128x128xf32> to vector<128x128xf32>
    %c0_2 = arith.constant 0 : index
    %c0_3 = arith.constant 0 : index
    %2 = vector.load %arg2[%c0_2, %c0_3] : memref<1x128xf32, #tpu.memory_space<vmem>>, vector<1x128xf32>
    %c0_4 = arith.constant 0 : index
    %c0_5 = arith.constant 0 : index
    %3 = vector.load %arg3[%c0_4, %c0_5] : memref<1x128xf32, #tpu.memory_space<vmem>>, vector<1x128xf32>
    %cst = arith.constant dense<0.000000e+00> : vector<128xf32>
    %4 = vector.multi_reduction <add>, %1, %cst [1] : vector<128x128xf32> to vector<128xf32>
    %5 = vector.shape_cast %4 : vector<128xf32> to vector<128x1xf32>
    %cst_6 = arith.constant 1.280000e+02 : f32
    %6 = vector.broadcast %cst_6 : f32 to vector<128x1xf32>
    %7 = arith.divf %5, %6 : vector<128x1xf32>
    %8 = vector.broadcast %7 : vector<128x1xf32> to vector<128x128xf32>
    %9 = arith.subf %1, %8 : vector<128x128xf32>
    %10 = arith.mulf %9, %9 : vector<128x128xf32>
    %cst_7 = arith.constant dense<0.000000e+00> : vector<128xf32>
    %11 = vector.multi_reduction <add>, %10, %cst_7 [1] : vector<128x128xf32> to vector<128xf32>
    %12 = vector.shape_cast %11 : vector<128xf32> to vector<128x1xf32>
    %cst_8 = arith.constant 1.280000e+02 : f32
    %13 = vector.broadcast %cst_8 : f32 to vector<128x1xf32>
    %14 = arith.divf %12, %13 : vector<128x1xf32>
    %cst_9 = arith.constant 9.99999997E-7 : f32
    %15 = vector.broadcast %cst_9 : f32 to vector<128x1xf32>
    %16 = arith.addf %14, %15 : vector<128x1xf32>
    %17 = math.rsqrt %16 : vector<128x1xf32>
    %18 = vector.broadcast %17 : vector<128x1xf32> to vector<128x128xf32>
    %19 = arith.mulf %9, %18 : vector<128x128xf32>
    %20 = vector.broadcast %2 : vector<1x128xf32> to vector<128x128xf32>
    %21 = arith.mulf %19, %20 : vector<128x128xf32>
    %22 = vector.broadcast %3 : vector<1x128xf32> to vector<128x128xf32>
    %23 = arith.addf %21, %22 : vector<128x128xf32>
    %24 = arith.truncf %23 : vector<128x128xf32> to vector<128x128xbf16>
    %c0_10 = arith.constant 0 : index
    %c0_11 = arith.constant 0 : index
    %25 = vector.load %arg4[%c0_10, %c0_11] : memref<128x384xbf16, #tpu.memory_space<vmem>>, vector<128x384xbf16>
    %cst_12 = arith.constant dense<0.000000e+00> : vector<128x384xf32>
    %26 = tpu.matmul %24, %25, %cst_12 {dimension_numbers = #tpu.dot_dimension_numbers<[1], [0], [0], [1], [0, 0, 1, 1], [], []>} : vector<128x128xbf16>, vector<128x384xbf16>, vector<128x384xf32> -> vector<128x384xf32>
    %c0_13 = arith.constant 0 : index
    %c0_14 = arith.constant 0 : index
    %27 = vector.load %arg5[%c0_13, %c0_14] : memref<1x384xf32, #tpu.memory_space<vmem>>, vector<1x384xf32>
    %28 = vector.broadcast %27 : vector<1x384xf32> to vector<128x384xf32>
    %29 = arith.addf %26, %28 : vector<128x384xf32>
    %30 = vector.extract_strided_slice %29 {offsets = [0, 0], sizes = [128, 128], strides = [1, 1]} : vector<128x384xf32> to vector<128x128xf32>
    %31 = arith.truncf %30 : vector<128x128xf32> to vector<128x128xbf16>
    %32 = vector.extract_strided_slice %29 {offsets = [0, 128], sizes = [128, 128], strides = [1, 1]} : vector<128x384xf32> to vector<128x128xf32>
    %33 = arith.truncf %32 : vector<128x128xf32> to vector<128x128xbf16>
    %34 = vector.extract_strided_slice %29 {offsets = [0, 256], sizes = [128, 128], strides = [1, 1]} : vector<128x384xf32> to vector<128x128xf32>
    %35 = arith.truncf %34 : vector<128x128xf32> to vector<128x128xbf16>
    %cst_15 = arith.constant 0.000000e+00 : f32
    %36 = vector.broadcast %cst_15 : f32 to vector<128x128xf32>
    %37 = vector.extract_strided_slice %31 {offsets = [0, 0], sizes = [128, 32], strides = [1, 1]} : vector<128x128xbf16> to vector<128x32xbf16>
    %38 = vector.extract_strided_slice %33 {offsets = [0, 0], sizes = [128, 32], strides = [1, 1]} : vector<128x128xbf16> to vector<128x32xbf16>
    %39 = vector.extract_strided_slice %35 {offsets = [0, 0], sizes = [128, 32], strides = [1, 1]} : vector<128x128xbf16> to vector<128x32xbf16>
    %cst_16 = arith.constant dense<0.000000e+00> : vector<128x128xf32>
    %40 = tpu.matmul %37, %38, %cst_16 {dimension_numbers = #tpu.dot_dimension_numbers<[1], [1], [0], [0], [0, 0, 1, 0], [], []>} : vector<128x32xbf16>, vector<128x32xbf16>, vector<128x128xf32> -> vector<128x128xf32>
    %cst_17 = arith.constant dense<0xFF800000> : vector<128xf32>
    %41 = vector.multi_reduction <maximumf>, %40, %cst_17 [1] : vector<128x128xf32> to vector<128xf32>
    %42 = vector.shape_cast %41 : vector<128xf32> to vector<128x1xf32>
    %43 = vector.broadcast %42 : vector<128x1xf32> to vector<128x128xf32>
    %44 = arith.subf %40, %43 : vector<128x128xf32>
    %45 = math.exp %44 : vector<128x128xf32>
    %cst_18 = arith.constant dense<0.000000e+00> : vector<128xf32>
    %46 = vector.multi_reduction <add>, %45, %cst_18 [1] : vector<128x128xf32> to vector<128xf32>
    %47 = vector.shape_cast %46 : vector<128xf32> to vector<128x1xf32>
    %48 = tpu.reciprocal %47 {approx = true} : vector<128x1xf32> -> vector<128x1xf32>
    %49 = arith.truncf %45 : vector<128x128xf32> to vector<128x128xbf16>
    %cst_19 = arith.constant dense<0.000000e+00> : vector<128x32xf32>
    %50 = tpu.matmul %49, %39, %cst_19 {dimension_numbers = #tpu.dot_dimension_numbers<[1], [0], [0], [1], [0, 0, 1, 1], [], []>} : vector<128x128xbf16>, vector<128x32xbf16>, vector<128x32xf32> -> vector<128x32xf32>
    %51 = vector.broadcast %48 : vector<128x1xf32> to vector<128x32xf32>
    %52 = arith.mulf %50, %51 : vector<128x32xf32>
    %53 = arith.truncf %52 : vector<128x32xf32> to vector<128x32xbf16>
    %c0_20 = arith.constant 0 : index
    %c0_21 = arith.constant 0 : index
    %54 = vector.load %arg6[%c0_20, %c0_21] : memref<128x128xbf16, #tpu.memory_space<vmem>>, vector<32x128xbf16>
    %cst_22 = arith.constant dense<0.000000e+00> : vector<128x128xf32>
    %55 = tpu.matmul %53, %54, %cst_22 {dimension_numbers = #tpu.dot_dimension_numbers<[1], [0], [0], [1], [0, 0, 1, 1], [], []>} : vector<128x32xbf16>, vector<32x128xbf16>, vector<128x128xf32> -> vector<128x128xf32>
    %56 = arith.addf %36, %55 : vector<128x128xf32>
    %57 = vector.extract_strided_slice %31 {offsets = [0, 32], sizes = [128, 32], strides = [1, 1]} : vector<128x128xbf16> to vector<128x32xbf16>
    %58 = vector.extract_strided_slice %33 {offsets = [0, 32], sizes = [128, 32], strides = [1, 1]} : vector<128x128xbf16> to vector<128x32xbf16>
    %59 = vector.extract_strided_slice %35 {offsets = [0, 32], sizes = [128, 32], strides = [1, 1]} : vector<128x128xbf16> to vector<128x32xbf16>
    %cst_23 = arith.constant dense<0.000000e+00> : vector<128x128xf32>
    %60 = tpu.matmul %57, %58, %cst_23 {dimension_numbers = #tpu.dot_dimension_numbers<[1], [1], [0], [0], [0, 0, 1, 0], [], []>} : vector<128x32xbf16>, vector<128x32xbf16>, vector<128x128xf32> -> vector<128x128xf32>
    %cst_24 = arith.constant dense<0xFF800000> : vector<128xf32>
    %61 = vector.multi_reduction <maximumf>, %60, %cst_24 [1] : vector<128x128xf32> to vector<128xf32>
    %62 = vector.shape_cast %61 : vector<128xf32> to vector<128x1xf32>
    %63 = vector.broadcast %62 : vector<128x1xf32> to vector<128x128xf32>
    %64 = arith.subf %60, %63 : vector<128x128xf32>
    %65 = math.exp %64 : vector<128x128xf32>
    %cst_25 = arith.constant dense<0.000000e+00> : vector<128xf32>
    %66 = vector.multi_reduction <add>, %65, %cst_25 [1] : vector<128x128xf32> to vector<128xf32>
    %67 = vector.shape_cast %66 : vector<128xf32> to vector<128x1xf32>
    %68 = tpu.reciprocal %67 {approx = true} : vector<128x1xf32> -> vector<128x1xf32>
    %69 = arith.truncf %65 : vector<128x128xf32> to vector<128x128xbf16>
    %cst_26 = arith.constant dense<0.000000e+00> : vector<128x32xf32>
    %70 = tpu.matmul %69, %59, %cst_26 {dimension_numbers = #tpu.dot_dimension_numbers<[1], [0], [0], [1], [0, 0, 1, 1], [], []>} : vector<128x128xbf16>, vector<128x32xbf16>, vector<128x32xf32> -> vector<128x32xf32>
    %71 = vector.broadcast %68 : vector<128x1xf32> to vector<128x32xf32>
    %72 = arith.mulf %70, %71 : vector<128x32xf32>
    %73 = arith.truncf %72 : vector<128x32xf32> to vector<128x32xbf16>
    %c32 = arith.constant 32 : index
    %c0_27 = arith.constant 0 : index
    %74 = vector.load %arg6[%c32, %c0_27] : memref<128x128xbf16, #tpu.memory_space<vmem>>, vector<32x128xbf16>
    %cst_28 = arith.constant dense<0.000000e+00> : vector<128x128xf32>
    %75 = tpu.matmul %73, %74, %cst_28 {dimension_numbers = #tpu.dot_dimension_numbers<[1], [0], [0], [1], [0, 0, 1, 1], [], []>} : vector<128x32xbf16>, vector<32x128xbf16>, vector<128x128xf32> -> vector<128x128xf32>
    %76 = arith.addf %56, %75 : vector<128x128xf32>
    %77 = vector.extract_strided_slice %31 {offsets = [0, 64], sizes = [128, 32], strides = [1, 1]} : vector<128x128xbf16> to vector<128x32xbf16>
    %78 = vector.extract_strided_slice %33 {offsets = [0, 64], sizes = [128, 32], strides = [1, 1]} : vector<128x128xbf16> to vector<128x32xbf16>
    %79 = vector.extract_strided_slice %35 {offsets = [0, 64], sizes = [128, 32], strides = [1, 1]} : vector<128x128xbf16> to vector<128x32xbf16>
    %cst_29 = arith.constant dense<0.000000e+00> : vector<128x128xf32>
    %80 = tpu.matmul %77, %78, %cst_29 {dimension_numbers = #tpu.dot_dimension_numbers<[1], [1], [0], [0], [0, 0, 1, 0], [], []>} : vector<128x32xbf16>, vector<128x32xbf16>, vector<128x128xf32> -> vector<128x128xf32>
    %cst_30 = arith.constant dense<0xFF800000> : vector<128xf32>
    %81 = vector.multi_reduction <maximumf>, %80, %cst_30 [1] : vector<128x128xf32> to vector<128xf32>
    %82 = vector.shape_cast %81 : vector<128xf32> to vector<128x1xf32>
    %83 = vector.broadcast %82 : vector<128x1xf32> to vector<128x128xf32>
    %84 = arith.subf %80, %83 : vector<128x128xf32>
    %85 = math.exp %84 : vector<128x128xf32>
    %cst_31 = arith.constant dense<0.000000e+00> : vector<128xf32>
    %86 = vector.multi_reduction <add>, %85, %cst_31 [1] : vector<128x128xf32> to vector<128xf32>
    %87 = vector.shape_cast %86 : vector<128xf32> to vector<128x1xf32>
    %88 = tpu.reciprocal %87 {approx = true} : vector<128x1xf32> -> vector<128x1xf32>
    %89 = arith.truncf %85 : vector<128x128xf32> to vector<128x128xbf16>
    %cst_32 = arith.constant dense<0.000000e+00> : vector<128x32xf32>
    %90 = tpu.matmul %89, %79, %cst_32 {dimension_numbers = #tpu.dot_dimension_numbers<[1], [0], [0], [1], [0, 0, 1, 1], [], []>} : vector<128x128xbf16>, vector<128x32xbf16>, vector<128x32xf32> -> vector<128x32xf32>
    %91 = vector.broadcast %88 : vector<128x1xf32> to vector<128x32xf32>
    %92 = arith.mulf %90, %91 : vector<128x32xf32>
    %93 = arith.truncf %92 : vector<128x32xf32> to vector<128x32xbf16>
    %c64 = arith.constant 64 : index
    %c0_33 = arith.constant 0 : index
    %94 = vector.load %arg6[%c64, %c0_33] : memref<128x128xbf16, #tpu.memory_space<vmem>>, vector<32x128xbf16>
    %cst_34 = arith.constant dense<0.000000e+00> : vector<128x128xf32>
    %95 = tpu.matmul %93, %94, %cst_34 {dimension_numbers = #tpu.dot_dimension_numbers<[1], [0], [0], [1], [0, 0, 1, 1], [], []>} : vector<128x32xbf16>, vector<32x128xbf16>, vector<128x128xf32> -> vector<128x128xf32>
    %96 = arith.addf %76, %95 : vector<128x128xf32>
    %97 = vector.extract_strided_slice %31 {offsets = [0, 96], sizes = [128, 32], strides = [1, 1]} : vector<128x128xbf16> to vector<128x32xbf16>
    %98 = vector.extract_strided_slice %33 {offsets = [0, 96], sizes = [128, 32], strides = [1, 1]} : vector<128x128xbf16> to vector<128x32xbf16>
    %99 = vector.extract_strided_slice %35 {offsets = [0, 96], sizes = [128, 32], strides = [1, 1]} : vector<128x128xbf16> to vector<128x32xbf16>
    %cst_35 = arith.constant dense<0.000000e+00> : vector<128x128xf32>
    %100 = tpu.matmul %97, %98, %cst_35 {dimension_numbers = #tpu.dot_dimension_numbers<[1], [1], [0], [0], [0, 0, 1, 0], [], []>} : vector<128x32xbf16>, vector<128x32xbf16>, vector<128x128xf32> -> vector<128x128xf32>
    %cst_36 = arith.constant dense<0xFF800000> : vector<128xf32>
    %101 = vector.multi_reduction <maximumf>, %100, %cst_36 [1] : vector<128x128xf32> to vector<128xf32>
    %102 = vector.shape_cast %101 : vector<128xf32> to vector<128x1xf32>
    %103 = vector.broadcast %102 : vector<128x1xf32> to vector<128x128xf32>
    %104 = arith.subf %100, %103 : vector<128x128xf32>
    %105 = math.exp %104 : vector<128x128xf32>
    %cst_37 = arith.constant dense<0.000000e+00> : vector<128xf32>
    %106 = vector.multi_reduction <add>, %105, %cst_37 [1] : vector<128x128xf32> to vector<128xf32>
    %107 = vector.shape_cast %106 : vector<128xf32> to vector<128x1xf32>
    %108 = tpu.reciprocal %107 {approx = true} : vector<128x1xf32> -> vector<128x1xf32>
    %109 = arith.truncf %105 : vector<128x128xf32> to vector<128x128xbf16>
    %cst_38 = arith.constant dense<0.000000e+00> : vector<128x32xf32>
    %110 = tpu.matmul %109, %99, %cst_38 {dimension_numbers = #tpu.dot_dimension_numbers<[1], [0], [0], [1], [0, 0, 1, 1], [], []>} : vector<128x128xbf16>, vector<128x32xbf16>, vector<128x32xf32> -> vector<128x32xf32>
    %111 = vector.broadcast %108 : vector<128x1xf32> to vector<128x32xf32>
    %112 = arith.mulf %110, %111 : vector<128x32xf32>
    %113 = arith.truncf %112 : vector<128x32xf32> to vector<128x32xbf16>
    %c96 = arith.constant 96 : index
    %c0_39 = arith.constant 0 : index
    %114 = vector.load %arg6[%c96, %c0_39] : memref<128x128xbf16, #tpu.memory_space<vmem>>, vector<32x128xbf16>
    %cst_40 = arith.constant dense<0.000000e+00> : vector<128x128xf32>
    %115 = tpu.matmul %113, %114, %cst_40 {dimension_numbers = #tpu.dot_dimension_numbers<[1], [0], [0], [1], [0, 0, 1, 1], [], []>} : vector<128x32xbf16>, vector<32x128xbf16>, vector<128x128xf32> -> vector<128x128xf32>
    %116 = arith.addf %96, %115 : vector<128x128xf32>
    %117 = arith.addf %1, %116 : vector<128x128xf32>
    %c0_41 = arith.constant 0 : index
    %c0_42 = arith.constant 0 : index
    %118 = vector.load %arg7[%c0_41, %c0_42] : memref<1x128xf32, #tpu.memory_space<vmem>>, vector<1x128xf32>
    %119 = vector.broadcast %118 : vector<1x128xf32> to vector<128x128xf32>
    %120 = arith.addf %117, %119 : vector<128x128xf32>
    %c0_43 = arith.constant 0 : index
    %c0_44 = arith.constant 0 : index
    %121 = vector.load %arg8[%c0_43, %c0_44] : memref<1x128xf32, #tpu.memory_space<vmem>>, vector<1x128xf32>
    %c0_45 = arith.constant 0 : index
    %c0_46 = arith.constant 0 : index
    %122 = vector.load %arg9[%c0_45, %c0_46] : memref<1x128xf32, #tpu.memory_space<vmem>>, vector<1x128xf32>
    %cst_47 = arith.constant dense<0.000000e+00> : vector<128xf32>
    %123 = vector.multi_reduction <add>, %120, %cst_47 [1] : vector<128x128xf32> to vector<128xf32>
    %124 = vector.shape_cast %123 : vector<128xf32> to vector<128x1xf32>
    %cst_48 = arith.constant 1.280000e+02 : f32
    %125 = vector.broadcast %cst_48 : f32 to vector<128x1xf32>
    %126 = arith.divf %124, %125 : vector<128x1xf32>
    %127 = vector.broadcast %126 : vector<128x1xf32> to vector<128x128xf32>
    %128 = arith.subf %120, %127 : vector<128x128xf32>
    %129 = arith.mulf %128, %128 : vector<128x128xf32>
    %cst_49 = arith.constant dense<0.000000e+00> : vector<128xf32>
    %130 = vector.multi_reduction <add>, %129, %cst_49 [1] : vector<128x128xf32> to vector<128xf32>
    %131 = vector.shape_cast %130 : vector<128xf32> to vector<128x1xf32>
    %cst_50 = arith.constant 1.280000e+02 : f32
    %132 = vector.broadcast %cst_50 : f32 to vector<128x1xf32>
    %133 = arith.divf %131, %132 : vector<128x1xf32>
    %cst_51 = arith.constant 9.99999997E-7 : f32
    %134 = vector.broadcast %cst_51 : f32 to vector<128x1xf32>
    %135 = arith.addf %133, %134 : vector<128x1xf32>
    %136 = math.rsqrt %135 : vector<128x1xf32>
    %137 = vector.broadcast %136 : vector<128x1xf32> to vector<128x128xf32>
    %138 = arith.mulf %128, %137 : vector<128x128xf32>
    %139 = vector.broadcast %121 : vector<1x128xf32> to vector<128x128xf32>
    %140 = arith.mulf %138, %139 : vector<128x128xf32>
    %141 = vector.broadcast %122 : vector<1x128xf32> to vector<128x128xf32>
    %142 = arith.addf %140, %141 : vector<128x128xf32>
    %143 = arith.truncf %142 : vector<128x128xf32> to vector<128x128xbf16>
    %c0_52 = arith.constant 0 : index
    %c0_53 = arith.constant 0 : index
    %144 = vector.load %arg10[%c0_52, %c0_53] : memref<128x1024xbf16, #tpu.memory_space<vmem>>, vector<128x1024xbf16>
    %cst_54 = arith.constant dense<0.000000e+00> : vector<128x1024xf32>
    %145 = tpu.matmul %143, %144, %cst_54 {dimension_numbers = #tpu.dot_dimension_numbers<[1], [0], [0], [1], [0, 0, 1, 1], [], []>} : vector<128x128xbf16>, vector<128x1024xbf16>, vector<128x1024xf32> -> vector<128x1024xf32>
    %c0_55 = arith.constant 0 : index
    %c0_56 = arith.constant 0 : index
    %146 = vector.load %arg11[%c0_55, %c0_56] : memref<1x1024xf32, #tpu.memory_space<vmem>>, vector<1x1024xf32>
    %147 = vector.broadcast %146 : vector<1x1024xf32> to vector<128x1024xf32>
    %148 = arith.addf %145, %147 : vector<128x1024xf32>
    %cst_57 = arith.constant 0.000000e+00 : f32
    %149 = vector.broadcast %cst_57 : f32 to vector<128x1024xf32>
    %150 = arith.maximumf %148, %149 : vector<128x1024xf32>
    %151 = arith.truncf %150 : vector<128x1024xf32> to vector<128x1024xbf16>
    %c0_58 = arith.constant 0 : index
    %c0_59 = arith.constant 0 : index
    %152 = vector.load %arg12[%c0_58, %c0_59] : memref<1024x128xbf16, #tpu.memory_space<vmem>>, vector<1024x128xbf16>
    %cst_60 = arith.constant dense<0.000000e+00> : vector<128x128xf32>
    %153 = tpu.matmul %151, %152, %cst_60 {dimension_numbers = #tpu.dot_dimension_numbers<[1], [0], [0], [1], [0, 0, 1, 1], [], []>} : vector<128x1024xbf16>, vector<1024x128xbf16>, vector<128x128xf32> -> vector<128x128xf32>
    %c0_61 = arith.constant 0 : index
    %c0_62 = arith.constant 0 : index
    %154 = vector.load %arg13[%c0_61, %c0_62] : memref<1x128xf32, #tpu.memory_space<vmem>>, vector<1x128xf32>
    %155 = vector.broadcast %154 : vector<1x128xf32> to vector<128x128xf32>
    %156 = arith.addf %153, %155 : vector<128x128xf32>
    %157 = arith.addf %120, %156 : vector<128x128xf32>
    %c0_63 = arith.constant 0 : index
    %c0_64 = arith.constant 0 : index
    %c0_65 = arith.constant 0 : index
    %158 = vector.load %arg14[%c0_63, %c0_64, %c0_65] : memref<1x128x128xf32, #tpu.memory_space<vmem>>, vector<1x128x128xf32>
    %159 = vector.shape_cast %158 : vector<1x128x128xf32> to vector<128x128xf32>
    %160 = vector.shape_cast %157 : vector<128x128xf32> to vector<1x128x128xf32>
    tpu.vector_store %arg14[%c0_63, %c0_64, %c0_65], %160 {strides = array<i32>} : memref<1x128x128xf32, #tpu.memory_space<vmem>>, vector<1x128x128xf32>,
    return
  }
  func.func @transform_0(%arg0: i32) -> (i32, i32, i32) {
    %c0_i32 = arith.constant 0 : i32
    %c0_i32_0 = arith.constant 0 : i32
    %c0_i32_1 = arith.constant 0 : i32
    return %arg0, %c0_i32, %c0_i32_0 : i32, i32, i32
  }
  func.func @transform_1(%arg0: i32) -> (i32, i32) {
    %c0_i32 = arith.constant 0 : i32
    %c0_i32_0 = arith.constant 0 : i32
    %c0_i32_1 = arith.constant 0 : i32
    return %c0_i32, %c0_i32_0 : i32, i32
  }
  func.func @transform_2(%arg0: i32) -> (i32, i32) {
    %c0_i32 = arith.constant 0 : i32
    %c0_i32_0 = arith.constant 0 : i32
    %c0_i32_1 = arith.constant 0 : i32
    return %c0_i32, %c0_i32_0 : i32, i32
  }
  func.func @transform_3(%arg0: i32) -> (i32, i32) {
    %c0_i32 = arith.constant 0 : i32
    %c0_i32_0 = arith.constant 0 : i32
    %c0_i32_1 = arith.constant 0 : i32
    return %c0_i32, %c0_i32_0 : i32, i32
  }
  func.func @transform_4(%arg0: i32) -> (i32, i32) {
    %c0_i32 = arith.constant 0 : i32
    %c0_i32_0 = arith.constant 0 : i32
    %c0_i32_1 = arith.constant 0 : i32
    return %c0_i32, %c0_i32_0 : i32, i32
  }
  func.func @transform_5(%arg0: i32) -> (i32, i32) {
    %c0_i32 = arith.constant 0 : i32
    %c0_i32_0 = arith.constant 0 : i32
    %c0_i32_1 = arith.constant 0 : i32
    return %c0_i32, %c0_i32_0 : i32, i32
  }
  func.func @transform_6(%arg0: i32) -> (i32, i32) {
    %c0_i32 = arith.constant 0 : i32
    %c0_i32_0 = arith.constant 0 : i32
    %c0_i32_1 = arith.constant 0 : i32
    return %c0_i32, %c0_i32_0 : i32, i32
  }
  func.func @transform_7(%arg0: i32) -> (i32, i32) {
    %c0_i32 = arith.constant 0 : i32
    %c0_i32_0 = arith.constant 0 : i32
    %c0_i32_1 = arith.constant 0 : i32
    return %c0_i32, %c0_i32_0 : i32, i32
  }
  func.func @transform_8(%arg0: i32) -> (i32, i32) {
    %c0_i32 = arith.constant 0 : i32
    %c0_i32_0 = arith.constant 0 : i32
    %c0_i32_1 = arith.constant 0 : i32
    return %c0_i32, %c0_i32_0 : i32, i32
  }
  func.func @transform_9(%arg0: i32) -> (i32, i32) {
    %c0_i32 = arith.constant 0 : i32
    %c0_i32_0 = arith.constant 0 : i32
    %c0_i32_1 = arith.constant 0 : i32
    return %c0_i32, %c0_i32_0 : i32, i32
  }
  func.func @transform_10(%arg0: i32) -> (i32, i32) {
    %c0_i32 = arith.constant 0 : i32
    %c0_i32_0 = arith.constant 0 : i32
    %c0_i32_1 = arith.constant 0 : i32
    return %c0_i32, %c0_i32_0 : i32, i32
  }
  func.func @transform_11(%arg0: i32) -> (i32, i32) {
    %c0_i32 = arith.constant 0 : i32
    %c0_i32_0 = arith.constant 0 : i32
    %c0_i32_1 = arith.constant 0 : i32
    return %c0_i32, %c0_i32_0 : i32, i32
  }
  func.func @transform_12(%arg0: i32) -> (i32, i32) {
    %c0_i32 = arith.constant 0 : i32
    %c0_i32_0 = arith.constant 0 : i32
    %c0_i32_1 = arith.constant 0 : i32
    return %c0_i32, %c0_i32_0 : i32, i32
  }
  func.func @transform_13(%arg0: i32) -> (i32, i32, i32) {
    %c0_i32 = arith.constant 0 : i32
    %c0_i32_0 = arith.constant 0 : i32
    %c0_i32_1 = arith.constant 0 : i32
    return %arg0, %c0_i32, %c0_i32_0 : i32, i32, i32
  }
}

</mosaic_0001>

<llo_original>
// kernel: tpu_custom_call.1
$region0: #{tpu_custom_call.1}
  #allocation0 [shape = 'u32[]', space=smem, size = 0x4, offset = 0x4, fixed_abs, tag = 'smem constant byte address 0x4 - core index']
  #allocation1 [shape = 'u32[72,128]{1,0:T(1,128)}', space=vmem, size = 0x9000, scoped, tag = 'internal scratch']
  %s0 = inlined_call_operand.hbm [shape: f32[2,128,128], index: 0, kind: input, shape index: {}]
  %s1 = inlined_call_operand.hbm [shape: f32[1,128], index: 1, kind: input, shape index: {}]
  %s2 = inlined_call_operand.vmem [shape: f32[1,128], index: 2, kind: input, shape index: {}]
  %s3 = inlined_call_operand.hbm [shape: bf16[128,384], index: 3, kind: input, shape index: {}]
  %s4 = inlined_call_operand.hbm [shape: f32[1,384], index: 4, kind: input, shape index: {}]
  %s5 = inlined_call_operand.hbm [shape: bf16[128,128], index: 5, kind: input, shape index: {}]
  %s6 = inlined_call_operand.hbm [shape: f32[1,128], index: 6, kind: input, shape index: {}]
  %s7 = inlined_call_operand.hbm [shape: f32[1,128], index: 7, kind: input, shape index: {}]
  %s8 = inlined_call_operand.hbm [shape: f32[1,128], index: 8, kind: input, shape index: {}]
  %s9 = inlined_call_operand.hbm [shape: bf16[128,1024], index: 9, kind: input, shape index: {}]
  %s10 = inlined_call_operand.vmem [shape: f32[1,1024], index: 10, kind: input, shape index: {}]
  %s11 = inlined_call_operand.hbm [shape: bf16[1024,128], index: 11, kind: input, shape index: {}]
  %s12 = inlined_call_operand.vmem [shape: f32[1,128], index: 12, kind: input, shape index: {}]
  %s13 = inlined_call_operand.hbm [shape: f32[2,128,128], index: 13, kind: output, shape index: {}]
  %s14 = sld [smem:[#allocation0]]
  $region125: #{tpu_custom_call.1} parent=0
    _
  %s16 = ssub.s32 1, %s14
  %s17 = scalar_select 0, %s16, %s14
  $region1: #{tpu_custom_call.1} parent=0
    #allocation2 [shape = 'u8[131072]{0}', space=vmem, size = 0x20000, scoped, tag = 'input window, operand 0']
    #allocation3 [shape = 's32[2]{0}', space=sflag, size = 0x8, scoped, tag = 'scoped memory for tpu_custom_call.1']
    #allocation4 [shape = 's32[2]{0}', space=sflag, size = 0x8, scoped, tag = 'scoped memory for tpu_custom_call.1']
    #allocation5 [shape = 'u8[512]{0}', space=vmem, size = 0x400, scoped, tag = 'input window, operand 1, single buffered']
    #allocation6 [shape = 's32[1]{0}', space=sflag, size = 0x4, scoped, tag = 'scoped memory for tpu_custom_call.1']
    #allocation7 [shape = 'u8[98304]{0}', space=vmem, size = 0x18000, scoped, tag = 'input window, operand 3, single buffered']
    #allocation8 [shape = 'u8[1536]{0}', space=vmem, size = 0x800, scoped, tag = 'input window, operand 4, single buffered']
    #allocation9 [shape = 's32[1]{0}', space=sflag, size = 0x4, scoped, tag = 'scoped memory for tpu_custom_call.1']
    #allocation10 [shape = 'u8[32768]{0}', space=vmem, size = 0x8000, scoped, tag = 'input window, operand 5, single buffered']
    #allocation11 [shape = 'u8[512]{0}', space=vmem, size = 0x400, scoped, tag = 'input window, operand 6, single buffered']
    #allocation12 [shape = 's32[1]{0}', space=sflag, size = 0x4, scoped, tag = 'scoped memory for tpu_custom_call.1']
    #allocation13 [shape = 'u8[512]{0}', space=vmem, size = 0x400, scoped, tag = 'input window, operand 7, single buffered']
    #allocation14 [shape = 'u8[512]{0}', space=vmem, size = 0x400, scoped, tag = 'input window, operand 8, single buffered']
    #allocation15 [shape = 's32[1]{0}', space=sflag, size = 0x4, scoped, tag = 'scoped memory for tpu_custom_call.1']
    #allocation16 [shape = 'u8[262144]{0}', space=vmem, size = 0x40000, scoped, tag = 'input window, operand 9, single buffered']
    #allocation17 [shape = 'u8[262144]{0}', space=vmem, size = 0x40000, scoped, tag = 'input window, operand 11, single buffered']
    #allocation18 [shape = 's32[1]{0}', space=sflag, size = 0x4, scoped, tag = 'scoped memory for tpu_custom_call.1']
    #allocation19 [shape = 'u8[131072]{0}', space=vmem, size = 0x20000, scoped, tag = 'output window, operand 0']
    %18 = vsyncpa [#allocation3], 0
    %s19 = scalar_lea.sflag [#allocation3], 1
    %20 = vsyncpa %s19, 0
    %21 = vsyncpa [#allocation6], 0
    %22 = vsyncpa [#allocation9], 0
    %23 = vsyncpa [#allocation12], 0
    %24 = vsyncpa [#allocation15], 0
    %25 = vsyncpa [#allocation18], 0
    %26 = vsyncpa [#allocation4], 0
    %s27 = scalar_lea.sflag [#allocation4], 1
    %28 = vsyncpa %s27, 0
    loop: start=0, step=1, limit=4
    $region2: #{tpu_custom_call.1} parent=1 // loop_pre_header
      _
    $region3: #{tpu_custom_call.1} parent=1 // loop_header
      %s30 = sphi 0, %s34
      %p31 = scmp.ge.s32.totalorder %s30, 4
      %s40 = sphi 0, %s42
      %s43 = sphi 0, %s40
      %s44 = sphi 0, %s43
      %s60 = sphi 0, %s44
      %s64 = sphi 0, %s64
      %s66 = sphi 0, %s64
      %s67 = sphi 0, %s66
      %s81 = sphi 0, %s67
      %s85 = sphi 0, %s85
      %s87 = sphi 0, %s85
      %s88 = sphi 0, %s87
      %s102 = sphi 0, %s88
      %s106 = sphi 0, %s106
      %s108 = sphi 0, %s106
      %s109 = sphi 0, %s108
      %s123 = sphi 0, %s109
      %s127 = sphi 0, %s127
      %s129 = sphi 0, %s127
      %s130 = sphi 0, %s129
      %s144 = sphi 0, %s130
      %s148 = sphi 0, %s148
      %s150 = sphi 0, %s148
      %s151 = sphi 0, %s150
      %s165 = sphi 0, %s151
      %s169 = sphi 0, %s169
      %s171 = sphi 0, %s169
      %s172 = sphi 0, %s171
      %s186 = sphi 0, %s172
      %s190 = sphi 0, %s190
      %s192 = sphi 0, %s190
      %s193 = sphi 0, %s192
      %s207 = sphi 0, %s193
      %s211 = sphi 0, %s211
      %s213 = sphi 0, %s211
      %s214 = sphi 0, %s213
      %s228 = sphi 0, %s214
      %s232 = sphi 0, %s232
      %s234 = sphi 0, %s232
      %s235 = sphi 0, %s234
      %s249 = sphi 0, %s235
      %s253 = sphi 0, %s253
      %s255 = sphi 0, %s253
      %s256 = sphi 0, %s255
      %s270 = sphi 0, %s256
      %s274 = sphi 0, %s274
      %s276 = sphi 0, %s274
      %s277 = sphi 0, %s276
      %s291 = sphi 0, %s277
      %s295 = sphi 0, %s295
      %s297 = sphi 0, %s295
      %s298 = sphi 0, %s297
      %s312 = sphi 0, %s298
      %s318 = sphi 0, %s320
      %s321 = sphi 0, %s318
      %s322 = sphi 0, %s321
      %s338 = sphi 0, %s322
    $region4: #{tpu_custom_call.1} parent=1 // loop_header_branch
      %33 = sbr.rel (%p31) target = $region8
    $region5: #{tpu_custom_call.1} parent=1 // loop_body
      %s35 = ssub.s32 %s30, 1
      %s36 = ssub.s32 %s30, 2
      %s37 = sadd.s32 %s30, 1
      %s38 = ssub.s32 %s30, %s37
      %p39 = scmp.eq.s32.totalorder %s38, 0
      %s41 = sadd.s32 %s40, 1
      %s42 = scalar_select %p39, %s40, %s41
      %p45 = pneg %p39
      %p46 = scmp.eq.s32.totalorder %s30, 1
      %p47 = por %p45, %p46
      %p48 = scmp.ne.s32.totalorder %s40, %s43
      %p49 = scmp.eq.s32.totalorder %s30, 0
      %p50 = por %p48, %p49
      %p51 = scmp.ne.s32.totalorder %s40, %s43
      %p52 = scmp.eq.s32.totalorder %s35, 1
      %p53 = por %p51, %p52
      %p54 = scmp.ne.s32.totalorder %s43, %s44
      %p55 = scmp.eq.s32.totalorder %s35, 0
      %p56 = por %p54, %p55
      %p57 = scmp.ne.s32.totalorder %s43, %s44
      %p58 = scmp.eq.s32.totalorder %s36, 1
      %p59 = por %p57, %p58
      %p61 = scmp.ne.s32.totalorder %s44, %s60
      %p62 = scmp.eq.s32.totalorder %s36, 0
      %p63 = por %p61, %p62
      %s65 = sadd.s32 %s64, 1
      %p68 = scmp.eq.s32.totalorder %s30, 1
      %p69 = scmp.ne.s32.totalorder %s64, %s66
      %p70 = scmp.eq.s32.totalorder %s30, 0
      %p71 = por %p69, %p70
      %p72 = scmp.ne.s32.totalorder %s64, %s66
      %p73 = scmp.eq.s32.totalorder %s35, 1
      %p74 = por %p72, %p73
      %p75 = scmp.ne.s32.totalorder %s66, %s67
      %p76 = scmp.eq.s32.totalorder %s35, 0
      %p77 = por %p75, %p76
      %p78 = scmp.ne.s32.totalorder %s66, %s67
      %p79 = scmp.eq.s32.totalorder %s36, 1
      %p80 = por %p78, %p79
      %p82 = scmp.ne.s32.totalorder %s67, %s81
      %p83 = scmp.eq.s32.totalorder %s36, 0
      %p84 = por %p82, %p83
      %s86 = sadd.s32 %s85, 1
      %p89 = scmp.eq.s32.totalorder %s30, 1
      %p90 = scmp.ne.s32.totalorder %s85, %s87
      %p91 = scmp.eq.s32.totalorder %s30, 0
      %p92 = por %p90, %p91
      %p93 = scmp.ne.s32.totalorder %s85, %s87
      %p94 = scmp.eq.s32.totalorder %s35, 1
      %p95 = por %p93, %p94
      %p96 = scmp.ne.s32.totalorder %s87, %s88
      %p97 = scmp.eq.s32.totalorder %s35, 0
      %p98 = por %p96, %p97
      %p99 = scmp.ne.s32.totalorder %s87, %s88
      %p100 = scmp.eq.s32.totalorder %s36, 1
      %p101 = por %p99, %p100
      %p103 = scmp.ne.s32.totalorder %s88, %s102
      %p104 = scmp.eq.s32.totalorder %s36, 0
      %p105 = por %p103, %p104
      %s107 = sadd.s32 %s106, 1
      %p110 = scmp.eq.s32.totalorder %s30, 1
      %p111 = scmp.ne.s32.totalorder %s106, %s108
      %p112 = scmp.eq.s32.totalorder %s30, 0
      %p113 = por %p111, %p112
      %p114 = scmp.ne.s32.totalorder %s106, %s108
      %p115 = scmp.eq.s32.totalorder %s35, 1
      %p116 = por %p114, %p115
      %p117 = scmp.ne.s32.totalorder %s108, %s109
      %p118 = scmp.eq.s32.totalorder %s35, 0
      %p119 = por %p117, %p118
      %p120 = scmp.ne.s32.totalorder %s108, %s109
      %p121 = scmp.eq.s32.totalorder %s36, 1
      %p122 = por %p120, %p121
      %p124 = scmp.ne.s32.totalorder %s109, %s123
      %p125 = scmp.eq.s32.totalorder %s36, 0
      %p126 = por %p124, %p125
      %s128 = sadd.s32 %s127, 1
      %p131 = scmp.eq.s32.totalorder %s30, 1
      %p132 = scmp.ne.s32.totalorder %s127, %s129
      %p133 = scmp.eq.s32.totalorder %s30, 0
      %p134 = por %p132, %p133
      %p135 = scmp.ne.s32.totalorder %s127, %s129
      %p136 = scmp.eq.s32.totalorder %s35, 1
      %p137 = por %p135, %p136
      %p138 = scmp.ne.s32.totalorder %s129, %s130
      %p139 = scmp.eq.s32.totalorder %s35, 0
      %p140 = por %p138, %p139
      %p141 = scmp.ne.s32.totalorder %s129, %s130
      %p142 = scmp.eq.s32.totalorder %s36, 1
      %p143 = por %p141, %p142
      %p145 = scmp.ne.s32.totalorder %s130, %s144
      %p146 = scmp.eq.s32.totalorder %s36, 0
      %p147 = por %p145, %p146
      %s149 = sadd.s32 %s148, 1
      %p152 = scmp.eq.s32.totalorder %s30, 1
      %p153 = scmp.ne.s32.totalorder %s148, %s150
      %p154 = scmp.eq.s32.totalorder %s30, 0
      %p155 = por %p153, %p154
      %p156 = scmp.ne.s32.totalorder %s148, %s150
      %p157 = scmp.eq.s32.totalorder %s35, 1
      %p158 = por %p156, %p157
      %p159 = scmp.ne.s32.totalorder %s150, %s151
      %p160 = scmp.eq.s32.totalorder %s35, 0
      %p161 = por %p159, %p160
      %p162 = scmp.ne.s32.totalorder %s150, %s151
      %p163 = scmp.eq.s32.totalorder %s36, 1
      %p164 = por %p162, %p163
      %p166 = scmp.ne.s32.totalorder %s151, %s165
      %p167 = scmp.eq.s32.totalorder %s36, 0
      %p168 = por %p166, %p167
      %s170 = sadd.s32 %s169, 1
      %p173 = scmp.eq.s32.totalorder %s30, 1
      %p174 = scmp.ne.s32.totalorder %s169, %s171
      %p175 = scmp.eq.s32.totalorder %s30, 0
      %p176 = por %p174, %p175
      %p177 = scmp.ne.s32.totalorder %s169, %s171
      %p178 = scmp.eq.s32.totalorder %s35, 1
      %p179 = por %p177, %p178
      %p180 = scmp.ne.s32.totalorder %s171, %s172
      %p181 = scmp.eq.s32.totalorder %s35, 0
      %p182 = por %p180, %p181
      %p183 = scmp.ne.s32.totalorder %s171, %s172
      %p184 = scmp.eq.s32.totalorder %s36, 1
      %p185 = por %p183, %p184
      %p187 = scmp.ne.s32.totalorder %s172, %s186
      %p188 = scmp.eq.s32.totalorder %s36, 0
      %p189 = por %p187, %p188
      %s191 = sadd.s32 %s190, 1
      %p194 = scmp.eq.s32.totalorder %s30, 1
      %p195 = scmp.ne.s32.totalorder %s190, %s192
      %p196 = scmp.eq.s32.totalorder %s30, 0
      %p197 = por %p195, %p196
      %p198 = scmp.ne.s32.totalorder %s190, %s192
      %p199 = scmp.eq.s32.totalorder %s35, 1
      %p200 = por %p198, %p199
      %p201 = scmp.ne.s32.totalorder %s192, %s193
      %p202 = scmp.eq.s32.totalorder %s35, 0
      %p203 = por %p201, %p202
      %p204 = scmp.ne.s32.totalorder %s192, %s193
      %p205 = scmp.eq.s32.totalorder %s36, 1
      %p206 = por %p204, %p205
      %p208 = scmp.ne.s32.totalorder %s193, %s207
      %p209 = scmp.eq.s32.totalorder %s36, 0
      %p210 = por %p208, %p209
      %s212 = sadd.s32 %s211, 1
      %p215 = scmp.eq.s32.totalorder %s30, 1
      %p216 = scmp.ne.s32.totalorder %s211, %s213
      %p217 = scmp.eq.s32.totalorder %s30, 0
      %p218 = por %p216, %p217
      %p219 = scmp.ne.s32.totalorder %s211, %s213
      %p220 = scmp.eq.s32.totalorder %s35, 1
      %p221 = por %p219, %p220
      %p222 = scmp.ne.s32.totalorder %s213, %s214
      %p223 = scmp.eq.s32.totalorder %s35, 0
      %p224 = por %p222, %p223
      %p225 = scmp.ne.s32.totalorder %s213, %s214
      %p226 = scmp.eq.s32.totalorder %s36, 1
      %p227 = por %p225, %p226
      %p229 = scmp.ne.s32.totalorder %s214, %s228
      %p230 = scmp.eq.s32.totalorder %s36, 0
      %p231 = por %p229, %p230
      %s233 = sadd.s32 %s232, 1
      %p236 = scmp.eq.s32.totalorder %s30, 1
      %p237 = scmp.ne.s32.totalorder %s232, %s234
      %p238 = scmp.eq.s32.totalorder %s30, 0
      %p239 = por %p237, %p238
      %p240 = scmp.ne.s32.totalorder %s232, %s234
      %p241 = scmp.eq.s32.totalorder %s35, 1
      %p242 = por %p240, %p241
      %p243 = scmp.ne.s32.totalorder %s234, %s235
      %p244 = scmp.eq.s32.totalorder %s35, 0
      %p245 = por %p243, %p244
      %p246 = scmp.ne.s32.totalorder %s234, %s235
      %p247 = scmp.eq.s32.totalorder %s36, 1
      %p248 = por %p246, %p247
      %p250 = scmp.ne.s32.totalorder %s235, %s249
      %p251 = scmp.eq.s32.totalorder %s36, 0
      %p252 = por %p250, %p251
      %s254 = sadd.s32 %s253, 1
      %p257 = scmp.eq.s32.totalorder %s30, 1
      %p258 = scmp.ne.s32.totalorder %s253, %s255
      %p259 = scmp.eq.s32.totalorder %s30, 0
      %p260 = por %p258, %p259
      %p261 = scmp.ne.s32.totalorder %s253, %s255
      %p262 = scmp.eq.s32.totalorder %s35, 1
      %p263 = por %p261, %p262
      %p264 = scmp.ne.s32.totalorder %s255, %s256
      %p265 = scmp.eq.s32.totalorder %s35, 0
      %p266 = por %p264, %p265
      %p267 = scmp.ne.s32.totalorder %s255, %s256
      %p268 = scmp.eq.s32.totalorder %s36, 1
      %p269 = por %p267, %p268
      %p271 = scmp.ne.s32.totalorder %s256, %s270
      %p272 = scmp.eq.s32.totalorder %s36, 0
      %p273 = por %p271, %p272
      %s275 = sadd.s32 %s274, 1
      %p278 = scmp.eq.s32.totalorder %s30, 1
      %p279 = scmp.ne.s32.totalorder %s274, %s276
      %p280 = scmp.eq.s32.totalorder %s30, 0
      %p281 = por %p279, %p280
      %p282 = scmp.ne.s32.totalorder %s274, %s276
      %p283 = scmp.eq.s32.totalorder %s35, 1
      %p284 = por %p282, %p283
      %p285 = scmp.ne.s32.totalorder %s276, %s277
      %p286 = scmp.eq.s32.totalorder %s35, 0
      %p287 = por %p285, %p286
      %p288 = scmp.ne.s32.totalorder %s276, %s277
      %p289 = scmp.eq.s32.totalorder %s36, 1
      %p290 = por %p288, %p289
      %p292 = scmp.ne.s32.totalorder %s277, %s291
      %p293 = scmp.eq.s32.totalorder %s36, 0
      %p294 = por %p292, %p293
      %s296 = sadd.s32 %s295, 1
      %p299 = scmp.eq.s32.totalorder %s30, 1
      %p300 = scmp.ne.s32.totalorder %s295, %s297
      %p301 = scmp.eq.s32.totalorder %s30, 0
      %p302 = por %p300, %p301
      %p303 = scmp.ne.s32.totalorder %s295, %s297
      %p304 = scmp.eq.s32.totalorder %s35, 1
      %p305 = por %p303, %p304
      %p306 = scmp.ne.s32.totalorder %s297, %s298
      %p307 = scmp.eq.s32.totalorder %s35, 0
      %p308 = por %p306, %p307
      %p309 = scmp.ne.s32.totalorder %s297, %s298
      %p310 = scmp.eq.s32.totalorder %s36, 1
      %p311 = por %p309, %p310
      %p313 = scmp.ne.s32.totalorder %s298, %s312
      %p314 = scmp.eq.s32.totalorder %s36, 0
      %p315 = por %p313, %p314
      %s316 = ssub.s32 %s30, %s37
      %p317 = scmp.eq.s32.totalorder %s316, 0
      %s319 = sadd.s32 %s318, 1
      %s320 = scalar_select %p317, %s318, %s319
      %p323 = pneg %p317
      %p324 = scmp.eq.s32.totalorder %s30, 1
      %p325 = por %p323, %p324
      %p326 = scmp.ne.s32.totalorder %s318, %s321
      %p327 = scmp.eq.s32.totalorder %s30, 0
      %p328 = por %p326, %p327
      %p329 = scmp.ne.s32.totalorder %s318, %s321
      %p330 = scmp.eq.s32.totalorder %s35, 1
      %p331 = por %p329, %p330
      %p332 = scmp.ne.s32.totalorder %s321, %s322
      %p333 = scmp.eq.s32.totalorder %s35, 0
      %p334 = por %p332, %p333
      %p335 = scmp.ne.s32.totalorder %s321, %s322
      %p336 = scmp.eq.s32.totalorder %s36, 1
      %p337 = por %p335, %p336
      %p339 = scmp.ne.s32.totalorder %s322, %s338
      %p340 = scmp.eq.s32.totalorder %s36, 0
      %p341 = por %p339, %p340
      %p342 = scmp.le.s32.totalorder 1, %s30
      %p343 = scmp.lt.s32.totalorder %s30, 3
      %p344 = pnand %p342, %p343
      %p345 = pneg %p344
      // Predicated region
      $region9: #{tpu_custom_call.1} parent=5 // pred_check
        _
      $region10: #{tpu_custom_call.1} parent=5 // pred_check_branch
        %347 = sbr.rel (%p344) target = $region12
      $region11: #{tpu_custom_call.1} parent=5 // pred_region
        %s348 = ssub.s32 %s30, 1
        // Predicated region
        $region13: #{tpu_custom_call.1} parent=11 // pred_check
          %p349 = pneg %p77
        $region14: #{tpu_custom_call.1} parent=11 // pred_check_branch
          %351 = sbr.rel (%p349) target = $region16
        $region15: #{tpu_custom_call.1} parent=11 // pred_region
          %353 = vsyncadd [#allocation6], 0
          %s355 = sshll.u32 %s1, 4
          %s356 = int_to_ptr.hbm [resolvable:$true] %s355
          %s357 = sshll.u32 [#allocation5], 4
          %s358 = int_to_ptr.vmem [resolvable:$true] %s357
          %360 = dma.hbm_to_vmem [thread:$0]  %s356, 16, %s358, [#allocation6]
        $region16: #{tpu_custom_call.1} parent=11 // pred_fallthru
          _
        // Predicated region
        $region17: #{tpu_custom_call.1} parent=11 // pred_check
          %p361 = pneg %p98
        $region18: #{tpu_custom_call.1} parent=11 // pred_check_branch
          %363 = sbr.rel (%p361) target = $region20
        $region19: #{tpu_custom_call.1} parent=11 // pred_region
          _
        $region20: #{tpu_custom_call.1} parent=11 // pred_fallthru
          _
        // Predicated region
        $region21: #{tpu_custom_call.1} parent=11 // pred_check
          %p364 = pneg %p119
        $region22: #{tpu_custom_call.1} parent=11 // pred_check_branch
          %366 = sbr.rel (%p364) target = $region24
        $region23: #{tpu_custom_call.1} parent=11 // pred_region
          %368 = vsyncadd [#allocation6], 0
          %s369 = sshll.u32 %s3, 4
          %s370 = int_to_ptr.hbm [resolvable:$true] %s369
          %s371 = sshll.u32 [#allocation7], 4
          %s372 = int_to_ptr.vmem [resolvable:$true] %s371
          %377 = dma.hbm_to_vmem [thread:$0]  %s370, 3072, %s372, [#allocation6], 192, 192, 12
        $region24: #{tpu_custom_call.1} parent=11 // pred_fallthru
          _
        // Predicated region
        $region25: #{tpu_custom_call.1} parent=11 // pred_check
          %p378 = pneg %p140
        $region26: #{tpu_custom_call.1} parent=11 // pred_check_branch
          %380 = sbr.rel (%p378) target = $region28
        $region27: #{tpu_custom_call.1} parent=11 // pred_region
          %382 = vsyncadd [#allocation9], 0
          %s384 = sshll.u32 %s4, 4
          %s385 = int_to_ptr.hbm [resolvable:$true] %s384
          %s386 = sshll.u32 [#allocation8], 4
          %s387 = int_to_ptr.vmem [resolvable:$true] %s386
          %389 = dma.hbm_to_vmem [thread:$0]  %s385, 48, %s387, [#allocation9]
        $region28: #{tpu_custom_call.1} parent=11 // pred_fallthru
          _
        // Predicated region
        $region29: #{tpu_custom_call.1} parent=11 // pred_check
          %p390 = pneg %p161
        $region30: #{tpu_custom_call.1} parent=11 // pred_check_branch
          %392 = sbr.rel (%p390) target = $region32
        $region31: #{tpu_custom_call.1} parent=11 // pred_region
          %394 = vsyncadd [#allocation9], 0
          %s395 = sshll.u32 %s5, 4
          %s396 = int_to_ptr.hbm [resolvable:$true] %s395
          %s397 = sshll.u32 [#allocation10], 4
          %s398 = int_to_ptr.vmem [resolvable:$true] %s397
          %403 = dma.hbm_to_vmem [thread:$0]  %s396, 1024, %s398, [#allocation9], 64, 64, 4
        $region32: #{tpu_custom_call.1} parent=11 // pred_fallthru
          _
        // Predicated region
        $region33: #{tpu_custom_call.1} parent=11 // pred_check
          %p404 = pneg %p182
        $region34: #{tpu_custom_call.1} parent=11 // pred_check_branch
          %406 = sbr.rel (%p404) target = $region36
        $region35: #{tpu_custom_call.1} parent=11 // pred_region
          %408 = vsyncadd [#allocation12], 0
          %s410 = sshll.u32 %s6, 4
          %s411 = int_to_ptr.hbm [resolvable:$true] %s410
          %s412 = sshll.u32 [#allocation11], 4
          %s413 = int_to_ptr.vmem [resolvable:$true] %s412
          %415 = dma.hbm_to_vmem [thread:$0]  %s411, 16, %s413, [#allocation12]
        $region36: #{tpu_custom_call.1} parent=11 // pred_fallthru
          _
        // Predicated region
        $region37: #{tpu_custom_call.1} parent=11 // pred_check
          %p416 = pneg %p203
        $region38: #{tpu_custom_call.1} parent=11 // pred_check_branch
          %418 = sbr.rel (%p416) target = $region40
        $region39: #{tpu_custom_call.1} parent=11 // pred_region
          %420 = vsyncadd [#allocation12], 0
          %s422 = sshll.u32 %s7, 4
          %s423 = int_to_ptr.hbm [resolvable:$true] %s422
          %s424 = sshll.u32 [#allocation13], 4
          %s425 = int_to_ptr.vmem [resolvable:$true] %s424
          %427 = dma.hbm_to_vmem [thread:$0]  %s423, 16, %s425, [#allocation12]
        $region40: #{tpu_custom_call.1} parent=11 // pred_fallthru
          _
        // Predicated region
        $region41: #{tpu_custom_call.1} parent=11 // pred_check
          %p428 = pneg %p224
        $region42: #{tpu_custom_call.1} parent=11 // pred_check_branch
          %430 = sbr.rel (%p428) target = $region44
        $region43: #{tpu_custom_call.1} parent=11 // pred_region
          %432 = vsyncadd [#allocation15], 0
          %s434 = sshll.u32 %s8, 4
          %s435 = int_to_ptr.hbm [resolvable:$true] %s434
          %s436 = sshll.u32 [#allocation14], 4
          %s437 = int_to_ptr.vmem [resolvable:$true] %s436
          %439 = dma.hbm_to_vmem [thread:$0]  %s435, 16, %s437, [#allocation15]
        $region44: #{tpu_custom_call.1} parent=11 // pred_fallthru
          _
        // Predicated region
        $region45: #{tpu_custom_call.1} parent=11 // pred_check
          %p440 = pneg %p245
        $region46: #{tpu_custom_call.1} parent=11 // pred_check_branch
          %442 = sbr.rel (%p440) target = $region48
        $region47: #{tpu_custom_call.1} parent=11 // pred_region
          %444 = vsyncadd [#allocation15], 0
          %s445 = sshll.u32 %s9, 4
          %s446 = int_to_ptr.hbm [resolvable:$true] %s445
          %s447 = sshll.u32 [#allocation16], 4
          %s448 = int_to_ptr.vmem [resolvable:$true] %s447
          %453 = dma.hbm_to_vmem [thread:$0]  %s446, 8192, %s448, [#allocation15], 512, 512, 32
        $region48: #{tpu_custom_call.1} parent=11 // pred_fallthru
          _
        // Predicated region
        $region49: #{tpu_custom_call.1} parent=11 // pred_check
          %p454 = pneg %p266
        $region50: #{tpu_custom_call.1} parent=11 // pred_check_branch
          %456 = sbr.rel (%p454) target = $region52
        $region51: #{tpu_custom_call.1} parent=11 // pred_region
          _
        $region52: #{tpu_custom_call.1} parent=11 // pred_fallthru
          _
        // Predicated region
        $region53: #{tpu_custom_call.1} parent=11 // pred_check
          %p457 = pneg %p287
        $region54: #{tpu_custom_call.1} parent=11 // pred_check_branch
          %459 = sbr.rel (%p457) target = $region56
        $region55: #{tpu_custom_call.1} parent=11 // pred_region
          %461 = vsyncadd [#allocation18], 0
          %s462 = sshll.u32 %s11, 4
          %s463 = int_to_ptr.hbm [resolvable:$true] %s462
          %s464 = sshll.u32 [#allocation17], 4
          %s465 = int_to_ptr.vmem [resolvable:$true] %s464
          %470 = dma.hbm_to_vmem [thread:$0]  %s463, 8192, %s465, [#allocation18], 64, 64, 4
        $region56: #{tpu_custom_call.1} parent=11 // pred_fallthru
          _
        // Predicated region
        $region57: #{tpu_custom_call.1} parent=11 // pred_check
          %p471 = pneg %p308
        $region58: #{tpu_custom_call.1} parent=11 // pred_check_branch
          %473 = sbr.rel (%p471) target = $region60
        $region59: #{tpu_custom_call.1} parent=11 // pred_region
          _
        $region60: #{tpu_custom_call.1} parent=11 // pred_fallthru
          _
      $region12: #{tpu_custom_call.1} parent=5 // pred_fallthru
        _
      %p474 = scmp.lt.s32.totalorder %s30, 2
      // Predicated region
      $region61: #{tpu_custom_call.1} parent=5 // pred_check
        %p475 = pneg %p474
      $region62: #{tpu_custom_call.1} parent=5 // pred_check_branch
        %477 = sbr.rel (%p475) target = $region64
      $region63: #{tpu_custom_call.1} parent=5 // pred_region
        // Predicated region
        $region65: #{tpu_custom_call.1} parent=63 // pred_check
          %p478 = pneg %p50
        $region66: #{tpu_custom_call.1} parent=63 // pred_check_branch
          %480 = sbr.rel (%p478) target = $region68
        $region67: #{tpu_custom_call.1} parent=63 // pred_region
          %s481 = sand.u32 %s40, 1
          %s482 = scalar_lea.sflag [#allocation3], %s481
          %s483 = sand.u32 %s40, 1
          %s484 = smul.addr %s483, 128
          %s485 = scalar_lea.vmem [#allocation2], %s484
          %487 = vsyncadd %s482, 0
          %s488 = smul.addr %s30, 16
          %s489 = smul.addr %s488, 8
          %s490 = scalar_lea.hbm %s0, %s489
          %s491 = sshll.u32 %s490, 4
          %s492 = int_to_ptr.hbm [resolvable:$true] %s491
          %s493 = sshll.u32 %s485, 4
          %s494 = int_to_ptr.vmem [resolvable:$true] %s493
          %499 = dma.hbm_to_vmem [thread:$0]  %s492, 2048, %s494, %s482, 128, 128, 8
        $region68: #{tpu_custom_call.1} parent=63 // pred_fallthru
          _
      $region64: #{tpu_custom_call.1} parent=5 // pred_fallthru
        _
      %p500 = scmp.le.s32.totalorder 1, %s30
      %p501 = scmp.lt.s32.totalorder %s30, 3
      %p502 = pnand %p500, %p501
      %p503 = pneg %p502
      // Predicated region
      $region69: #{tpu_custom_call.1} parent=5 // pred_check
        _
      $region70: #{tpu_custom_call.1} parent=5 // pred_check_branch
        %505 = sbr.rel (%p502) target = $region72
      $region71: #{tpu_custom_call.1} parent=5 // pred_region
        %s506 = ssub.s32 %s30, 1
        %s507 = sand.u32 %s43, 1
        %s508 = scalar_lea.sflag [#allocation3], %s507
        %s509 = sand.u32 %s43, 1
        %s510 = smul.addr %s509, 128
        %s511 = scalar_lea.vmem [#allocation2], %s510
        // Predicated region
        $region73: #{tpu_custom_call.1} parent=71 // pred_check
          %p512 = pneg %p56
        $region74: #{tpu_custom_call.1} parent=71 // pred_check_branch
          %514 = sbr.rel (%p512) target = $region76
        $region75: #{tpu_custom_call.1} parent=71 // pred_region
          %516 = dma.done %s508, 2048
        $region76: #{tpu_custom_call.1} parent=71 // pred_fallthru
          _
        // Predicated region
        $region77: #{tpu_custom_call.1} parent=71 // pred_check
          %p517 = pneg %p77
        $region78: #{tpu_custom_call.1} parent=71 // pred_check_branch
          %519 = sbr.rel (%p517) target = $region80
        $region79: #{tpu_custom_call.1} parent=71 // pred_region
          %521 = dma.done [#allocation6], 16
        $region80: #{tpu_custom_call.1} parent=71 // pred_fallthru
          _
        // Predicated region
        $region81: #{tpu_custom_call.1} parent=71 // pred_check
          %p522 = pneg %p119
        $region82: #{tpu_custom_call.1} parent=71 // pred_check_branch
          %524 = sbr.rel (%p522) target = $region84
        $region83: #{tpu_custom_call.1} parent=71 // pred_region
          %526 = dma.done [#allocation6], 3072
        $region84: #{tpu_custom_call.1} parent=71 // pred_fallthru
          _
        // Predicated region
        $region85: #{tpu_custom_call.1} parent=71 // pred_check
          %p527 = pneg %p140
        $region86: #{tpu_custom_call.1} parent=71 // pred_check_branch
          %529 = sbr.rel (%p527) target = $region88
        $region87: #{tpu_custom_call.1} parent=71 // pred_region
          %531 = dma.done [#allocation9], 48
        $region88: #{tpu_custom_call.1} parent=71 // pred_fallthru
          _
        // Predicated region
        $region89: #{tpu_custom_call.1} parent=71 // pred_check
          %p532 = pneg %p161
        $region90: #{tpu_custom_call.1} parent=71 // pred_check_branch
          %534 = sbr.rel (%p532) target = $region92
        $region91: #{tpu_custom_call.1} parent=71 // pred_region
          %536 = dma.done [#allocation9], 1024
        $region92: #{tpu_custom_call.1} parent=71 // pred_fallthru
          _
        // Predicated region
        $region93: #{tpu_custom_call.1} parent=71 // pred_check
          %p537 = pneg %p182
        $region94: #{tpu_custom_call.1} parent=71 // pred_check_branch
          %539 = sbr.rel (%p537) target = $region96
        $region95: #{tpu_custom_call.1} parent=71 // pred_region
          %541 = dma.done [#allocation12], 16
        $region96: #{tpu_custom_call.1} parent=71 // pred_fallthru
          _
        // Predicated region
        $region97: #{tpu_custom_call.1} parent=71 // pred_check
          %p542 = pneg %p203
        $region98: #{tpu_custom_call.1} parent=71 // pred_check_branch
          %544 = sbr.rel (%p542) target = $region100
        $region99: #{tpu_custom_call.1} parent=71 // pred_region
          %546 = dma.done [#allocation12], 16
        $region100: #{tpu_custom_call.1} parent=71 // pred_fallthru
          _
        // Predicated region
        $region101: #{tpu_custom_call.1} parent=71 // pred_check
          %p547 = pneg %p224
        $region102: #{tpu_custom_call.1} parent=71 // pred_check_branch
          %549 = sbr.rel (%p547) target = $region104
        $region103: #{tpu_custom_call.1} parent=71 // pred_region
          %551 = dma.done [#allocation15], 16
        $region104: #{tpu_custom_call.1} parent=71 // pred_fallthru
          _
        // Predicated region
        $region105: #{tpu_custom_call.1} parent=71 // pred_check
          %p552 = pneg %p245
        $region106: #{tpu_custom_call.1} parent=71 // pred_check_branch
          %554 = sbr.rel (%p552) target = $region108
        $region107: #{tpu_custom_call.1} parent=71 // pred_region
          %556 = dma.done [#allocation15], 8192
        $region108: #{tpu_custom_call.1} parent=71 // pred_fallthru
          _
        // Predicated region
        $region109: #{tpu_custom_call.1} parent=71 // pred_check
          %p557 = pneg %p287
        $region110: #{tpu_custom_call.1} parent=71 // pred_check_branch
          %559 = sbr.rel (%p557) target = $region112
        $region111: #{tpu_custom_call.1} parent=71 // pred_region
          %561 = dma.done [#allocation18], 8192
        $region112: #{tpu_custom_call.1} parent=71 // pred_fallthru
          _
        %s562 = sand.u32 %s43, 1
        %s563 = scalar_lea.sflag [#allocation3], %s562
        %s564 = sand.u32 %s43, 1
        %s565 = smul.addr %s564, 128
        %s566 = scalar_lea.vmem [#allocation2], %s565
        %p567 = pneg %p56
        %p568 = pneg %p53
        %p569 = pneg %p77
        %p570 = pneg %p74
        %p571 = pneg %p98
        %p572 = pneg %p95
        %p573 = pneg %p119
        %p574 = pneg %p116
        %p575 = pneg %p140
        %p576 = pneg %p137
        %p577 = pneg %p161
        %p578 = pneg %p158
        %p579 = pneg %p182
        %p580 = pneg %p179
        %p581 = pneg %p203
        %p582 = pneg %p200
        %p583 = pneg %p224
        %p584 = pneg %p221
        %p585 = pneg %p245
        %p586 = pneg %p242
        %p587 = pneg %p266
        %p588 = pneg %p263
        %p589 = pneg %p287
        %p590 = pneg %p284
        %p591 = pneg %p308
        %p592 = pneg %p305
        %p593 = pneg %p334
        %p594 = pneg %p331
        %s595 = sand.u32 %s321, 1
        %s596 = scalar_lea.sflag [#allocation4], %s595
        %s597 = sand.u32 %s321, 1
        %s598 = smul.addr %s597, 128
        %s599 = scalar_lea.vmem [#allocation19], %s598
        %v601 = vld [vmem:[%s511] sm:$0xff]
        %v602 = vld [vmem:[%s511 + $0x8] sm:$0xff]
        %v603 = vld [vmem:[%s511 + $0x10] sm:$0xff]
        %v604 = vld [vmem:[%s511 + $0x18] sm:$0xff]
        %v605 = vld [vmem:[%s511 + $0x20] sm:$0xff]
        %v606 = vld [vmem:[%s511 + $0x28] sm:$0xff]
        %v607 = vld [vmem:[%s511 + $0x30] sm:$0xff]
        %v608 = vld [vmem:[%s511 + $0x38] sm:$0xff]
        %v609 = vld [vmem:[%s511 + $0x40] sm:$0xff]
        %v610 = vld [vmem:[%s511 + $0x48] sm:$0xff]
        %v611 = vld [vmem:[%s511 + $0x50] sm:$0xff]
        %v612 = vld [vmem:[%s511 + $0x58] sm:$0xff]
        %v613 = vld [vmem:[%s511 + $0x60] sm:$0xff]
        %v614 = vld [vmem:[%s511 + $0x68] sm:$0xff]
        %v615 = vld [vmem:[%s511 + $0x70] sm:$0xff]
        %v616 = vld [vmem:[%s511 + $0x78] sm:$0xff]
        %v617 = vld [vmem:[#allocation5] sm:$0x1]
        %v618 = vld [vmem:[%s2] sm:$0x1]
        %619 = vadd.xlane.f32.xlu0 %v601
        %v620 = vpop.xlane.xlu0 %619
        %621 = vadd.xlane.f32.xlu0 %v602
        %v622 = vpop.xlane.xlu0 %621
        %623 = vadd.xlane.f32.xlu0 %v603
        %v624 = vpop.xlane.xlu0 %623
        %625 = vadd.xlane.f32.xlu0 %v604
        %v626 = vpop.xlane.xlu0 %625
        %627 = vadd.xlane.f32.xlu0 %v605
        %v628 = vpop.xlane.xlu0 %627
        %629 = vadd.xlane.f32.xlu0 %v606
        %v630 = vpop.xlane.xlu0 %629
        %631 = vadd.xlane.f32.xlu0 %v607
        %v632 = vpop.xlane.xlu0 %631
        %633 = vadd.xlane.f32.xlu0 %v608
        %v634 = vpop.xlane.xlu0 %633
        %635 = vadd.xlane.f32.xlu0 %v609
        %v636 = vpop.xlane.xlu0 %635
        %637 = vadd.xlane.f32.xlu0 %v610
        %v638 = vpop.xlane.xlu0 %637
        %639 = vadd.xlane.f32.xlu0 %v611
        %v640 = vpop.xlane.xlu0 %639
        %641 = vadd.xlane.f32.xlu0 %v612
        %v642 = vpop.xlane.xlu0 %641
        %643 = vadd.xlane.f32.xlu0 %v613
        %v644 = vpop.xlane.xlu0 %643
        %645 = vadd.xlane.f32.xlu0 %v614
        %v646 = vpop.xlane.xlu0 %645
        %647 = vadd.xlane.f32.xlu0 %v615
        %v648 = vpop.xlane.xlu0 %647
        %649 = vadd.xlane.f32.xlu0 %v616
        %v650 = vpop.xlane.xlu0 %649
        %v651 = vrcp.pop 128.0
        %v652 = vmul.f32 128.0, %v651
        %v653 = vsub.f32 1.0, %v652
        %v654 = vmul.f32 %v651, %v653
        %v655 = vadd.f32 %v651, %v654
        %vm656 = vweird.f32 %v651
        %v657 = vsel %vm656, %v651, %v655
        %v658 = vmul.f32 %v620, %v657
        %v659 = vmul.f32 %v622, %v657
        %v660 = vmul.f32 %v624, %v657
        %v661 = vmul.f32 %v626, %v657
        %v662 = vmul.f32 %v628, %v657
        %v663 = vmul.f32 %v630, %v657
        %v664 = vmul.f32 %v632, %v657
        %v665 = vmul.f32 %v634, %v657
        %v666 = vmul.f32 %v636, %v657
        %v667 = vmul.f32 %v638, %v657
        %v668 = vmul.f32 %v640, %v657
        %v669 = vmul.f32 %v642, %v657
        %v670 = vmul.f32 %v644, %v657
        %v671 = vmul.f32 %v646, %v657
        %v672 = vmul.f32 %v648, %v657
        %v673 = vmul.f32 %v650, %v657
        %v674 = vsub.f32 %v601, %v658
        %v675 = vsub.f32 %v602, %v659
        %v676 = vsub.f32 %v603, %v660
        %v677 = vsub.f32 %v604, %v661
        %v678 = vsub.f32 %v605, %v662
        %v679 = vsub.f32 %v606, %v663
        %v680 = vsub.f32 %v607, %v664
        %v681 = vsub.f32 %v608, %v665
        %v682 = vsub.f32 %v609, %v666
        %v683 = vsub.f32 %v610, %v667
        %v684 = vsub.f32 %v611, %v668
        %v685 = vsub.f32 %v612, %v669
        %v686 = vsub.f32 %v613, %v670
        %v687 = vsub.f32 %v614, %v671
        %v688 = vsub.f32 %v615, %v672
        %v689 = vsub.f32 %v616, %v673
        %v690 = vmul.f32 %v674, %v674
        %v691 = vmul.f32 %v675, %v675
        %v692 = vmul.f32 %v676, %v676
        %v693 = vmul.f32 %v677, %v677
        %v694 = vmul.f32 %v678, %v678
        %v695 = vmul.f32 %v679, %v679
        %v696 = vmul.f32 %v680, %v680
        %v697 = vmul.f32 %v681, %v681
        %v698 = vmul.f32 %v682, %v682
        %v699 = vmul.f32 %v683, %v683
        %v700 = vmul.f32 %v684, %v684
        %v701 = vmul.f32 %v685, %v685
        %v702 = vmul.f32 %v686, %v686
        %v703 = vmul.f32 %v687, %v687
        %v704 = vmul.f32 %v688, %v688
        %v705 = vmul.f32 %v689, %v689
        %706 = vadd.xlane.f32.xlu0 %v690
        %v707 = vpop.xlane.xlu0 %706
        %708 = vadd.xlane.f32.xlu0 %v691
        %v709 = vpop.xlane.xlu0 %708
        %710 = vadd.xlane.f32.xlu0 %v692
        %v711 = vpop.xlane.xlu0 %710
        %712 = vadd.xlane.f32.xlu0 %v693
        %v713 = vpop.xlane.xlu0 %712
        %714 = vadd.xlane.f32.xlu0 %v694
        %v715 = vpop.xlane.xlu0 %714
        %716 = vadd.xlane.f32.xlu0 %v695
        %v717 = vpop.xlane.xlu0 %716
        %718 = vadd.xlane.f32.xlu0 %v696
        %v719 = vpop.xlane.xlu0 %718
        %720 = vadd.xlane.f32.xlu0 %v697
        %v721 = vpop.xlane.xlu0 %720
        %722 = vadd.xlane.f32.xlu0 %v698
        %v723 = vpop.xlane.xlu0 %722
        %724 = vadd.xlane.f32.xlu0 %v699
        %v725 = vpop.xlane.xlu0 %724
        %726 = vadd.xlane.f32.xlu0 %v700
        %v727 = vpop.xlane.xlu0 %726
        %728 = vadd.xlane.f32.xlu0 %v701
        %v729 = vpop.xlane.xlu0 %728
        %730 = vadd.xlane.f32.xlu0 %v702
        %v731 = vpop.xlane.xlu0 %730
        %732 = vadd.xlane.f32.xlu0 %v703
        %v733 = vpop.xlane.xlu0 %732
        %734 = vadd.xlane.f32.xlu0 %v704
        %v735 = vpop.xlane.xlu0 %734
        %736 = vadd.xlane.f32.xlu0 %v705
        %v737 = vpop.xlane.xlu0 %736
        %v738 = vmul.f32 %v707, %v657
        %v739 = vmul.f32 %v709, %v657
        %v740 = vmul.f32 %v711, %v657
        %v741 = vmul.f32 %v713, %v657
        %v742 = vmul.f32 %v715, %v657
        %v743 = vmul.f32 %v717, %v657
        %v744 = vmul.f32 %v719, %v657
        %v745 = vmul.f32 %v721, %v657
        %v746 = vmul.f32 %v723, %v657
        %v747 = vmul.f32 %v725, %v657
        %v748 = vmul.f32 %v727, %v657
        %v749 = vmul.f32 %v729, %v657
        %v750 = vmul.f32 %v731, %v657
        %v751 = vmul.f32 %v733, %v657
        %v752 = vmul.f32 %v735, %v657
        %v753 = vmul.f32 %v737, %v657
        %v754 = vadd.f32 %v738, 1e-06
        %v755 = vadd.f32 %v739, 1e-06
        %v756 = vadd.f32 %v740, 1e-06
        %v757 = vadd.f32 %v741, 1e-06
        %v758 = vadd.f32 %v742, 1e-06
        %v759 = vadd.f32 %v743, 1e-06
        %v760 = vadd.f32 %v744, 1e-06
        %v761 = vadd.f32 %v745, 1e-06
        %v762 = vadd.f32 %v746, 1e-06
        %v763 = vadd.f32 %v747, 1e-06
        %v764 = vadd.f32 %v748, 1e-06
        %v765 = vadd.f32 %v749, 1e-06
        %v766 = vadd.f32 %v750, 1e-06
        %v767 = vadd.f32 %v751, 1e-06
        %v768 = vadd.f32 %v752, 1e-06
        %v769 = vadd.f32 %v753, 1e-06
        %v770 = vrsqrt.pop %v754
        %v771 = vmul.f32 %v770, %v754
        %v772 = vmul.f32 %v771, %v770
        %v773 = vmul.f32 0.5, %v772
        %v774 = vsub.f32 1.5, %v773
        %v775 = vmul.f32 %v770, %v774
        %vm776 = vweird.f32 %v754
        %vm777 = vweird.f32 %v770
        %vm778 = vmor %vm776, %vm777
        %v779 = vsel %vm778, %v770, %v775
        %v780 = vrsqrt.pop %v755
        %v781 = vmul.f32 %v780, %v755
        %v782 = vmul.f32 %v781, %v780
        %v783 = vmul.f32 0.5, %v782
        %v784 = vsub.f32 1.5, %v783
        %v785 = vmul.f32 %v780, %v784
        %vm786 = vweird.f32 %v755
        %vm787 = vweird.f32 %v780
        %vm788 = vmor %vm786, %vm787
        %v789 = vsel %vm788, %v780, %v785
        %v790 = vrsqrt.pop %v756
        %v791 = vmul.f32 %v790, %v756
        %v792 = vmul.f32 %v791, %v790
        %v793 = vmul.f32 0.5, %v792
        %v794 = vsub.f32 1.5, %v793
        %v795 = vmul.f32 %v790, %v794
        %vm796 = vweird.f32 %v756
        %vm797 = vweird.f32 %v790
        %vm798 = vmor %vm796, %vm797
        %v799 = vsel %vm798, %v790, %v795
        %v800 = vrsqrt.pop %v757
        %v801 = vmul.f32 %v800, %v757
        %v802 = vmul.f32 %v801, %v800
        %v803 = vmul.f32 0.5, %v802
        %v804 = vsub.f32 1.5, %v803
        %v805 = vmul.f32 %v800, %v804
        %vm806 = vweird.f32 %v757
        %vm807 = vweird.f32 %v800
        %vm808 = vmor %vm806, %vm807
        %v809 = vsel %vm808, %v800, %v805
        %v810 = vrsqrt.pop %v758
        %v811 = vmul.f32 %v810, %v758
        %v812 = vmul.f32 %v811, %v810
        %v813 = vmul.f32 0.5, %v812
        %v814 = vsub.f32 1.5, %v813
        %v815 = vmul.f32 %v810, %v814
        %vm816 = vweird.f32 %v758
        %vm817 = vweird.f32 %v810
        %vm818 = vmor %vm816, %vm817
        %v819 = vsel %vm818, %v810, %v815
        %v820 = vrsqrt.pop %v759
        %v821 = vmul.f32 %v820, %v759
        %v822 = vmul.f32 %v821, %v820
        %v823 = vmul.f32 0.5, %v822
        %v824 = vsub.f32 1.5, %v823
        %v825 = vmul.f32 %v820, %v824
        %vm826 = vweird.f32 %v759
        %vm827 = vweird.f32 %v820
        %vm828 = vmor %vm826, %vm827
        %v829 = vsel %vm828, %v820, %v825
        %v830 = vrsqrt.pop %v760
        %v831 = vmul.f32 %v830, %v760
        %v832 = vmul.f32 %v831, %v830
        %v833 = vmul.f32 0.5, %v832
        %v834 = vsub.f32 1.5, %v833
        %v835 = vmul.f32 %v830, %v834
        %vm836 = vweird.f32 %v760
        %vm837 = vweird.f32 %v830
        %vm838 = vmor %vm836, %vm837
        %v839 = vsel %vm838, %v830, %v835
        %v840 = vrsqrt.pop %v761
        %v841 = vmul.f32 %v840, %v761
        %v842 = vmul.f32 %v841, %v840
        %v843 = vmul.f32 0.5, %v842
        %v844 = vsub.f32 1.5, %v843
        %v845 = vmul.f32 %v840, %v844
        %vm846 = vweird.f32 %v761
        %vm847 = vweird.f32 %v840
        %vm848 = vmor %vm846, %vm847
        %v849 = vsel %vm848, %v840, %v845
        %v850 = vrsqrt.pop %v762
        %v851 = vmul.f32 %v850, %v762
        %v852 = vmul.f32 %v851, %v850
        %v853 = vmul.f32 0.5, %v852
        %v854 = vsub.f32 1.5, %v853
        %v855 = vmul.f32 %v850, %v854
        %vm856 = vweird.f32 %v762
        %vm857 = vweird.f32 %v850
        %vm858 = vmor %vm856, %vm857
        %v859 = vsel %vm858, %v850, %v855
        %v860 = vrsqrt.pop %v763
        %v861 = vmul.f32 %v860, %v763
        %v862 = vmul.f32 %v861, %v860
        %v863 = vmul.f32 0.5, %v862
        %v864 = vsub.f32 1.5, %v863
        %v865 = vmul.f32 %v860, %v864
        %vm866 = vweird.f32 %v763
        %vm867 = vweird.f32 %v860
        %vm868 = vmor %vm866, %vm867
        %v869 = vsel %vm868, %v860, %v865
        %v870 = vrsqrt.pop %v764
        %v871 = vmul.f32 %v870, %v764
        %v872 = vmul.f32 %v871, %v870
        %v873 = vmul.f32 0.5, %v872
        %v874 = vsub.f32 1.5, %v873
        %v875 = vmul.f32 %v870, %v874
        %vm876 = vweird.f32 %v764
        %vm877 = vweird.f32 %v870
        %vm878 = vmor %vm876, %vm877
        %v879 = vsel %vm878, %v870, %v875
        %v880 = vrsqrt.pop %v765
        %v881 = vmul.f32 %v880, %v765
        %v882 = vmul.f32 %v881, %v880
        %v883 = vmul.f32 0.5, %v882
        %v884 = vsub.f32 1.5, %v883
        %v885 = vmul.f32 %v880, %v884
        %vm886 = vweird.f32 %v765
        %vm887 = vweird.f32 %v880
        %vm888 = vmor %vm886, %vm887
        %v889 = vsel %vm888, %v880, %v885
        %v890 = vrsqrt.pop %v766
        %v891 = vmul.f32 %v890, %v766
        %v892 = vmul.f32 %v891, %v890
        %v893 = vmul.f32 0.5, %v892
        %v894 = vsub.f32 1.5, %v893
        %v895 = vmul.f32 %v890, %v894
        %vm896 = vweird.f32 %v766
        %vm897 = vweird.f32 %v890
        %vm898 = vmor %vm896, %vm897
        %v899 = vsel %vm898, %v890, %v895
        %v900 = vrsqrt.pop %v767
        %v901 = vmul.f32 %v900, %v767
        %v902 = vmul.f32 %v901, %v900
        %v903 = vmul.f32 0.5, %v902
        %v904 = vsub.f32 1.5, %v903
        %v905 = vmul.f32 %v900, %v904
        %vm906 = vweird.f32 %v767
        %vm907 = vweird.f32 %v900
        %vm908 = vmor %vm906, %vm907
        %v909 = vsel %vm908, %v900, %v905
        %v910 = vrsqrt.pop %v768
        %v911 = vmul.f32 %v910, %v768
        %v912 = vmul.f32 %v911, %v910
        %v913 = vmul.f32 0.5, %v912
        %v914 = vsub.f32 1.5, %v913
        %v915 = vmul.f32 %v910, %v914
        %vm916 = vweird.f32 %v768
        %vm917 = vweird.f32 %v910
        %vm918 = vmor %vm916, %vm917
        %v919 = vsel %vm918, %v910, %v915
        %v920 = vrsqrt.pop %v769
        %v921 = vmul.f32 %v920, %v769
        %v922 = vmul.f32 %v921, %v920
        %v923 = vmul.f32 0.5, %v922
        %v924 = vsub.f32 1.5, %v923
        %v925 = vmul.f32 %v920, %v924
        %vm926 = vweird.f32 %v769
        %vm927 = vweird.f32 %v920
        %vm928 = vmor %vm926, %vm927
        %v929 = vsel %vm928, %v920, %v925
        %v930 = vmul.f32 %v674, %v779
        %v931 = vmul.f32 %v675, %v789
        %v932 = vmul.f32 %v676, %v799
        %v933 = vmul.f32 %v677, %v809
        %v934 = vmul.f32 %v678, %v819
        %v935 = vmul.f32 %v679, %v829
        %v936 = vmul.f32 %v680, %v839
        %v937 = vmul.f32 %v681, %v849
        %v938 = vmul.f32 %v682, %v859
        %v939 = vmul.f32 %v683, %v869
        %v940 = vmul.f32 %v684, %v879
        %v941 = vmul.f32 %v685, %v889
        %v942 = vmul.f32 %v686, %v899
        %v943 = vmul.f32 %v687, %v909
        %v944 = vmul.f32 %v688, %v919
        %v945 = vmul.f32 %v689, %v929
        %v947 = vperm.slane %v617, 0
        %v949 = vmul.f32 %v930, %v947
        %v950 = vmul.f32 %v931, %v947
        %v951 = vmul.f32 %v932, %v947
        %v952 = vmul.f32 %v933, %v947
        %v953 = vmul.f32 %v934, %v947
        %v954 = vmul.f32 %v935, %v947
        %v955 = vmul.f32 %v936, %v947
        %v956 = vmul.f32 %v937, %v947
        %v957 = vmul.f32 %v938, %v947
        %v958 = vmul.f32 %v939, %v947
        %v959 = vmul.f32 %v940, %v947
        %v960 = vmul.f32 %v941, %v947
        %v961 = vmul.f32 %v942, %v947
        %v962 = vmul.f32 %v943, %v947
        %v963 = vmul.f32 %v944, %v947
        %v964 = vmul.f32 %v945, %v947
        %v966 = vperm.slane %v618, 0
        %v968 = vadd.f32 %v949, %v966
        %v969 = vadd.f32 %v950, %v966
        %v970 = vadd.f32 %v951, %v966
        %v971 = vadd.f32 %v952, %v966
        %v972 = vadd.f32 %v953, %v966
        %v973 = vadd.f32 %v954, %v966
        %v974 = vadd.f32 %v955, %v966
        %v975 = vadd.f32 %v956, %v966
        %v976 = vadd.f32 %v957, %v966
        %v977 = vadd.f32 %v958, %v966
        %v978 = vadd.f32 %v959, %v966
        %v979 = vadd.f32 %v960, %v966
        %v980 = vadd.f32 %v961, %v966
        %v981 = vadd.f32 %v962, %v966
        %v982 = vadd.f32 %v963, %v966
        %v983 = vadd.f32 %v964, %v966
        %v984 = vpack.c.bf16 %v969, %v968
        %v985 = vpack.c.bf16 %v971, %v970
        %v986 = vpack.c.bf16 %v973, %v972
        %v987 = vpack.c.bf16 %v975, %v974
        %v988 = vpack.c.bf16 %v977, %v976
        %v989 = vpack.c.bf16 %v979, %v978
        %v990 = vpack.c.bf16 %v981, %v980
        %v991 = vpack.c.bf16 %v983, %v982
        %v992 = vld [vmem:[#allocation7] sm:$0xff]
        %v993 = vld [vmem:[#allocation7 + $0x8] sm:$0xf]
        %v994 = vld [vmem:[#allocation7 + $0xc] sm:$0xff]
        %v995 = vld [vmem:[#allocation7 + $0x14] sm:$0xf]
        %v996 = vld [vmem:[#allocation7 + $0x18] sm:$0xff]
        %v997 = vld [vmem:[#allocation7 + $0x20] sm:$0xf]
        %v998 = vld [vmem:[#allocation7 + $0x24] sm:$0xff]
        %v999 = vld [vmem:[#allocation7 + $0x2c] sm:$0xf]
        %v1000 = vld [vmem:[#allocation7 + $0x30] sm:$0xff]
        %v1001 = vld [vmem:[#allocation7 + $0x38] sm:$0xf]
        %v1002 = vld [vmem:[#allocation7 + $0x3c] sm:$0xff]
        %v1003 = vld [vmem:[#allocation7 + $0x44] sm:$0xf]
        %v1004 = vld [vmem:[#allocation7 + $0x48] sm:$0xff]
        %v1005 = vld [vmem:[#allocation7 + $0x50] sm:$0xf]
        %v1006 = vld [vmem:[#allocation7 + $0x54] sm:$0xff]
        %v1007 = vld [vmem:[#allocation7 + $0x5c] sm:$0xf]
        %v1008 = vld [vmem:[#allocation7 + $0x60] sm:$0xff]
        %v1009 = vld [vmem:[#allocation7 + $0x68] sm:$0xf]
        %v1010 = vld [vmem:[#allocation7 + $0x6c] sm:$0xff]
        %v1011 = vld [vmem:[#allocation7 + $0x74] sm:$0xf]
        %v1012 = vld [vmem:[#allocation7 + $0x78] sm:$0xff]
        %v1013 = vld [vmem:[#allocation7 + $0x80] sm:$0xf]
        %v1014 = vld [vmem:[#allocation7 + $0x84] sm:$0xff]
        %v1015 = vld [vmem:[#allocation7 + $0x8c] sm:$0xf]
        %v1016 = vld [vmem:[#allocation7 + $0x90] sm:$0xff]
        %v1017 = vld [vmem:[#allocation7 + $0x98] sm:$0xf]
        %v1018 = vld [vmem:[#allocation7 + $0x9c] sm:$0xff]
        %v1019 = vld [vmem:[#allocation7 + $0xa4] sm:$0xf]
        %v1020 = vld [vmem:[#allocation7 + $0xa8] sm:$0xff]
        %v1021 = vld [vmem:[#allocation7 + $0xb0] sm:$0xf]
        %v1022 = vld [vmem:[#allocation7 + $0xb4] sm:$0xff]
        %v1023 = vld [vmem:[#allocation7 + $0xbc] sm:$0xf]
        %v1024 = vld [vmem:[#allocation8] sm:$0x7]
        %v1026 = vperm.slane %v1024, 0
        %v1027 = vperm.slane %v1024, 1
        %v1028 = vperm.slane %v1024, 2
        %v1064 = vunpack.c.l.b16 %v992
        %v1065 = vunpack.c.h.b16 %v992
        %v1066 = vunpack.c.l.b16 %v993
        %v1067 = vunpack.c.l.b16 %v994
        %v1068 = vunpack.c.h.b16 %v994
        %v1069 = vunpack.c.l.b16 %v995
        %v1070 = vunpack.c.l.b16 %v996
        %v1071 = vunpack.c.h.b16 %v996
        %v1072 = vunpack.c.l.b16 %v997
        %v1073 = vunpack.c.l.b16 %v998
        %v1074 = vunpack.c.h.b16 %v998
        %v1075 = vunpack.c.l.b16 %v999
        %v1076 = vunpack.c.l.b16 %v1000
        %v1077 = vunpack.c.h.b16 %v1000
        %v1078 = vunpack.c.l.b16 %v1001
        %v1079 = vunpack.c.l.b16 %v1002
        %v1080 = vunpack.c.h.b16 %v1002
        %v1081 = vunpack.c.l.b16 %v1003
        %v1082 = vunpack.c.l.b16 %v1004
        %v1083 = vunpack.c.h.b16 %v1004
        %v1084 = vunpack.c.l.b16 %v1005
        %v1085 = vunpack.c.l.b16 %v1006
        %v1086 = vunpack.c.h.b16 %v1006
        %v1087 = vunpack.c.l.b16 %v1007
        %v1088 = vunpack.c.l.b16 %v1008
        %v1089 = vunpack.c.h.b16 %v1008
        %v1090 = vunpack.c.l.b16 %v1009
        %v1091 = vunpack.c.l.b16 %v1010
        %v1092 = vunpack.c.h.b16 %v1010
        %v1093 = vunpack.c.l.b16 %v1011
        %v1094 = vunpack.c.l.b16 %v1012
        %v1095 = vunpack.c.h.b16 %v1012
        %v1096 = vunpack.c.l.b16 %v1013
        %v1097 = vunpack.c.l.b16 %v1014
        %v1098 = vunpack.c.h.b16 %v1014
        %v1099 = vunpack.c.l.b16 %v1015
        %v1100 = vunpack.c.l.b16 %v1016
        %v1101 = vunpack.c.h.b16 %v1016
        %v1102 = vunpack.c.l.b16 %v1017
        %v1103 = vunpack.c.l.b16 %v1018
        %v1104 = vunpack.c.h.b16 %v1018
        %v1105 = vunpack.c.l.b16 %v1019
        %v1106 = vunpack.c.l.b16 %v1020
        %v1107 = vunpack.c.h.b16 %v1020
        %v1108 = vunpack.c.l.b16 %v1021
        %v1109 = vunpack.c.l.b16 %v1022
        %v1110 = vunpack.c.h.b16 %v1022
        %v1111 = vunpack.c.l.b16 %v1023
        %v1112 = vpack.c.b16 %v1067, %v1064
        %v1113 = vpack.c.b16 %v1068, %v1065
        %v1114 = vpack.c.b16 %v1069, %v1066
        %v1115 = vpack.c.b16 %v1073, %v1070
        %v1116 = vpack.c.b16 %v1074, %v1071
        %v1117 = vpack.c.b16 %v1075, %v1072
        %v1118 = vpack.c.b16 %v1079, %v1076
        %v1119 = vpack.c.b16 %v1080, %v1077
        %v1120 = vpack.c.b16 %v1081, %v1078
        %v1121 = vpack.c.b16 %v1085, %v1082
        %v1122 = vpack.c.b16 %v1086, %v1083
        %v1123 = vpack.c.b16 %v1087, %v1084
        %v1124 = vpack.c.b16 %v1091, %v1088
        %v1125 = vpack.c.b16 %v1092, %v1089
        %v1126 = vpack.c.b16 %v1093, %v1090
        %v1127 = vpack.c.b16 %v1097, %v1094
        %v1128 = vpack.c.b16 %v1098, %v1095
        %v1129 = vpack.c.b16 %v1099, %v1096
        %v1130 = vpack.c.b16 %v1103, %v1100
        %v1131 = vpack.c.b16 %v1104, %v1101
        %v1132 = vpack.c.b16 %v1105, %v1102
        %v1133 = vpack.c.b16 %v1109, %v1106
        %v1134 = vpack.c.b16 %v1110, %v1107
        %v1135 = vpack.c.b16 %v1111, %v1108
        %1160 = vmatpush.bf16.msra.mxu0 %v1133
        %1161 = vmatpush.bf16.msra.mxu0 %v1130
        %1162 = vmatpush.bf16.msra.mxu0 %v1127
        %1163 = vmatpush.bf16.msra.mxu0 %v1124
        %1164 = vmatpush.bf16.msra.mxu0 %v1121
        %1165 = vmatpush.bf16.msra.mxu0 %v1118
        %1166 = vmatpush.bf16.msra.mxu0 %v1115
        %1167 = vmatpush.bf16.msra.mxu0 %v1112
        %1168 = vmatmul.bf16.gmra.mxu0 %v984
        %v1169 = vpop.f32.mrf.mxu0
        %v1170 = vadd.f32 %v1026, %v1169
        %v1171 = vpop.f32.mrf.mxu0
        %v1172 = vadd.f32 %v1026, %v1171
        %1173 = vmatmul.bf16.gmra.mxu0 %v985
        %v1174 = vpop.f32.mrf.mxu0
        %v1175 = vadd.f32 %v1026, %v1174
        %v1176 = vpop.f32.mrf.mxu0
        %v1177 = vadd.f32 %v1026, %v1176
        %1178 = vmatmul.bf16.gmra.mxu0 %v986
        %v1179 = vpop.f32.mrf.mxu0
        %v1180 = vadd.f32 %v1026, %v1179
        %v1181 = vpop.f32.mrf.mxu0
        %v1182 = vadd.f32 %v1026, %v1181
        %1183 = vmatmul.bf16.gmra.mxu0 %v987
        %v1184 = vpop.f32.mrf.mxu0
        %v1185 = vadd.f32 %v1026, %v1184
        %v1186 = vpop.f32.mrf.mxu0
        %v1187 = vadd.f32 %v1026, %v1186
        %1188 = vmatmul.bf16.gmra.mxu0 %v988
        %v1189 = vpop.f32.mrf.mxu0
        %v1190 = vadd.f32 %v1026, %v1189
        %v1191 = vpop.f32.mrf.mxu0
        %v1192 = vadd.f32 %v1026, %v1191
        %1193 = vmatmul.bf16.gmra.mxu0 %v989
        %v1194 = vpop.f32.mrf.mxu0
        %v1195 = vadd.f32 %v1026, %v1194
        %v1196 = vpop.f32.mrf.mxu0
        %v1197 = vadd.f32 %v1026, %v1196
        %1198 = vmatmul.bf16.gmra.mxu0 %v990
        %v1199 = vpop.f32.mrf.mxu0
        %v1200 = vadd.f32 %v1026, %v1199
        %v1201 = vpop.f32.mrf.mxu0
        %v1202 = vadd.f32 %v1026, %v1201
        %1203 = vmatmul.bf16.gmra.mxu0 %v991
        %v1204 = vpop.f32.mrf.mxu0
        %v1205 = vadd.f32 %v1026, %v1204
        %v1206 = vpop.f32.mrf.mxu0
        %v1207 = vadd.f32 %v1026, %v1206
        %1208 = vdwg.mxu0
        %1209 = vmatpush.bf16.msra.mxu0 %v1134
        %1210 = vmatpush.bf16.msra.mxu0 %v1131
        %1211 = vmatpush.bf16.msra.mxu0 %v1128
        %1212 = vmatpush.bf16.msra.mxu0 %v1125
        %1213 = vmatpush.bf16.msra.mxu0 %v1122
        %1214 = vmatpush.bf16.msra.mxu0 %v1119
        %1215 = vmatpush.bf16.msra.mxu0 %v1116
        %1216 = vmatpush.bf16.msra.mxu0 %v1113
        %1217 = vmatmul.bf16.gmra.mxu0 %v984
        %v1218 = vpop.f32.mrf.mxu0
        %v1219 = vadd.f32 %v1027, %v1218
        %v1220 = vpop.f32.mrf.mxu0
        %v1221 = vadd.f32 %v1027, %v1220
        %1222 = vmatmul.bf16.gmra.mxu0 %v985
        %v1223 = vpop.f32.mrf.mxu0
        %v1224 = vadd.f32 %v1027, %v1223
        %v1225 = vpop.f32.mrf.mxu0
        %v1226 = vadd.f32 %v1027, %v1225
        %1227 = vmatmul.bf16.gmra.mxu0 %v986
        %v1228 = vpop.f32.mrf.mxu0
        %v1229 = vadd.f32 %v1027, %v1228
        %v1230 = vpop.f32.mrf.mxu0
        %v1231 = vadd.f32 %v1027, %v1230
        %1232 = vmatmul.bf16.gmra.mxu0 %v987
        %v1233 = vpop.f32.mrf.mxu0
        %v1234 = vadd.f32 %v1027, %v1233
        %v1235 = vpop.f32.mrf.mxu0
        %v1236 = vadd.f32 %v1027, %v1235
        %1237 = vmatmul.bf16.gmra.mxu0 %v988
        %v1238 = vpop.f32.mrf.mxu0
        %v1239 = vadd.f32 %v1027, %v1238
        %v1240 = vpop.f32.mrf.mxu0
        %v1241 = vadd.f32 %v1027, %v1240
        %1242 = vmatmul.bf16.gmra.mxu0 %v989
        %v1243 = vpop.f32.mrf.mxu0
        %v1244 = vadd.f32 %v1027, %v1243
        %v1245 = vpop.f32.mrf.mxu0
        %v1246 = vadd.f32 %v1027, %v1245
        %1247 = vmatmul.bf16.gmra.mxu0 %v990
        %v1248 = vpop.f32.mrf.mxu0
        %v1249 = vadd.f32 %v1027, %v1248
        %v1250 = vpop.f32.mrf.mxu0
        %v1251 = vadd.f32 %v1027, %v1250
        %1252 = vmatmul.bf16.gmra.mxu0 %v991
        %v1253 = vpop.f32.mrf.mxu0
        %v1254 = vadd.f32 %v1027, %v1253
        %v1255 = vpop.f32.mrf.mxu0
        %v1256 = vadd.f32 %v1027, %v1255
        %1257 = vdwg.mxu0
        %1258 = vmatpush.bf16.msra.mxu0 %v1135
        %1259 = vmatpush.bf16.msra.mxu0 %v1132
        %1260 = vmatpush.bf16.msra.mxu0 %v1129
        %1261 = vmatpush.bf16.msra.mxu0 %v1126
        %1262 = vmatpush.bf16.msra.mxu0 %v1123
        %1263 = vmatpush.bf16.msra.mxu0 %v1120
        %1264 = vmatpush.bf16.msra.mxu0 %v1117
        %1265 = vmatpush.bf16.msra.mxu0 %v1114
        %1266 = vmatmul.bf16.gmra.mxu0 %v984
        %v1267 = vpop.f32.mrf.mxu0
        %v1268 = vadd.f32 %v1028, %v1267
        %v1269 = vpop.f32.mrf.mxu0
        %v1270 = vadd.f32 %v1028, %v1269
        %1271 = vmatmul.bf16.gmra.mxu0 %v985
        %v1272 = vpop.f32.mrf.mxu0
        %v1273 = vadd.f32 %v1028, %v1272
        %v1274 = vpop.f32.mrf.mxu0
        %v1275 = vadd.f32 %v1028, %v1274
        %1276 = vmatmul.bf16.gmra.mxu0 %v986
        %v1277 = vpop.f32.mrf.mxu0
        %v1278 = vadd.f32 %v1028, %v1277
        %v1279 = vpop.f32.mrf.mxu0
        %v1280 = vadd.f32 %v1028, %v1279
        %1281 = vmatmul.bf16.gmra.mxu0 %v987
        %v1282 = vpop.f32.mrf.mxu0
        %v1283 = vadd.f32 %v1028, %v1282
        %v1284 = vpop.f32.mrf.mxu0
        %v1285 = vadd.f32 %v1028, %v1284
        %1286 = vmatmul.bf16.gmra.mxu0 %v988
        %v1287 = vpop.f32.mrf.mxu0
        %v1288 = vadd.f32 %v1028, %v1287
        %v1289 = vpop.f32.mrf.mxu0
        %v1290 = vadd.f32 %v1028, %v1289
        %1291 = vmatmul.bf16.gmra.mxu0 %v989
        %v1292 = vpop.f32.mrf.mxu0
        %v1293 = vadd.f32 %v1028, %v1292
        %v1294 = vpop.f32.mrf.mxu0
        %v1295 = vadd.f32 %v1028, %v1294
        %1296 = vmatmul.bf16.gmra.mxu0 %v990
        %v1297 = vpop.f32.mrf.mxu0
        %v1298 = vadd.f32 %v1028, %v1297
        %v1299 = vpop.f32.mrf.mxu0
        %v1300 = vadd.f32 %v1028, %v1299
        %1301 = vmatmul.bf16.gmra.mxu0 %v991
        %v1302 = vpop.f32.mrf.mxu0
        %v1303 = vadd.f32 %v1028, %v1302
        %v1304 = vpop.f32.mrf.mxu0
        %v1305 = vadd.f32 %v1028, %v1304
        %1306 = vdwg.mxu0
        %v1307 = vpack.c.bf16 %v1170, %v1170
        %v1308 = vpack.c.bf16 %v1172, %v1172
        %v1309 = vpack.c.bf16 %v1175, %v1175
        %v1310 = vpack.c.bf16 %v1177, %v1177
        %v1311 = vpack.c.bf16 %v1180, %v1180
        %v1312 = vpack.c.bf16 %v1182, %v1182
        %v1313 = vpack.c.bf16 %v1185, %v1185
        %v1314 = vpack.c.bf16 %v1187, %v1187
        %v1315 = vpack.c.bf16 %v1190, %v1190
        %v1316 = vpack.c.bf16 %v1192, %v1192
        %v1317 = vpack.c.bf16 %v1195, %v1195
        %v1318 = vpack.c.bf16 %v1197, %v1197
        %v1319 = vpack.c.bf16 %v1200, %v1200
        %v1320 = vpack.c.bf16 %v1202, %v1202
        %v1321 = vpack.c.bf16 %v1205, %v1205
        %v1322 = vpack.c.bf16 %v1207, %v1207
        %v1323 = vpack.c.bf16 %v1219, %v1219
        %v1324 = vpack.c.bf16 %v1221, %v1221
        %v1325 = vpack.c.bf16 %v1224, %v1224
        %v1326 = vpack.c.bf16 %v1226, %v1226
        %v1327 = vpack.c.bf16 %v1229, %v1229
        %v1328 = vpack.c.bf16 %v1231, %v1231
        %v1329 = vpack.c.bf16 %v1234, %v1234
        %v1330 = vpack.c.bf16 %v1236, %v1236
        %v1331 = vpack.c.bf16 %v1239, %v1239
        %v1332 = vpack.c.bf16 %v1241, %v1241
        %v1333 = vpack.c.bf16 %v1244, %v1244
        %v1334 = vpack.c.bf16 %v1246, %v1246
        %v1335 = vpack.c.bf16 %v1249, %v1249
        %v1336 = vpack.c.bf16 %v1251, %v1251
        %v1337 = vpack.c.bf16 %v1254, %v1254
        %v1338 = vpack.c.bf16 %v1256, %v1256
        %v1339 = vpack.c.bf16 %v1268, %v1268
        %v1340 = vpack.c.bf16 %v1270, %v1270
        %v1341 = vpack.c.bf16 %v1273, %v1273
        %v1342 = vpack.c.bf16 %v1275, %v1275
        %v1343 = vpack.c.bf16 %v1278, %v1278
        %v1344 = vpack.c.bf16 %v1280, %v1280
        %v1345 = vpack.c.bf16 %v1283, %v1283
        %v1346 = vpack.c.bf16 %v1285, %v1285
        %v1347 = vpack.c.bf16 %v1288, %v1288
        %v1348 = vpack.c.bf16 %v1290, %v1290
        %v1349 = vpack.c.bf16 %v1293, %v1293
        %v1350 = vpack.c.bf16 %v1295, %v1295
        %v1351 = vpack.c.bf16 %v1298, %v1298
        %v1352 = vpack.c.bf16 %v1300, %v1300
        %v1353 = vpack.c.bf16 %v1303, %v1303
        %v1354 = vpack.c.bf16 %v1305, %v1305
        %v1371 = vunpack.c.l.b16 %v1307
        %v1372 = vunpack.c.l.b16 %v1308
        %v1373 = vunpack.c.l.b16 %v1309
        %v1374 = vunpack.c.l.b16 %v1310
        %v1375 = vunpack.c.l.b16 %v1311
        %v1376 = vunpack.c.l.b16 %v1312
        %v1377 = vunpack.c.l.b16 %v1313
        %v1378 = vunpack.c.l.b16 %v1314
        %v1379 = vunpack.c.l.b16 %v1315
        %v1380 = vunpack.c.l.b16 %v1316
        %v1381 = vunpack.c.l.b16 %v1317
        %v1382 = vunpack.c.l.b16 %v1318
        %v1383 = vunpack.c.l.b16 %v1319
        %v1384 = vunpack.c.l.b16 %v1320
        %v1385 = vunpack.c.l.b16 %v1321
        %v1386 = vunpack.c.l.b16 %v1322
        %v1387 = vpack.c.b16 %v1372, %v1371
        %v1388 = vpack.c.b16 %v1374, %v1373
        %v1389 = vpack.c.b16 %v1376, %v1375
        %v1390 = vpack.c.b16 %v1378, %v1377
        %v1391 = vpack.c.b16 %v1380, %v1379
        %v1392 = vpack.c.b16 %v1382, %v1381
        %v1393 = vpack.c.b16 %v1384, %v1383
        %v1394 = vpack.c.b16 %v1386, %v1385
        %v1411 = vunpack.c.l.b16 %v1323
        %v1412 = vunpack.c.l.b16 %v1324
        %v1413 = vunpack.c.l.b16 %v1325
        %v1414 = vunpack.c.l.b16 %v1326
        %v1415 = vunpack.c.l.b16 %v1327
        %v1416 = vunpack.c.l.b16 %v1328
        %v1417 = vunpack.c.l.b16 %v1329
        %v1418 = vunpack.c.l.b16 %v1330
        %v1419 = vunpack.c.l.b16 %v1331
        %v1420 = vunpack.c.l.b16 %v1332
        %v1421 = vunpack.c.l.b16 %v1333
        %v1422 = vunpack.c.l.b16 %v1334
        %v1423 = vunpack.c.l.b16 %v1335
        %v1424 = vunpack.c.l.b16 %v1336
        %v1425 = vunpack.c.l.b16 %v1337
        %v1426 = vunpack.c.l.b16 %v1338
        %v1427 = vpack.c.b16 %v1412, %v1411
        %v1428 = vpack.c.b16 %v1414, %v1413
        %v1429 = vpack.c.b16 %v1416, %v1415
        %v1430 = vpack.c.b16 %v1418, %v1417
        %v1431 = vpack.c.b16 %v1420, %v1419
        %v1432 = vpack.c.b16 %v1422, %v1421
        %v1433 = vpack.c.b16 %v1424, %v1423
        %v1434 = vpack.c.b16 %v1426, %v1425
        %vm1435 = vcmask 261120
        %v1437 = vsel %vm1435, %v1387, 0
        %v1440 = vsel %vm1435, %v1388, 0
        %v1443 = vsel %vm1435, %v1389, 0
        %v1446 = vsel %vm1435, %v1390, 0
        %v1449 = vsel %vm1435, %v1391, 0
        %v1452 = vsel %vm1435, %v1392, 0
        %v1455 = vsel %vm1435, %v1393, 0
        %v1458 = vsel %vm1435, %v1394, 0
        %v1461 = vsel %vm1435, %v1427, 0
        %v1464 = vsel %vm1435, %v1428, 0
        %v1467 = vsel %vm1435, %v1429, 0
        %v1470 = vsel %vm1435, %v1430, 0
        %v1473 = vsel %vm1435, %v1431, 0
        %v1476 = vsel %vm1435, %v1432, 0
        %v1479 = vsel %vm1435, %v1433, 0
        %v1482 = vsel %vm1435, %v1434, 0
        %1484 = vmatpush.bf16.xpose.msra.mxu0 %v1482
        %1485 = vmatpush.bf16.xpose.msra.mxu0 %v1479
        %1486 = vmatpush.bf16.xpose.msra.mxu0 %v1476
        %1487 = vmatpush.bf16.xpose.msra.mxu0 %v1473
        %1488 = vmatpush.bf16.xpose.msra.mxu0 %v1470
        %1489 = vmatpush.bf16.xpose.msra.mxu0 %v1467
        %1490 = vmatpush.bf16.xpose.msra.mxu0 %v1464
        %1491 = vmatpush.bf16.xpose.msra.mxu0 %v1461
        %1492 = vmatmul.bf16.gmra.mxu0 %v1437
        %v1493 = vpop.f32.mrf.mxu0
        %v1494 = vadd.f32 0.0, %v1493
        %v1495 = vpop.f32.mrf.mxu0
        %v1496 = vadd.f32 0.0, %v1495
        %1497 = vmatmul.bf16.gmra.mxu0 %v1440
        %v1498 = vpop.f32.mrf.mxu0
        %v1499 = vadd.f32 0.0, %v1498
        %v1500 = vpop.f32.mrf.mxu0
        %v1501 = vadd.f32 0.0, %v1500
        %1502 = vmatmul.bf16.gmra.mxu0 %v1443
        %v1503 = vpop.f32.mrf.mxu0
        %v1504 = vadd.f32 0.0, %v1503
        %v1505 = vpop.f32.mrf.mxu0
        %v1506 = vadd.f32 0.0, %v1505
        %1507 = vmatmul.bf16.gmra.mxu0 %v1446
        %v1508 = vpop.f32.mrf.mxu0
        %v1509 = vadd.f32 0.0, %v1508
        %v1510 = vpop.f32.mrf.mxu0
        %v1511 = vadd.f32 0.0, %v1510
        %1512 = vmatmul.bf16.gmra.mxu0 %v1449
        %v1513 = vpop.f32.mrf.mxu0
        %v1514 = vadd.f32 0.0, %v1513
        %v1515 = vpop.f32.mrf.mxu0
        %v1516 = vadd.f32 0.0, %v1515
        %1517 = vmatmul.bf16.gmra.mxu0 %v1452
        %v1518 = vpop.f32.mrf.mxu0
        %v1519 = vadd.f32 0.0, %v1518
        %v1520 = vpop.f32.mrf.mxu0
        %v1521 = vadd.f32 0.0, %v1520
        %1522 = vmatmul.bf16.gmra.mxu0 %v1455
        %v1523 = vpop.f32.mrf.mxu0
        %v1524 = vadd.f32 0.0, %v1523
        %v1525 = vpop.f32.mrf.mxu0
        %v1526 = vadd.f32 0.0, %v1525
        %1527 = vmatmul.bf16.gmra.mxu0 %v1458
        %v1528 = vpop.f32.mrf.mxu0
        %v1529 = vadd.f32 0.0, %v1528
        %v1530 = vpop.f32.mrf.mxu0
        %v1531 = vadd.f32 0.0, %v1530
        %1532 = vdwg.mxu0
        %1533 = vmax.xlane.f32.xlu0 %v1494
        %v1534 = vpop.xlane.xlu0 %1533
        %1535 = vmax.xlane.f32.xlu0 %v1496
        %v1536 = vpop.xlane.xlu0 %1535
        %1537 = vmax.xlane.f32.xlu0 %v1499
        %v1538 = vpop.xlane.xlu0 %1537
        %1539 = vmax.xlane.f32.xlu0 %v1501
        %v1540 = vpop.xlane.xlu0 %1539
        %1541 = vmax.xlane.f32.xlu0 %v1504
        %v1542 = vpop.xlane.xlu0 %1541
        %1543 = vmax.xlane.f32.xlu0 %v1506
        %v1544 = vpop.xlane.xlu0 %1543
        %1545 = vmax.xlane.f32.xlu0 %v1509
        %v1546 = vpop.xlane.xlu0 %1545
        %1547 = vmax.xlane.f32.xlu0 %v1511
        %v1548 = vpop.xlane.xlu0 %1547
        %1549 = vmax.xlane.f32.xlu0 %v1514
        %v1550 = vpop.xlane.xlu0 %1549
        %1551 = vmax.xlane.f32.xlu0 %v1516
        %v1552 = vpop.xlane.xlu0 %1551
        %1553 = vmax.xlane.f32.xlu0 %v1519
        %v1554 = vpop.xlane.xlu0 %1553
        %1555 = vmax.xlane.f32.xlu0 %v1521
        %v1556 = vpop.xlane.xlu0 %1555
        %1557 = vmax.xlane.f32.xlu0 %v1524
        %v1558 = vpop.xlane.xlu0 %1557
        %1559 = vmax.xlane.f32.xlu0 %v1526
        %v1560 = vpop.xlane.xlu0 %1559
        %1561 = vmax.xlane.f32.xlu0 %v1529
        %v1562 = vpop.xlane.xlu0 %1561
        %1563 = vmax.xlane.f32.xlu0 %v1531
        %v1564 = vpop.xlane.xlu0 %1563
        %v1565 = vsub.f32 %v1494, %v1534
        %v1566 = vsub.f32 %v1496, %v1536
        %v1567 = vsub.f32 %v1499, %v1538
        %v1568 = vsub.f32 %v1501, %v1540
        %v1569 = vsub.f32 %v1504, %v1542
        %v1570 = vsub.f32 %v1506, %v1544
        %v1571 = vsub.f32 %v1509, %v1546
        %v1572 = vsub.f32 %v1511, %v1548
        %v1573 = vsub.f32 %v1514, %v1550
        %v1574 = vsub.f32 %v1516, %v1552
        %v1575 = vsub.f32 %v1519, %v1554
        %v1576 = vsub.f32 %v1521, %v1556
        %v1577 = vsub.f32 %v1524, %v1558
        %v1578 = vsub.f32 %v1526, %v1560
        %v1579 = vsub.f32 %v1529, %v1562
        %v1580 = vsub.f32 %v1531, %v1564
        %v1581 = vmul.f32 %v1565, 1.442695
        %v1582 = vpow.pop %v1581
        %v1583 = vmul.f32 %v1566, 1.442695
        %v1584 = vpow.pop %v1583
        %v1585 = vmul.f32 %v1567, 1.442695
        %v1586 = vpow.pop %v1585
        %v1587 = vmul.f32 %v1568, 1.442695
        %v1588 = vpow.pop %v1587
        %v1589 = vmul.f32 %v1569, 1.442695
        %v1590 = vpow.pop %v1589
        %v1591 = vmul.f32 %v1570, 1.442695
        %v1592 = vpow.pop %v1591
        %v1593 = vmul.f32 %v1571, 1.442695
        %v1594 = vpow.pop %v1593
        %v1595 = vmul.f32 %v1572, 1.442695
        %v1596 = vpow.pop %v1595
        %v1597 = vmul.f32 %v1573, 1.442695
        %v1598 = vpow.pop %v1597
        %v1599 = vmul.f32 %v1574, 1.442695
        %v1600 = vpow.pop %v1599
        %v1601 = vmul.f32 %v1575, 1.442695
        %v1602 = vpow.pop %v1601
        %v1603 = vmul.f32 %v1576, 1.442695
        %v1604 = vpow.pop %v1603
        %v1605 = vmul.f32 %v1577, 1.442695
        %v1606 = vpow.pop %v1605
        %v1607 = vmul.f32 %v1578, 1.442695
        %v1608 = vpow.pop %v1607
        %v1609 = vmul.f32 %v1579, 1.442695
        %v1610 = vpow.pop %v1609
        %v1611 = vmul.f32 %v1580, 1.442695
        %v1612 = vpow.pop %v1611
        %1613 = vadd.xlane.f32.xlu0 %v1582
        %v1614 = vpop.xlane.xlu0 %1613
        %1615 = vadd.xlane.f32.xlu0 %v1584
        %v1616 = vpop.xlane.xlu0 %1615
        %1617 = vadd.xlane.f32.xlu0 %v1586
        %v1618 = vpop.xlane.xlu0 %1617
        %1619 = vadd.xlane.f32.xlu0 %v1588
        %v1620 = vpop.xlane.xlu0 %1619
        %1621 = vadd.xlane.f32.xlu0 %v1590
        %v1622 = vpop.xlane.xlu0 %1621
        %1623 = vadd.xlane.f32.xlu0 %v1592
        %v1624 = vpop.xlane.xlu0 %1623
        %1625 = vadd.xlane.f32.xlu0 %v1594
        %v1626 = vpop.xlane.xlu0 %1625
        %1627 = vadd.xlane.f32.xlu0 %v1596
        %v1628 = vpop.xlane.xlu0 %1627
        %1629 = vadd.xlane.f32.xlu0 %v1598
        %v1630 = vpop.xlane.xlu0 %1629
        %1631 = vadd.xlane.f32.xlu0 %v1600
        %v1632 = vpop.xlane.xlu0 %1631
        %1633 = vadd.xlane.f32.xlu0 %v1602
        %v1634 = vpop.xlane.xlu0 %1633
        %1635 = vadd.xlane.f32.xlu0 %v1604
        %v1636 = vpop.xlane.xlu0 %1635
        %1637 = vadd.xlane.f32.xlu0 %v1606
        %v1638 = vpop.xlane.xlu0 %1637
        %1639 = vadd.xlane.f32.xlu0 %v1608
        %v1640 = vpop.xlane.xlu0 %1639
        %1641 = vadd.xlane.f32.xlu0 %v1610
        %v1642 = vpop.xlane.xlu0 %1641
        %1643 = vadd.xlane.f32.xlu0 %v1612
        %v1644 = vpop.xlane.xlu0 %1643
        %v1645 = vrcp.pop %v1614
        %v1646 = vrcp.pop %v1616
        %v1647 = vrcp.pop %v1618
        %v1648 = vrcp.pop %v1620
        %v1649 = vrcp.pop %v1622
        %v1650 = vrcp.pop %v1624
        %v1651 = vrcp.pop %v1626
        %v1652 = vrcp.pop %v1628
        %v1653 = vrcp.pop %v1630
        %v1654 = vrcp.pop %v1632
        %v1655 = vrcp.pop %v1634
        %v1656 = vrcp.pop %v1636
        %v1657 = vrcp.pop %v1638
        %v1658 = vrcp.pop %v1640
        %v1659 = vrcp.pop %v1642
        %v1660 = vrcp.pop %v1644
        %v1661 = vpack.c.bf16 %v1584, %v1582
        %v1662 = vpack.c.bf16 %v1588, %v1586
        %v1663 = vpack.c.bf16 %v1592, %v1590
        %v1664 = vpack.c.bf16 %v1596, %v1594
        %v1665 = vpack.c.bf16 %v1600, %v1598
        %v1666 = vpack.c.bf16 %v1604, %v1602
        %v1667 = vpack.c.bf16 %v1608, %v1606
        %v1668 = vpack.c.bf16 %v1612, %v1610
        %v1685 = vunpack.c.l.b16 %v1339
        %v1686 = vunpack.c.l.b16 %v1340
        %v1687 = vunpack.c.l.b16 %v1341
        %v1688 = vunpack.c.l.b16 %v1342
        %v1689 = vunpack.c.l.b16 %v1343
        %v1690 = vunpack.c.l.b16 %v1344
        %v1691 = vunpack.c.l.b16 %v1345
        %v1692 = vunpack.c.l.b16 %v1346
        %v1693 = vunpack.c.l.b16 %v1347
        %v1694 = vunpack.c.l.b16 %v1348
        %v1695 = vunpack.c.l.b16 %v1349
        %v1696 = vunpack.c.l.b16 %v1350
        %v1697 = vunpack.c.l.b16 %v1351
        %v1698 = vunpack.c.l.b16 %v1352
        %v1699 = vunpack.c.l.b16 %v1353
        %v1700 = vunpack.c.l.b16 %v1354
        %v1701 = vpack.c.b16 %v1686, %v1685
        %v1702 = vpack.c.b16 %v1688, %v1687
        %v1703 = vpack.c.b16 %v1690, %v1689
        %v1704 = vpack.c.b16 %v1692, %v1691
        %v1705 = vpack.c.b16 %v1694, %v1693
        %v1706 = vpack.c.b16 %v1696, %v1695
        %v1707 = vpack.c.b16 %v1698, %v1697
        %v1708 = vpack.c.b16 %v1700, %v1699
        %1717 = vmatpush.bf16.msra.mxu0 %v1708
        %1718 = vmatpush.bf16.msra.mxu0 %v1707
        %1719 = vmatpush.bf16.msra.mxu0 %v1706
        %1720 = vmatpush.bf16.msra.mxu0 %v1705
        %1721 = vmatpush.bf16.msra.mxu0 %v1704
        %1722 = vmatpush.bf16.msra.mxu0 %v1703
        %1723 = vmatpush.bf16.msra.mxu0 %v1702
        %1724 = vmatpush.bf16.msra.mxu0 %v1701
        %1725 = vmatmul.bf16.gmra.mxu0 %v1661
        %v1726 = vpop.f32.mrf.mxu0
        %v1727 = vadd.f32 0.0, %v1726
        %v1728 = vpop.f32.mrf.mxu0
        %v1729 = vadd.f32 0.0, %v1728
        %1730 = vmatmul.bf16.gmra.mxu0 %v1662
        %v1731 = vpop.f32.mrf.mxu0
        %v1732 = vadd.f32 0.0, %v1731
        %v1733 = vpop.f32.mrf.mxu0
        %v1734 = vadd.f32 0.0, %v1733
        %1735 = vmatmul.bf16.gmra.mxu0 %v1663
        %v1736 = vpop.f32.mrf.mxu0
        %v1737 = vadd.f32 0.0, %v1736
        %v1738 = vpop.f32.mrf.mxu0
        %v1739 = vadd.f32 0.0, %v1738
        %1740 = vmatmul.bf16.gmra.mxu0 %v1664
        %v1741 = vpop.f32.mrf.mxu0
        %v1742 = vadd.f32 0.0, %v1741
        %v1743 = vpop.f32.mrf.mxu0
        %v1744 = vadd.f32 0.0, %v1743
        %1745 = vmatmul.bf16.gmra.mxu0 %v1665
        %v1746 = vpop.f32.mrf.mxu0
        %v1747 = vadd.f32 0.0, %v1746
        %v1748 = vpop.f32.mrf.mxu0
        %v1749 = vadd.f32 0.0, %v1748
        %1750 = vmatmul.bf16.gmra.mxu0 %v1666
        %v1751 = vpop.f32.mrf.mxu0
        %v1752 = vadd.f32 0.0, %v1751
        %v1753 = vpop.f32.mrf.mxu0
        %v1754 = vadd.f32 0.0, %v1753
        %1755 = vmatmul.bf16.gmra.mxu0 %v1667
        %v1756 = vpop.f32.mrf.mxu0
        %v1757 = vadd.f32 0.0, %v1756
        %v1758 = vpop.f32.mrf.mxu0
        %v1759 = vadd.f32 0.0, %v1758
        %1760 = vmatmul.bf16.gmra.mxu0 %v1668
        %v1761 = vpop.f32.mrf.mxu0
        %v1762 = vadd.f32 0.0, %v1761
        %v1763 = vpop.f32.mrf.mxu0
        %v1764 = vadd.f32 0.0, %v1763
        %1765 = vdwg.mxu0
        %v1766 = vmul.f32 %v1727, %v1645
        %v1767 = vmul.f32 %v1729, %v1646
        %v1768 = vmul.f32 %v1732, %v1647
        %v1769 = vmul.f32 %v1734, %v1648
        %v1770 = vmul.f32 %v1737, %v1649
        %v1771 = vmul.f32 %v1739, %v1650
        %v1772 = vmul.f32 %v1742, %v1651
        %v1773 = vmul.f32 %v1744, %v1652
        %v1774 = vmul.f32 %v1747, %v1653
        %v1775 = vmul.f32 %v1749, %v1654
        %v1776 = vmul.f32 %v1752, %v1655
        %v1777 = vmul.f32 %v1754, %v1656
        %v1778 = vmul.f32 %v1757, %v1657
        %v1779 = vmul.f32 %v1759, %v1658
        %v1780 = vmul.f32 %v1762, %v1659
        %v1781 = vmul.f32 %v1764, %v1660
        %v1782 = vpack.c.bf16 %v1767, %v1766
        %v1783 = vpack.c.bf16 %v1769, %v1768
        %v1784 = vpack.c.bf16 %v1771, %v1770
        %v1785 = vpack.c.bf16 %v1773, %v1772
        %v1786 = vpack.c.bf16 %v1775, %v1774
        %v1787 = vpack.c.bf16 %v1777, %v1776
        %v1788 = vpack.c.bf16 %v1779, %v1778
        %v1789 = vpack.c.bf16 %v1781, %v1780
        %v1790 = vld [vmem:[#allocation10] sm:$0xf]
        %v1791 = vld [vmem:[#allocation10 + $0x4] sm:$0xf]
        %v1792 = vld [vmem:[#allocation10 + $0x8] sm:$0xf]
        %v1793 = vld [vmem:[#allocation10 + $0xc] sm:$0xf]
        %1794 = vrot.lane.b32.xlu0 %v1387, 96
        %v1795 = vpop.permute.xlu0 %1794
        %1796 = vrot.lane.b32.xlu0 %v1388, 96
        %v1797 = vpop.permute.xlu0 %1796
        %1798 = vrot.lane.b32.xlu0 %v1389, 96
        %v1799 = vpop.permute.xlu0 %1798
        %1800 = vrot.lane.b32.xlu0 %v1390, 96
        %v1801 = vpop.permute.xlu0 %1800
        %1802 = vrot.lane.b32.xlu0 %v1391, 96
        %v1803 = vpop.permute.xlu0 %1802
        %1804 = vrot.lane.b32.xlu0 %v1392, 96
        %v1805 = vpop.permute.xlu0 %1804
        %1806 = vrot.lane.b32.xlu0 %v1393, 96
        %v1807 = vpop.permute.xlu0 %1806
        %1808 = vrot.lane.b32.xlu0 %v1394, 96
        %v1809 = vpop.permute.xlu0 %1808
        %1810 = vrot.lane.b32.xlu0 %v1427, 96
        %v1811 = vpop.permute.xlu0 %1810
        %1812 = vrot.lane.b32.xlu0 %v1428, 96
        %v1813 = vpop.permute.xlu0 %1812
        %1814 = vrot.lane.b32.xlu0 %v1429, 96
        %v1815 = vpop.permute.xlu0 %1814
        %1816 = vrot.lane.b32.xlu0 %v1430, 96
        %v1817 = vpop.permute.xlu0 %1816
        %1818 = vrot.lane.b32.xlu0 %v1431, 96
        %v1819 = vpop.permute.xlu0 %1818
        %1820 = vrot.lane.b32.xlu0 %v1432, 96
        %v1821 = vpop.permute.xlu0 %1820
        %1822 = vrot.lane.b32.xlu0 %v1433, 96
        %v1823 = vpop.permute.xlu0 %1822
        %1824 = vrot.lane.b32.xlu0 %v1434, 96
        %v1825 = vpop.permute.xlu0 %1824
        %v1827 = vsel %vm1435, %v1795, 0
        %v1830 = vsel %vm1435, %v1797, 0
        %v1833 = vsel %vm1435, %v1799, 0
        %v1836 = vsel %vm1435, %v1801, 0
        %v1839 = vsel %vm1435, %v1803, 0
        %v1842 = vsel %vm1435, %v1805, 0
        %v1845 = vsel %vm1435, %v1807, 0
        %v1848 = vsel %vm1435, %v1809, 0
        %v1851 = vsel %vm1435, %v1811, 0
        %v1854 = vsel %vm1435, %v1813, 0
        %v1857 = vsel %vm1435, %v1815, 0
        %v1860 = vsel %vm1435, %v1817, 0
        %v1863 = vsel %vm1435, %v1819, 0
        %v1866 = vsel %vm1435, %v1821, 0
        %v1869 = vsel %vm1435, %v1823, 0
        %v1872 = vsel %vm1435, %v1825, 0
        %1874 = vmatpush.bf16.xpose.msra.mxu0 %v1872
        %1875 = vmatpush.bf16.xpose.msra.mxu0 %v1869
        %1876 = vmatpush.bf16.xpose.msra.mxu0 %v1866
        %1877 = vmatpush.bf16.xpose.msra.mxu0 %v1863
        %1878 = vmatpush.bf16.xpose.msra.mxu0 %v1860
        %1879 = vmatpush.bf16.xpose.msra.mxu0 %v1857
        %1880 = vmatpush.bf16.xpose.msra.mxu0 %v1854
        %1881 = vmatpush.bf16.xpose.msra.mxu0 %v1851
        %1882 = vmatmul.bf16.gmra.mxu0 %v1827
        %v1883 = vpop.f32.mrf.mxu0
        %v1884 = vadd.f32 0.0, %v1883
        %v1885 = vpop.f32.mrf.mxu0
        %v1886 = vadd.f32 0.0, %v1885
        %1887 = vmatmul.bf16.gmra.mxu0 %v1830
        %v1888 = vpop.f32.mrf.mxu0
        %v1889 = vadd.f32 0.0, %v1888
        %v1890 = vpop.f32.mrf.mxu0
        %v1891 = vadd.f32 0.0, %v1890
        %1892 = vmatmul.bf16.gmra.mxu0 %v1833
        %v1893 = vpop.f32.mrf.mxu0
        %v1894 = vadd.f32 0.0, %v1893
        %v1895 = vpop.f32.mrf.mxu0
        %v1896 = vadd.f32 0.0, %v1895
        %1897 = vmatmul.bf16.gmra.mxu0 %v1836
        %v1898 = vpop.f32.mrf.mxu0
        %v1899 = vadd.f32 0.0, %v1898
        %v1900 = vpop.f32.mrf.mxu0
        %v1901 = vadd.f32 0.0, %v1900
        %1902 = vmatmul.bf16.gmra.mxu0 %v1839
        %v1903 = vpop.f32.mrf.mxu0
        %v1904 = vadd.f32 0.0, %v1903
        %v1905 = vpop.f32.mrf.mxu0
        %v1906 = vadd.f32 0.0, %v1905
        %1907 = vmatmul.bf16.gmra.mxu0 %v1842
        %v1908 = vpop.f32.mrf.mxu0
        %v1909 = vadd.f32 0.0, %v1908
        %v1910 = vpop.f32.mrf.mxu0
        %v1911 = vadd.f32 0.0, %v1910
        %1912 = vmatmul.bf16.gmra.mxu0 %v1845
        %v1913 = vpop.f32.mrf.mxu0
        %v1914 = vadd.f32 0.0, %v1913
        %v1915 = vpop.f32.mrf.mxu0
        %v1916 = vadd.f32 0.0, %v1915
        %1917 = vmatmul.bf16.gmra.mxu0 %v1848
        %v1918 = vpop.f32.mrf.mxu0
        %v1919 = vadd.f32 0.0, %v1918
        %v1920 = vpop.f32.mrf.mxu0
        %v1921 = vadd.f32 0.0, %v1920
        %1922 = vdwg.mxu0
        %1923 = vmax.xlane.f32.xlu0 %v1884
        %v1924 = vpop.xlane.xlu0 %1923
        %1925 = vmax.xlane.f32.xlu0 %v1886
        %v1926 = vpop.xlane.xlu0 %1925
        %1927 = vmax.xlane.f32.xlu0 %v1889
        %v1928 = vpop.xlane.xlu0 %1927
        %1929 = vmax.xlane.f32.xlu0 %v1891
        %v1930 = vpop.xlane.xlu0 %1929
        %1931 = vmax.xlane.f32.xlu0 %v1894
        %v1932 = vpop.xlane.xlu0 %1931
        %1933 = vmax.xlane.f32.xlu0 %v1896
        %v1934 = vpop.xlane.xlu0 %1933
        %1935 = vmax.xlane.f32.xlu0 %v1899
        %v1936 = vpop.xlane.xlu0 %1935
        %1937 = vmax.xlane.f32.xlu0 %v1901
        %v1938 = vpop.xlane.xlu0 %1937
        %1939 = vmax.xlane.f32.xlu0 %v1904
        %v1940 = vpop.xlane.xlu0 %1939
        %1941 = vmax.xlane.f32.xlu0 %v1906
        %v1942 = vpop.xlane.xlu0 %1941
        %1943 = vmax.xlane.f32.xlu0 %v1909
        %v1944 = vpop.xlane.xlu0 %1943
        %1945 = vmax.xlane.f32.xlu0 %v1911
        %v1946 = vpop.xlane.xlu0 %1945
        %1947 = vmax.xlane.f32.xlu0 %v1914
        %v1948 = vpop.xlane.xlu0 %1947
        %1949 = vmax.xlane.f32.xlu0 %v1916
        %v1950 = vpop.xlane.xlu0 %1949
        %1951 = vmax.xlane.f32.xlu0 %v1919
        %v1952 = vpop.xlane.xlu0 %1951
        %1953 = vmax.xlane.f32.xlu0 %v1921
        %v1954 = vpop.xlane.xlu0 %1953
        %v1955 = vsub.f32 %v1884, %v1924
        %v1956 = vsub.f32 %v1886, %v1926
        %v1957 = vsub.f32 %v1889, %v1928
        %v1958 = vsub.f32 %v1891, %v1930
        %v1959 = vsub.f32 %v1894, %v1932
        %v1960 = vsub.f32 %v1896, %v1934
        %v1961 = vsub.f32 %v1899, %v1936
        %v1962 = vsub.f32 %v1901, %v1938
        %v1963 = vsub.f32 %v1904, %v1940
        %v1964 = vsub.f32 %v1906, %v1942
        %v1965 = vsub.f32 %v1909, %v1944
        %v1966 = vsub.f32 %v1911, %v1946
        %v1967 = vsub.f32 %v1914, %v1948
        %v1968 = vsub.f32 %v1916, %v1950
        %v1969 = vsub.f32 %v1919, %v1952
        %v1970 = vsub.f32 %v1921, %v1954
        %v1971 = vmul.f32 %v1955, 1.442695
        %v1972 = vpow.pop %v1971
        %v1973 = vmul.f32 %v1956, 1.442695
        %v1974 = vpow.pop %v1973
        %v1975 = vmul.f32 %v1957, 1.442695
        %v1976 = vpow.pop %v1975
        %v1977 = vmul.f32 %v1958, 1.442695
        %v1978 = vpow.pop %v1977
        %v1979 = vmul.f32 %v1959, 1.442695
        %v1980 = vpow.pop %v1979
        %v1981 = vmul.f32 %v1960, 1.442695
        %v1982 = vpow.pop %v1981
        %v1983 = vmul.f32 %v1961, 1.442695
        %v1984 = vpow.pop %v1983
        %v1985 = vmul.f32 %v1962, 1.442695
        %v1986 = vpow.pop %v1985
        %v1987 = vmul.f32 %v1963, 1.442695
        %v1988 = vpow.pop %v1987
        %v1989 = vmul.f32 %v1964, 1.442695
        %v1990 = vpow.pop %v1989
        %v1991 = vmul.f32 %v1965, 1.442695
        %v1992 = vpow.pop %v1991
        %v1993 = vmul.f32 %v1966, 1.442695
        %v1994 = vpow.pop %v1993
        %v1995 = vmul.f32 %v1967, 1.442695
        %v1996 = vpow.pop %v1995
        %v1997 = vmul.f32 %v1968, 1.442695
        %v1998 = vpow.pop %v1997
        %v1999 = vmul.f32 %v1969, 1.442695
        %v2000 = vpow.pop %v1999
        %v2001 = vmul.f32 %v1970, 1.442695
        %v2002 = vpow.pop %v2001
        %2003 = vadd.xlane.f32.xlu0 %v1972
        %v2004 = vpop.xlane.xlu0 %2003
        %2005 = vadd.xlane.f32.xlu0 %v1974
        %v2006 = vpop.xlane.xlu0 %2005
        %2007 = vadd.xlane.f32.xlu0 %v1976
        %v2008 = vpop.xlane.xlu0 %2007
        %2009 = vadd.xlane.f32.xlu0 %v1978
        %v2010 = vpop.xlane.xlu0 %2009
        %2011 = vadd.xlane.f32.xlu0 %v1980
        %v2012 = vpop.xlane.xlu0 %2011
        %2013 = vadd.xlane.f32.xlu0 %v1982
        %v2014 = vpop.xlane.xlu0 %2013
        %2015 = vadd.xlane.f32.xlu0 %v1984
        %v2016 = vpop.xlane.xlu0 %2015
        %2017 = vadd.xlane.f32.xlu0 %v1986
        %v2018 = vpop.xlane.xlu0 %2017
        %2019 = vadd.xlane.f32.xlu0 %v1988
        %v2020 = vpop.xlane.xlu0 %2019
        %2021 = vadd.xlane.f32.xlu0 %v1990
        %v2022 = vpop.xlane.xlu0 %2021
        %2023 = vadd.xlane.f32.xlu0 %v1992
        %v2024 = vpop.xlane.xlu0 %2023
        %2025 = vadd.xlane.f32.xlu0 %v1994
        %v2026 = vpop.xlane.xlu0 %2025
        %2027 = vadd.xlane.f32.xlu0 %v1996
        %v2028 = vpop.xlane.xlu0 %2027
        %2029 = vadd.xlane.f32.xlu0 %v1998
        %v2030 = vpop.xlane.xlu0 %2029
        %2031 = vadd.xlane.f32.xlu0 %v2000
        %v2032 = vpop.xlane.xlu0 %2031
        %2033 = vadd.xlane.f32.xlu0 %v2002
        %v2034 = vpop.xlane.xlu0 %2033
        %v2035 = vrcp.pop %v2004
        %v2036 = vrcp.pop %v2006
        %v2037 = vrcp.pop %v2008
        %v2038 = vrcp.pop %v2010
        %v2039 = vrcp.pop %v2012
        %v2040 = vrcp.pop %v2014
        %v2041 = vrcp.pop %v2016
        %v2042 = vrcp.pop %v2018
        %v2043 = vrcp.pop %v2020
        %v2044 = vrcp.pop %v2022
        %v2045 = vrcp.pop %v2024
        %v2046 = vrcp.pop %v2026
        %v2047 = vrcp.pop %v2028
        %v2048 = vrcp.pop %v2030
        %v2049 = vrcp.pop %v2032
        %v2050 = vrcp.pop %v2034
        %v2051 = vpack.c.bf16 %v1974, %v1972
        %v2052 = vpack.c.bf16 %v1978, %v1976
        %v2053 = vpack.c.bf16 %v1982, %v1980
        %v2054 = vpack.c.bf16 %v1986, %v1984
        %v2055 = vpack.c.bf16 %v1990, %v1988
        %v2056 = vpack.c.bf16 %v1994, %v1992
        %v2057 = vpack.c.bf16 %v1998, %v1996
        %v2058 = vpack.c.bf16 %v2002, %v2000
        %2059 = vrot.lane.b32.xlu0 %v1701, 96
        %v2060 = vpop.permute.xlu0 %2059
        %2061 = vrot.lane.b32.xlu0 %v1702, 96
        %v2062 = vpop.permute.xlu0 %2061
        %2063 = vrot.lane.b32.xlu0 %v1703, 96
        %v2064 = vpop.permute.xlu0 %2063
        %2065 = vrot.lane.b32.xlu0 %v1704, 96
        %v2066 = vpop.permute.xlu0 %2065
        %2067 = vrot.lane.b32.xlu0 %v1705, 96
        %v2068 = vpop.permute.xlu0 %2067
        %2069 = vrot.lane.b32.xlu0 %v1706, 96
        %v2070 = vpop.permute.xlu0 %2069
        %2071 = vrot.lane.b32.xlu0 %v1707, 96
        %v2072 = vpop.permute.xlu0 %2071
        %2073 = vrot.lane.b32.xlu0 %v1708, 96
        %v2074 = vpop.permute.xlu0 %2073
        %2083 = vmatpush.bf16.msra.mxu0 %v2074
        %2084 = vmatpush.bf16.msra.mxu0 %v2072
        %2085 = vmatpush.bf16.msra.mxu0 %v2070
        %2086 = vmatpush.bf16.msra.mxu0 %v2068
        %2087 = vmatpush.bf16.msra.mxu0 %v2066
        %2088 = vmatpush.bf16.msra.mxu0 %v2064
        %2089 = vmatpush.bf16.msra.mxu0 %v2062
        %2090 = vmatpush.bf16.msra.mxu0 %v2060
        %2091 = vmatmul.bf16.gmra.mxu0 %v2051
        %v2092 = vpop.f32.mrf.mxu0
        %v2093 = vadd.f32 0.0, %v2092
        %v2094 = vpop.f32.mrf.mxu0
        %v2095 = vadd.f32 0.0, %v2094
        %2096 = vmatmul.bf16.gmra.mxu0 %v2052
        %v2097 = vpop.f32.mrf.mxu0
        %v2098 = vadd.f32 0.0, %v2097
        %v2099 = vpop.f32.mrf.mxu0
        %v2100 = vadd.f32 0.0, %v2099
        %2101 = vmatmul.bf16.gmra.mxu0 %v2053
        %v2102 = vpop.f32.mrf.mxu0
        %v2103 = vadd.f32 0.0, %v2102
        %v2104 = vpop.f32.mrf.mxu0
        %v2105 = vadd.f32 0.0, %v2104
        %2106 = vmatmul.bf16.gmra.mxu0 %v2054
        %v2107 = vpop.f32.mrf.mxu0
        %v2108 = vadd.f32 0.0, %v2107
        %v2109 = vpop.f32.mrf.mxu0
        %v2110 = vadd.f32 0.0, %v2109
        %2111 = vmatmul.bf16.gmra.mxu0 %v2055
        %v2112 = vpop.f32.mrf.mxu0
        %v2113 = vadd.f32 0.0, %v2112
        %v2114 = vpop.f32.mrf.mxu0
        %v2115 = vadd.f32 0.0, %v2114
        %2116 = vmatmul.bf16.gmra.mxu0 %v2056
        %v2117 = vpop.f32.mrf.mxu0
        %v2118 = vadd.f32 0.0, %v2117
        %v2119 = vpop.f32.mrf.mxu0
        %v2120 = vadd.f32 0.0, %v2119
        %2121 = vmatmul.bf16.gmra.mxu0 %v2057
        %v2122 = vpop.f32.mrf.mxu0
        %v2123 = vadd.f32 0.0, %v2122
        %v2124 = vpop.f32.mrf.mxu0
        %v2125 = vadd.f32 0.0, %v2124
        %2126 = vmatmul.bf16.gmra.mxu0 %v2058
        %v2127 = vpop.f32.mrf.mxu0
        %v2128 = vadd.f32 0.0, %v2127
        %v2129 = vpop.f32.mrf.mxu0
        %v2130 = vadd.f32 0.0, %v2129
        %2131 = vdwg.mxu0
        %v2132 = vmul.f32 %v2093, %v2035
        %v2133 = vmul.f32 %v2095, %v2036
        %v2134 = vmul.f32 %v2098, %v2037
        %v2135 = vmul.f32 %v2100, %v2038
        %v2136 = vmul.f32 %v2103, %v2039
        %v2137 = vmul.f32 %v2105, %v2040
        %v2138 = vmul.f32 %v2108, %v2041
        %v2139 = vmul.f32 %v2110, %v2042
        %v2140 = vmul.f32 %v2113, %v2043
        %v2141 = vmul.f32 %v2115, %v2044
        %v2142 = vmul.f32 %v2118, %v2045
        %v2143 = vmul.f32 %v2120, %v2046
        %v2144 = vmul.f32 %v2123, %v2047
        %v2145 = vmul.f32 %v2125, %v2048
        %v2146 = vmul.f32 %v2128, %v2049
        %v2147 = vmul.f32 %v2130, %v2050
        %v2148 = vpack.c.bf16 %v2133, %v2132
        %v2149 = vpack.c.bf16 %v2135, %v2134
        %v2150 = vpack.c.bf16 %v2137, %v2136
        %v2151 = vpack.c.bf16 %v2139, %v2138
        %v2152 = vpack.c.bf16 %v2141, %v2140
        %v2153 = vpack.c.bf16 %v2143, %v2142
        %v2154 = vpack.c.bf16 %v2145, %v2144
        %v2155 = vpack.c.bf16 %v2147, %v2146
        %v2156 = vld [vmem:[#allocation10 + $0x10] sm:$0xf]
        %v2157 = vld [vmem:[#allocation10 + $0x14] sm:$0xf]
        %v2158 = vld [vmem:[#allocation10 + $0x18] sm:$0xf]
        %v2159 = vld [vmem:[#allocation10 + $0x1c] sm:$0xf]
        %v2164 = vunpack.c.l.b16 %v2156
        %v2165 = vunpack.c.l.b16 %v2157
        %v2166 = vunpack.c.l.b16 %v2158
        %v2167 = vunpack.c.l.b16 %v2159
        %v2168 = vpack.c.b16 %v2165, %v2164
        %v2169 = vpack.c.b16 %v2167, %v2166
        %v2173 = vsel %vm1435, %v2148, 0
        %v2176 = vsel %vm1435, %v2149, 0
        %v2179 = vsel %vm1435, %v2150, 0
        %v2182 = vsel %vm1435, %v2151, 0
        %v2185 = vsel %vm1435, %v2152, 0
        %v2188 = vsel %vm1435, %v2153, 0
        %v2191 = vsel %vm1435, %v2154, 0
        %v2194 = vsel %vm1435, %v2155, 0
        %2196 = vmatpush.bf16.msra.mxu0 0
        %2197 = vmatpush.bf16.msra.mxu0 0
        %2198 = vmatpush.bf16.msra.mxu0 0
        %2199 = vmatpush.bf16.msra.mxu0 0
        %2200 = vmatpush.bf16.msra.mxu0 0
        %2201 = vmatpush.bf16.msra.mxu0 0
        %2202 = vmatpush.bf16.msra.mxu0 %v2169
        %2203 = vmatpush.bf16.msra.mxu0 %v2168
        %2204 = vmatmul.bf16.gmra.mxu0 %v2173
        %v2205 = vpop.f32.mrf.mxu0
        %v2206 = vadd.f32 0.0, %v2205
        %v2207 = vpop.f32.mrf.mxu0
        %v2208 = vadd.f32 0.0, %v2207
        %2209 = vmatmul.bf16.gmra.mxu0 %v2176
        %v2210 = vpop.f32.mrf.mxu0
        %v2211 = vadd.f32 0.0, %v2210
        %v2212 = vpop.f32.mrf.mxu0
        %v2213 = vadd.f32 0.0, %v2212
        %2214 = vmatmul.bf16.gmra.mxu0 %v2179
        %v2215 = vpop.f32.mrf.mxu0
        %v2216 = vadd.f32 0.0, %v2215
        %v2217 = vpop.f32.mrf.mxu0
        %v2218 = vadd.f32 0.0, %v2217
        %2219 = vmatmul.bf16.gmra.mxu0 %v2182
        %v2220 = vpop.f32.mrf.mxu0
        %v2221 = vadd.f32 0.0, %v2220
        %v2222 = vpop.f32.mrf.mxu0
        %v2223 = vadd.f32 0.0, %v2222
        %2224 = vmatmul.bf16.gmra.mxu0 %v2185
        %v2225 = vpop.f32.mrf.mxu0
        %v2226 = vadd.f32 0.0, %v2225
        %v2227 = vpop.f32.mrf.mxu0
        %v2228 = vadd.f32 0.0, %v2227
        %2229 = vmatmul.bf16.gmra.mxu0 %v2188
        %v2230 = vpop.f32.mrf.mxu0
        %v2231 = vadd.f32 0.0, %v2230
        %v2232 = vpop.f32.mrf.mxu0
        %v2233 = vadd.f32 0.0, %v2232
        %2234 = vmatmul.bf16.gmra.mxu0 %v2191
        %v2235 = vpop.f32.mrf.mxu0
        %v2236 = vadd.f32 0.0, %v2235
        %v2237 = vpop.f32.mrf.mxu0
        %v2238 = vadd.f32 0.0, %v2237
        %2239 = vmatmul.bf16.gmra.mxu0 %v2194
        %v2240 = vpop.f32.mrf.mxu0
        %v2241 = vadd.f32 0.0, %v2240
        %v2242 = vpop.f32.mrf.mxu0
        %v2243 = vadd.f32 0.0, %v2242
        %2244 = vdwg.mxu0
        %v2249 = vunpack.c.l.b16 %v1790
        %v2250 = vunpack.c.l.b16 %v1791
        %v2251 = vunpack.c.l.b16 %v1792
        %v2252 = vunpack.c.l.b16 %v1793
        %v2253 = vpack.c.b16 %v2250, %v2249
        %v2254 = vpack.c.b16 %v2252, %v2251
        %v2258 = vsel %vm1435, %v1782, 0
        %v2261 = vsel %vm1435, %v1783, 0
        %v2264 = vsel %vm1435, %v1784, 0
        %v2267 = vsel %vm1435, %v1785, 0
        %v2270 = vsel %vm1435, %v1786, 0
        %v2273 = vsel %vm1435, %v1787, 0
        %v2276 = vsel %vm1435, %v1788, 0
        %v2279 = vsel %vm1435, %v1789, 0
        %2281 = vmatpush.bf16.msra.mxu0 0
        %2282 = vmatpush.bf16.msra.mxu0 0
        %2283 = vmatpush.bf16.msra.mxu0 0
        %2284 = vmatpush.bf16.msra.mxu0 0
        %2285 = vmatpush.bf16.msra.mxu0 0
        %2286 = vmatpush.bf16.msra.mxu0 0
        %2287 = vmatpush.bf16.msra.mxu0 %v2254
        %2288 = vmatpush.bf16.msra.mxu0 %v2253
        %2289 = vmatmul.bf16.gmra.mxu0 %v2258
        %v2290 = vpop.f32.mrf.mxu0
        %v2291 = vadd.f32 %v2206, %v2290
        %v2292 = vpop.f32.mrf.mxu0
        %v2293 = vadd.f32 %v2208, %v2292
        %2294 = vmatmul.bf16.gmra.mxu0 %v2261
        %v2295 = vpop.f32.mrf.mxu0
        %v2296 = vadd.f32 %v2211, %v2295
        %v2297 = vpop.f32.mrf.mxu0
        %v2298 = vadd.f32 %v2213, %v2297
        %2299 = vmatmul.bf16.gmra.mxu0 %v2264
        %v2300 = vpop.f32.mrf.mxu0
        %v2301 = vadd.f32 %v2216, %v2300
        %v2302 = vpop.f32.mrf.mxu0
        %v2303 = vadd.f32 %v2218, %v2302
        %2304 = vmatmul.bf16.gmra.mxu0 %v2267
        %v2305 = vpop.f32.mrf.mxu0
        %v2306 = vadd.f32 %v2221, %v2305
        %v2307 = vpop.f32.mrf.mxu0
        %v2308 = vadd.f32 %v2223, %v2307
        %2309 = vmatmul.bf16.gmra.mxu0 %v2270
        %v2310 = vpop.f32.mrf.mxu0
        %v2311 = vadd.f32 %v2226, %v2310
        %v2312 = vpop.f32.mrf.mxu0
        %v2313 = vadd.f32 %v2228, %v2312
        %2314 = vmatmul.bf16.gmra.mxu0 %v2273
        %v2315 = vpop.f32.mrf.mxu0
        %v2316 = vadd.f32 %v2231, %v2315
        %v2317 = vpop.f32.mrf.mxu0
        %v2318 = vadd.f32 %v2233, %v2317
        %2319 = vmatmul.bf16.gmra.mxu0 %v2276
        %v2320 = vpop.f32.mrf.mxu0
        %v2321 = vadd.f32 %v2236, %v2320
        %v2322 = vpop.f32.mrf.mxu0
        %v2323 = vadd.f32 %v2238, %v2322
        %2324 = vmatmul.bf16.gmra.mxu0 %v2279
        %v2325 = vpop.f32.mrf.mxu0
        %v2326 = vadd.f32 %v2241, %v2325
        %v2327 = vpop.f32.mrf.mxu0
        %v2328 = vadd.f32 %v2243, %v2327
        %2329 = vdwg.mxu0
        %2330 = vrot.lane.b32.xlu0 %v1387, 64
        %v2331 = vpop.permute.xlu0 %2330
        %2332 = vrot.lane.b32.xlu0 %v1388, 64
        %v2333 = vpop.permute.xlu0 %2332
        %2334 = vrot.lane.b32.xlu0 %v1389, 64
        %v2335 = vpop.permute.xlu0 %2334
        %2336 = vrot.lane.b32.xlu0 %v1390, 64
        %v2337 = vpop.permute.xlu0 %2336
        %2338 = vrot.lane.b32.xlu0 %v1391, 64
        %v2339 = vpop.permute.xlu0 %2338
        %2340 = vrot.lane.b32.xlu0 %v1392, 64
        %v2341 = vpop.permute.xlu0 %2340
        %2342 = vrot.lane.b32.xlu0 %v1393, 64
        %v2343 = vpop.permute.xlu0 %2342
        %2344 = vrot.lane.b32.xlu0 %v1394, 64
        %v2345 = vpop.permute.xlu0 %2344
        %2346 = vrot.lane.b32.xlu0 %v1427, 64
        %v2347 = vpop.permute.xlu0 %2346
        %2348 = vrot.lane.b32.xlu0 %v1428, 64
        %v2349 = vpop.permute.xlu0 %2348
        %2350 = vrot.lane.b32.xlu0 %v1429, 64
        %v2351 = vpop.permute.xlu0 %2350
        %2352 = vrot.lane.b32.xlu0 %v1430, 64
        %v2353 = vpop.permute.xlu0 %2352
        %2354 = vrot.lane.b32.xlu0 %v1431, 64
        %v2355 = vpop.permute.xlu0 %2354
        %2356 = vrot.lane.b32.xlu0 %v1432, 64
        %v2357 = vpop.permute.xlu0 %2356
        %2358 = vrot.lane.b32.xlu0 %v1433, 64
        %v2359 = vpop.permute.xlu0 %2358
        %2360 = vrot.lane.b32.xlu0 %v1434, 64
        %v2361 = vpop.permute.xlu0 %2360
        %v2363 = vsel %vm1435, %v2331, 0
        %v2366 = vsel %vm1435, %v2333, 0
        %v2369 = vsel %vm1435, %v2335, 0
        %v2372 = vsel %vm1435, %v2337, 0
        %v2375 = vsel %vm1435, %v2339, 0
        %v2378 = vsel %vm1435, %v2341, 0
        %v2381 = vsel %vm1435, %v2343, 0
        %v2384 = vsel %vm1435, %v2345, 0
        %v2387 = vsel %vm1435, %v2347, 0
        %v2390 = vsel %vm1435, %v2349, 0
        %v2393 = vsel %vm1435, %v2351, 0
        %v2396 = vsel %vm1435, %v2353, 0
        %v2399 = vsel %vm1435, %v2355, 0
        %v2402 = vsel %vm1435, %v2357, 0
        %v2405 = vsel %vm1435, %v2359, 0
        %v2408 = vsel %vm1435, %v2361, 0
        %2410 = vmatpush.bf16.xpose.msra.mxu0 %v2408
        %2411 = vmatpush.bf16.xpose.msra.mxu0 %v2405
        %2412 = vmatpush.bf16.xpose.msra.mxu0 %v2402
        %2413 = vmatpush.bf16.xpose.msra.mxu0 %v2399
        %2414 = vmatpush.bf16.xpose.msra.mxu0 %v2396
        %2415 = vmatpush.bf16.xpose.msra.mxu0 %v2393
        %2416 = vmatpush.bf16.xpose.msra.mxu0 %v2390
        %2417 = vmatpush.bf16.xpose.msra.mxu0 %v2387
        %2418 = vmatmul.bf16.gmra.mxu0 %v2363
        %v2419 = vpop.f32.mrf.mxu0
        %v2420 = vadd.f32 0.0, %v2419
        %v2421 = vpop.f32.mrf.mxu0
        %v2422 = vadd.f32 0.0, %v2421
        %2423 = vmatmul.bf16.gmra.mxu0 %v2366
        %v2424 = vpop.f32.mrf.mxu0
        %v2425 = vadd.f32 0.0, %v2424
        %v2426 = vpop.f32.mrf.mxu0
        %v2427 = vadd.f32 0.0, %v2426
        %2428 = vmatmul.bf16.gmra.mxu0 %v2369
        %v2429 = vpop.f32.mrf.mxu0
        %v2430 = vadd.f32 0.0, %v2429
        %v2431 = vpop.f32.mrf.mxu0
        %v2432 = vadd.f32 0.0, %v2431
        %2433 = vmatmul.bf16.gmra.mxu0 %v2372
        %v2434 = vpop.f32.mrf.mxu0
        %v2435 = vadd.f32 0.0, %v2434
        %v2436 = vpop.f32.mrf.mxu0
        %v2437 = vadd.f32 0.0, %v2436
        %2438 = vmatmul.bf16.gmra.mxu0 %v2375
        %v2439 = vpop.f32.mrf.mxu0
        %v2440 = vadd.f32 0.0, %v2439
        %v2441 = vpop.f32.mrf.mxu0
        %v2442 = vadd.f32 0.0, %v2441
        %2443 = vmatmul.bf16.gmra.mxu0 %v2378
        %v2444 = vpop.f32.mrf.mxu0
        %v2445 = vadd.f32 0.0, %v2444
        %v2446 = vpop.f32.mrf.mxu0
        %v2447 = vadd.f32 0.0, %v2446
        %2448 = vmatmul.bf16.gmra.mxu0 %v2381
        %v2449 = vpop.f32.mrf.mxu0
        %v2450 = vadd.f32 0.0, %v2449
        %v2451 = vpop.f32.mrf.mxu0
        %v2452 = vadd.f32 0.0, %v2451
        %2453 = vmatmul.bf16.gmra.mxu0 %v2384
        %v2454 = vpop.f32.mrf.mxu0
        %v2455 = vadd.f32 0.0, %v2454
        %v2456 = vpop.f32.mrf.mxu0
        %v2457 = vadd.f32 0.0, %v2456
        %2458 = vdwg.mxu0
        %2459 = vmax.xlane.f32.xlu0 %v2420
        %v2460 = vpop.xlane.xlu0 %2459
        %2461 = vmax.xlane.f32.xlu0 %v2422
        %v2462 = vpop.xlane.xlu0 %2461
        %2463 = vmax.xlane.f32.xlu0 %v2425
        %v2464 = vpop.xlane.xlu0 %2463
        %2465 = vmax.xlane.f32.xlu0 %v2427
        %v2466 = vpop.xlane.xlu0 %2465
        %2467 = vmax.xlane.f32.xlu0 %v2430
        %v2468 = vpop.xlane.xlu0 %2467
        %2469 = vmax.xlane.f32.xlu0 %v2432
        %v2470 = vpop.xlane.xlu0 %2469
        %2471 = vmax.xlane.f32.xlu0 %v2435
        %v2472 = vpop.xlane.xlu0 %2471
        %2473 = vmax.xlane.f32.xlu0 %v2437
        %v2474 = vpop.xlane.xlu0 %2473
        %2475 = vmax.xlane.f32.xlu0 %v2440
        %v2476 = vpop.xlane.xlu0 %2475
        %2477 = vmax.xlane.f32.xlu0 %v2442
        %v2478 = vpop.xlane.xlu0 %2477
        %2479 = vmax.xlane.f32.xlu0 %v2445
        %v2480 = vpop.xlane.xlu0 %2479
        %2481 = vmax.xlane.f32.xlu0 %v2447
        %v2482 = vpop.xlane.xlu0 %2481
        %2483 = vmax.xlane.f32.xlu0 %v2450
        %v2484 = vpop.xlane.xlu0 %2483
        %2485 = vmax.xlane.f32.xlu0 %v2452
        %v2486 = vpop.xlane.xlu0 %2485
        %2487 = vmax.xlane.f32.xlu0 %v2455
        %v2488 = vpop.xlane.xlu0 %2487
        %2489 = vmax.xlane.f32.xlu0 %v2457
        %v2490 = vpop.xlane.xlu0 %2489
        %v2491 = vsub.f32 %v2420, %v2460
        %v2492 = vsub.f32 %v2422, %v2462
        %v2493 = vsub.f32 %v2425, %v2464
        %v2494 = vsub.f32 %v2427, %v2466
        %v2495 = vsub.f32 %v2430, %v2468
        %v2496 = vsub.f32 %v2432, %v2470
        %v2497 = vsub.f32 %v2435, %v2472
        %v2498 = vsub.f32 %v2437, %v2474
        %v2499 = vsub.f32 %v2440, %v2476
        %v2500 = vsub.f32 %v2442, %v2478
        %v2501 = vsub.f32 %v2445, %v2480
        %v2502 = vsub.f32 %v2447, %v2482
        %v2503 = vsub.f32 %v2450, %v2484
        %v2504 = vsub.f32 %v2452, %v2486
        %v2505 = vsub.f32 %v2455, %v2488
        %v2506 = vsub.f32 %v2457, %v2490
        %v2507 = vmul.f32 %v2491, 1.442695
        %v2508 = vpow.pop %v2507
        %v2509 = vmul.f32 %v2492, 1.442695
        %v2510 = vpow.pop %v2509
        %v2511 = vmul.f32 %v2493, 1.442695
        %v2512 = vpow.pop %v2511
        %v2513 = vmul.f32 %v2494, 1.442695
        %v2514 = vpow.pop %v2513
        %v2515 = vmul.f32 %v2495, 1.442695
        %v2516 = vpow.pop %v2515
        %v2517 = vmul.f32 %v2496, 1.442695
        %v2518 = vpow.pop %v2517
        %v2519 = vmul.f32 %v2497, 1.442695
        %v2520 = vpow.pop %v2519
        %v2521 = vmul.f32 %v2498, 1.442695
        %v2522 = vpow.pop %v2521
        %v2523 = vmul.f32 %v2499, 1.442695
        %v2524 = vpow.pop %v2523
        %v2525 = vmul.f32 %v2500, 1.442695
        %v2526 = vpow.pop %v2525
        %v2527 = vmul.f32 %v2501, 1.442695
        %v2528 = vpow.pop %v2527
        %v2529 = vmul.f32 %v2502, 1.442695
        %v2530 = vpow.pop %v2529
        %v2531 = vmul.f32 %v2503, 1.442695
        %v2532 = vpow.pop %v2531
        %v2533 = vmul.f32 %v2504, 1.442695
        %v2534 = vpow.pop %v2533
        %v2535 = vmul.f32 %v2505, 1.442695
        %v2536 = vpow.pop %v2535
        %v2537 = vmul.f32 %v2506, 1.442695
        %v2538 = vpow.pop %v2537
        %2539 = vadd.xlane.f32.xlu0 %v2508
        %v2540 = vpop.xlane.xlu0 %2539
        %2541 = vadd.xlane.f32.xlu0 %v2510
        %v2542 = vpop.xlane.xlu0 %2541
        %2543 = vadd.xlane.f32.xlu0 %v2512
        %v2544 = vpop.xlane.xlu0 %2543
        %2545 = vadd.xlane.f32.xlu0 %v2514
        %v2546 = vpop.xlane.xlu0 %2545
        %2547 = vadd.xlane.f32.xlu0 %v2516
        %v2548 = vpop.xlane.xlu0 %2547
        %2549 = vadd.xlane.f32.xlu0 %v2518
        %v2550 = vpop.xlane.xlu0 %2549
        %2551 = vadd.xlane.f32.xlu0 %v2520
        %v2552 = vpop.xlane.xlu0 %2551
        %2553 = vadd.xlane.f32.xlu0 %v2522
        %v2554 = vpop.xlane.xlu0 %2553
        %2555 = vadd.xlane.f32.xlu0 %v2524
        %v2556 = vpop.xlane.xlu0 %2555
        %2557 = vadd.xlane.f32.xlu0 %v2526
        %v2558 = vpop.xlane.xlu0 %2557
        %2559 = vadd.xlane.f32.xlu0 %v2528
        %v2560 = vpop.xlane.xlu0 %2559
        %2561 = vadd.xlane.f32.xlu0 %v2530
        %v2562 = vpop.xlane.xlu0 %2561
        %2563 = vadd.xlane.f32.xlu0 %v2532
        %v2564 = vpop.xlane.xlu0 %2563
        %2565 = vadd.xlane.f32.xlu0 %v2534
        %v2566 = vpop.xlane.xlu0 %2565
        %2567 = vadd.xlane.f32.xlu0 %v2536
        %v2568 = vpop.xlane.xlu0 %2567
        %2569 = vadd.xlane.f32.xlu0 %v2538
        %v2570 = vpop.xlane.xlu0 %2569
        %v2571 = vrcp.pop %v2540
        %v2572 = vrcp.pop %v2542
        %v2573 = vrcp.pop %v2544
        %v2574 = vrcp.pop %v2546
        %v2575 = vrcp.pop %v2548
        %v2576 = vrcp.pop %v2550
        %v2577 = vrcp.pop %v2552
        %v2578 = vrcp.pop %v2554
        %v2579 = vrcp.pop %v2556
        %v2580 = vrcp.pop %v2558
        %v2581 = vrcp.pop %v2560
        %v2582 = vrcp.pop %v2562
        %v2583 = vrcp.pop %v2564
        %v2584 = vrcp.pop %v2566
        %v2585 = vrcp.pop %v2568
        %v2586 = vrcp.pop %v2570
        %v2587 = vpack.c.bf16 %v2510, %v2508
        %v2588 = vpack.c.bf16 %v2514, %v2512
        %v2589 = vpack.c.bf16 %v2518, %v2516
        %v2590 = vpack.c.bf16 %v2522, %v2520
        %v2591 = vpack.c.bf16 %v2526, %v2524
        %v2592 = vpack.c.bf16 %v2530, %v2528
        %v2593 = vpack.c.bf16 %v2534, %v2532
        %v2594 = vpack.c.bf16 %v2538, %v2536
        %2595 = vrot.lane.b32.xlu0 %v1701, 64
        %v2596 = vpop.permute.xlu0 %2595
        %2597 = vrot.lane.b32.xlu0 %v1702, 64
        %v2598 = vpop.permute.xlu0 %2597
        %2599 = vrot.lane.b32.xlu0 %v1703, 64
        %v2600 = vpop.permute.xlu0 %2599
        %2601 = vrot.lane.b32.xlu0 %v1704, 64
        %v2602 = vpop.permute.xlu0 %2601
        %2603 = vrot.lane.b32.xlu0 %v1705, 64
        %v2604 = vpop.permute.xlu0 %2603
        %2605 = vrot.lane.b32.xlu0 %v1706, 64
        %v2606 = vpop.permute.xlu0 %2605
        %2607 = vrot.lane.b32.xlu0 %v1707, 64
        %v2608 = vpop.permute.xlu0 %2607
        %2609 = vrot.lane.b32.xlu0 %v1708, 64
        %v2610 = vpop.permute.xlu0 %2609
        %2619 = vmatpush.bf16.msra.mxu0 %v2610
        %2620 = vmatpush.bf16.msra.mxu0 %v2608
        %2621 = vmatpush.bf16.msra.mxu0 %v2606
        %2622 = vmatpush.bf16.msra.mxu0 %v2604
        %2623 = vmatpush.bf16.msra.mxu0 %v2602
        %2624 = vmatpush.bf16.msra.mxu0 %v2600
        %2625 = vmatpush.bf16.msra.mxu0 %v2598
        %2626 = vmatpush.bf16.msra.mxu0 %v2596
        %2627 = vmatmul.bf16.gmra.mxu0 %v2587
        %v2628 = vpop.f32.mrf.mxu0
        %v2629 = vadd.f32 0.0, %v2628
        %v2630 = vpop.f32.mrf.mxu0
        %v2631 = vadd.f32 0.0, %v2630
        %2632 = vmatmul.bf16.gmra.mxu0 %v2588
        %v2633 = vpop.f32.mrf.mxu0
        %v2634 = vadd.f32 0.0, %v2633
        %v2635 = vpop.f32.mrf.mxu0
        %v2636 = vadd.f32 0.0, %v2635
        %2637 = vmatmul.bf16.gmra.mxu0 %v2589
        %v2638 = vpop.f32.mrf.mxu0
        %v2639 = vadd.f32 0.0, %v2638
        %v2640 = vpop.f32.mrf.mxu0
        %v2641 = vadd.f32 0.0, %v2640
        %2642 = vmatmul.bf16.gmra.mxu0 %v2590
        %v2643 = vpop.f32.mrf.mxu0
        %v2644 = vadd.f32 0.0, %v2643
        %v2645 = vpop.f32.mrf.mxu0
        %v2646 = vadd.f32 0.0, %v2645
        %2647 = vmatmul.bf16.gmra.mxu0 %v2591
        %v2648 = vpop.f32.mrf.mxu0
        %v2649 = vadd.f32 0.0, %v2648
        %v2650 = vpop.f32.mrf.mxu0
        %v2651 = vadd.f32 0.0, %v2650
        %2652 = vmatmul.bf16.gmra.mxu0 %v2592
        %v2653 = vpop.f32.mrf.mxu0
        %v2654 = vadd.f32 0.0, %v2653
        %v2655 = vpop.f32.mrf.mxu0
        %v2656 = vadd.f32 0.0, %v2655
        %2657 = vmatmul.bf16.gmra.mxu0 %v2593
        %v2658 = vpop.f32.mrf.mxu0
        %v2659 = vadd.f32 0.0, %v2658
        %v2660 = vpop.f32.mrf.mxu0
        %v2661 = vadd.f32 0.0, %v2660
        %2662 = vmatmul.bf16.gmra.mxu0 %v2594
        %v2663 = vpop.f32.mrf.mxu0
        %v2664 = vadd.f32 0.0, %v2663
        %v2665 = vpop.f32.mrf.mxu0
        %v2666 = vadd.f32 0.0, %v2665
        %2667 = vdwg.mxu0
        %v2668 = vmul.f32 %v2629, %v2571
        %v2669 = vmul.f32 %v2631, %v2572
        %v2670 = vmul.f32 %v2634, %v2573
        %v2671 = vmul.f32 %v2636, %v2574
        %v2672 = vmul.f32 %v2639, %v2575
        %v2673 = vmul.f32 %v2641, %v2576
        %v2674 = vmul.f32 %v2644, %v2577
        %v2675 = vmul.f32 %v2646, %v2578
        %v2676 = vmul.f32 %v2649, %v2579
        %v2677 = vmul.f32 %v2651, %v2580
        %v2678 = vmul.f32 %v2654, %v2581
        %v2679 = vmul.f32 %v2656, %v2582
        %v2680 = vmul.f32 %v2659, %v2583
        %v2681 = vmul.f32 %v2661, %v2584
        %v2682 = vmul.f32 %v2664, %v2585
        %v2683 = vmul.f32 %v2666, %v2586
        %v2684 = vpack.c.bf16 %v2669, %v2668
        %v2685 = vpack.c.bf16 %v2671, %v2670
        %v2686 = vpack.c.bf16 %v2673, %v2672
        %v2687 = vpack.c.bf16 %v2675, %v2674
        %v2688 = vpack.c.bf16 %v2677, %v2676
        %v2689 = vpack.c.bf16 %v2679, %v2678
        %v2690 = vpack.c.bf16 %v2681, %v2680
        %v2691 = vpack.c.bf16 %v2683, %v2682
        %v2692 = vld [vmem:[#allocation10 + $0x20] sm:$0xf]
        %v2693 = vld [vmem:[#allocation10 + $0x24] sm:$0xf]
        %v2694 = vld [vmem:[#allocation10 + $0x28] sm:$0xf]
        %v2695 = vld [vmem:[#allocation10 + $0x2c] sm:$0xf]
        %v2700 = vunpack.c.l.b16 %v2692
        %v2701 = vunpack.c.l.b16 %v2693
        %v2702 = vunpack.c.l.b16 %v2694
        %v2703 = vunpack.c.l.b16 %v2695
        %v2704 = vpack.c.b16 %v2701, %v2700
        %v2705 = vpack.c.b16 %v2703, %v2702
        %v2709 = vsel %vm1435, %v2684, 0
        %v2712 = vsel %vm1435, %v2685, 0
        %v2715 = vsel %vm1435, %v2686, 0
        %v2718 = vsel %vm1435, %v2687, 0
        %v2721 = vsel %vm1435, %v2688, 0
        %v2724 = vsel %vm1435, %v2689, 0
        %v2727 = vsel %vm1435, %v2690, 0
        %v2730 = vsel %vm1435, %v2691, 0
        %2732 = vmatpush.bf16.msra.mxu0 0
        %2733 = vmatpush.bf16.msra.mxu0 0
        %2734 = vmatpush.bf16.msra.mxu0 0
        %2735 = vmatpush.bf16.msra.mxu0 0
        %2736 = vmatpush.bf16.msra.mxu0 0
        %2737 = vmatpush.bf16.msra.mxu0 0
        %2738 = vmatpush.bf16.msra.mxu0 %v2705
        %2739 = vmatpush.bf16.msra.mxu0 %v2704
        %2740 = vmatmul.bf16.gmra.mxu0 %v2709
        %v2741 = vpop.f32.mrf.mxu0
        %v2742 = vadd.f32 0.0, %v2741
        %v2743 = vpop.f32.mrf.mxu0
        %v2744 = vadd.f32 0.0, %v2743
        %2745 = vmatmul.bf16.gmra.mxu0 %v2712
        %v2746 = vpop.f32.mrf.mxu0
        %v2747 = vadd.f32 0.0, %v2746
        %v2748 = vpop.f32.mrf.mxu0
        %v2749 = vadd.f32 0.0, %v2748
        %2750 = vmatmul.bf16.gmra.mxu0 %v2715
        %v2751 = vpop.f32.mrf.mxu0
        %v2752 = vadd.f32 0.0, %v2751
        %v2753 = vpop.f32.mrf.mxu0
        %v2754 = vadd.f32 0.0, %v2753
        %2755 = vmatmul.bf16.gmra.mxu0 %v2718
        %v2756 = vpop.f32.mrf.mxu0
        %v2757 = vadd.f32 0.0, %v2756
        %v2758 = vpop.f32.mrf.mxu0
        %v2759 = vadd.f32 0.0, %v2758
        %2760 = vmatmul.bf16.gmra.mxu0 %v2721
        %v2761 = vpop.f32.mrf.mxu0
        %v2762 = vadd.f32 0.0, %v2761
        %v2763 = vpop.f32.mrf.mxu0
        %v2764 = vadd.f32 0.0, %v2763
        %2765 = vmatmul.bf16.gmra.mxu0 %v2724
        %v2766 = vpop.f32.mrf.mxu0
        %v2767 = vadd.f32 0.0, %v2766
        %v2768 = vpop.f32.mrf.mxu0
        %v2769 = vadd.f32 0.0, %v2768
        %2770 = vmatmul.bf16.gmra.mxu0 %v2727
        %v2771 = vpop.f32.mrf.mxu0
        %v2772 = vadd.f32 0.0, %v2771
        %v2773 = vpop.f32.mrf.mxu0
        %v2774 = vadd.f32 0.0, %v2773
        %2775 = vmatmul.bf16.gmra.mxu0 %v2730
        %v2776 = vpop.f32.mrf.mxu0
        %v2777 = vadd.f32 0.0, %v2776
        %v2778 = vpop.f32.mrf.mxu0
        %v2779 = vadd.f32 0.0, %v2778
        %2780 = vdwg.mxu0
        %v2781 = vadd.f32 %v2291, %v2742
        %v2782 = vadd.f32 %v2293, %v2744
        %v2783 = vadd.f32 %v2296, %v2747
        %v2784 = vadd.f32 %v2298, %v2749
        %v2785 = vadd.f32 %v2301, %v2752
        %v2786 = vadd.f32 %v2303, %v2754
        %v2787 = vadd.f32 %v2306, %v2757
        %v2788 = vadd.f32 %v2308, %v2759
        %v2789 = vadd.f32 %v2311, %v2762
        %v2790 = vadd.f32 %v2313, %v2764
        %v2791 = vadd.f32 %v2316, %v2767
        %v2792 = vadd.f32 %v2318, %v2769
        %v2793 = vadd.f32 %v2321, %v2772
        %v2794 = vadd.f32 %v2323, %v2774
        %v2795 = vadd.f32 %v2326, %v2777
        %v2796 = vadd.f32 %v2328, %v2779
        %2797 = vrot.lane.b32.xlu0 %v1387, 32
        %v2798 = vpop.permute.xlu0 %2797
        %2799 = vrot.lane.b32.xlu0 %v1388, 32
        %v2800 = vpop.permute.xlu0 %2799
        %2801 = vrot.lane.b32.xlu0 %v1389, 32
        %v2802 = vpop.permute.xlu0 %2801
        %2803 = vrot.lane.b32.xlu0 %v1390, 32
        %v2804 = vpop.permute.xlu0 %2803
        %2805 = vrot.lane.b32.xlu0 %v1391, 32
        %v2806 = vpop.permute.xlu0 %2805
        %2807 = vrot.lane.b32.xlu0 %v1392, 32
        %v2808 = vpop.permute.xlu0 %2807
        %2809 = vrot.lane.b32.xlu0 %v1393, 32
        %v2810 = vpop.permute.xlu0 %2809
        %2811 = vrot.lane.b32.xlu0 %v1394, 32
        %v2812 = vpop.permute.xlu0 %2811
        %2813 = vrot.lane.b32.xlu0 %v1427, 32
        %v2814 = vpop.permute.xlu0 %2813
        %2815 = vrot.lane.b32.xlu0 %v1428, 32
        %v2816 = vpop.permute.xlu0 %2815
        %2817 = vrot.lane.b32.xlu0 %v1429, 32
        %v2818 = vpop.permute.xlu0 %2817
        %2819 = vrot.lane.b32.xlu0 %v1430, 32
        %v2820 = vpop.permute.xlu0 %2819
        %2821 = vrot.lane.b32.xlu0 %v1431, 32
        %v2822 = vpop.permute.xlu0 %2821
        %2823 = vrot.lane.b32.xlu0 %v1432, 32
        %v2824 = vpop.permute.xlu0 %2823
        %2825 = vrot.lane.b32.xlu0 %v1433, 32
        %v2826 = vpop.permute.xlu0 %2825
        %2827 = vrot.lane.b32.xlu0 %v1434, 32
        %v2828 = vpop.permute.xlu0 %2827
        %v2830 = vsel %vm1435, %v2798, 0
        %v2833 = vsel %vm1435, %v2800, 0
        %v2836 = vsel %vm1435, %v2802, 0
        %v2839 = vsel %vm1435, %v2804, 0
        %v2842 = vsel %vm1435, %v2806, 0
        %v2845 = vsel %vm1435, %v2808, 0
        %v2848 = vsel %vm1435, %v2810, 0
        %v2851 = vsel %vm1435, %v2812, 0
        %v2854 = vsel %vm1435, %v2814, 0
        %v2857 = vsel %vm1435, %v2816, 0
        %v2860 = vsel %vm1435, %v2818, 0
        %v2863 = vsel %vm1435, %v2820, 0
        %v2866 = vsel %vm1435, %v2822, 0
        %v2869 = vsel %vm1435, %v2824, 0
        %v2872 = vsel %vm1435, %v2826, 0
        %v2875 = vsel %vm1435, %v2828, 0
        %2877 = vmatpush.bf16.xpose.msra.mxu0 %v2875
        %2878 = vmatpush.bf16.xpose.msra.mxu0 %v2872
        %2879 = vmatpush.bf16.xpose.msra.mxu0 %v2869
        %2880 = vmatpush.bf16.xpose.msra.mxu0 %v2866
        %2881 = vmatpush.bf16.xpose.msra.mxu0 %v2863
        %2882 = vmatpush.bf16.xpose.msra.mxu0 %v2860
        %2883 = vmatpush.bf16.xpose.msra.mxu0 %v2857
        %2884 = vmatpush.bf16.xpose.msra.mxu0 %v2854
        %2885 = vmatmul.bf16.gmra.mxu0 %v2830
        %v2886 = vpop.f32.mrf.mxu0
        %v2887 = vadd.f32 0.0, %v2886
        %v2888 = vpop.f32.mrf.mxu0
        %v2889 = vadd.f32 0.0, %v2888
        %2890 = vmatmul.bf16.gmra.mxu0 %v2833
        %v2891 = vpop.f32.mrf.mxu0
        %v2892 = vadd.f32 0.0, %v2891
        %v2893 = vpop.f32.mrf.mxu0
        %v2894 = vadd.f32 0.0, %v2893
        %2895 = vmatmul.bf16.gmra.mxu0 %v2836
        %v2896 = vpop.f32.mrf.mxu0
        %v2897 = vadd.f32 0.0, %v2896
        %v2898 = vpop.f32.mrf.mxu0
        %v2899 = vadd.f32 0.0, %v2898
        %2900 = vmatmul.bf16.gmra.mxu0 %v2839
        %v2901 = vpop.f32.mrf.mxu0
        %v2902 = vadd.f32 0.0, %v2901
        %v2903 = vpop.f32.mrf.mxu0
        %v2904 = vadd.f32 0.0, %v2903
        %2905 = vmatmul.bf16.gmra.mxu0 %v2842
        %v2906 = vpop.f32.mrf.mxu0
        %v2907 = vadd.f32 0.0, %v2906
        %v2908 = vpop.f32.mrf.mxu0
        %v2909 = vadd.f32 0.0, %v2908
        %2910 = vmatmul.bf16.gmra.mxu0 %v2845
        %v2911 = vpop.f32.mrf.mxu0
        %v2912 = vadd.f32 0.0, %v2911
        %v2913 = vpop.f32.mrf.mxu0
        %v2914 = vadd.f32 0.0, %v2913
        %2915 = vmatmul.bf16.gmra.mxu0 %v2848
        %v2916 = vpop.f32.mrf.mxu0
        %v2917 = vadd.f32 0.0, %v2916
        %v2918 = vpop.f32.mrf.mxu0
        %v2919 = vadd.f32 0.0, %v2918
        %2920 = vmatmul.bf16.gmra.mxu0 %v2851
        %v2921 = vpop.f32.mrf.mxu0
        %v2922 = vadd.f32 0.0, %v2921
        %v2923 = vpop.f32.mrf.mxu0
        %v2924 = vadd.f32 0.0, %v2923
        %2925 = vdwg.mxu0
        %2926 = vmax.xlane.f32.xlu0 %v2887
        %v2927 = vpop.xlane.xlu0 %2926
        %2928 = vmax.xlane.f32.xlu0 %v2889
        %v2929 = vpop.xlane.xlu0 %2928
        %2930 = vmax.xlane.f32.xlu0 %v2892
        %v2931 = vpop.xlane.xlu0 %2930
        %2932 = vmax.xlane.f32.xlu0 %v2894
        %v2933 = vpop.xlane.xlu0 %2932
        %2934 = vmax.xlane.f32.xlu0 %v2897
        %v2935 = vpop.xlane.xlu0 %2934
        %2936 = vmax.xlane.f32.xlu0 %v2899
        %v2937 = vpop.xlane.xlu0 %2936
        %2938 = vmax.xlane.f32.xlu0 %v2902
        %v2939 = vpop.xlane.xlu0 %2938
        %2940 = vmax.xlane.f32.xlu0 %v2904
        %v2941 = vpop.xlane.xlu0 %2940
        %2942 = vmax.xlane.f32.xlu0 %v2907
        %v2943 = vpop.xlane.xlu0 %2942
        %2944 = vmax.xlane.f32.xlu0 %v2909
        %v2945 = vpop.xlane.xlu0 %2944
        %2946 = vmax.xlane.f32.xlu0 %v2912
        %v2947 = vpop.xlane.xlu0 %2946
        %2948 = vmax.xlane.f32.xlu0 %v2914
        %v2949 = vpop.xlane.xlu0 %2948
        %2950 = vmax.xlane.f32.xlu0 %v2917
        %v2951 = vpop.xlane.xlu0 %2950
        %2952 = vmax.xlane.f32.xlu0 %v2919
        %v2953 = vpop.xlane.xlu0 %2952
        %2954 = vmax.xlane.f32.xlu0 %v2922
        %v2955 = vpop.xlane.xlu0 %2954
        %2956 = vmax.xlane.f32.xlu0 %v2924
        %v2957 = vpop.xlane.xlu0 %2956
        %v2958 = vsub.f32 %v2887, %v2927
        %v2959 = vsub.f32 %v2889, %v2929
        %v2960 = vsub.f32 %v2892, %v2931
        %v2961 = vsub.f32 %v2894, %v2933
        %v2962 = vsub.f32 %v2897, %v2935
        %v2963 = vsub.f32 %v2899, %v2937
        %v2964 = vsub.f32 %v2902, %v2939
        %v2965 = vsub.f32 %v2904, %v2941
        %v2966 = vsub.f32 %v2907, %v2943
        %v2967 = vsub.f32 %v2909, %v2945
        %v2968 = vsub.f32 %v2912, %v2947
        %v2969 = vsub.f32 %v2914, %v2949
        %v2970 = vsub.f32 %v2917, %v2951
        %v2971 = vsub.f32 %v2919, %v2953
        %v2972 = vsub.f32 %v2922, %v2955
        %v2973 = vsub.f32 %v2924, %v2957
        %v2974 = vmul.f32 %v2958, 1.442695
        %v2975 = vpow.pop %v2974
        %v2976 = vmul.f32 %v2959, 1.442695
        %v2977 = vpow.pop %v2976
        %v2978 = vmul.f32 %v2960, 1.442695
        %v2979 = vpow.pop %v2978
        %v2980 = vmul.f32 %v2961, 1.442695
        %v2981 = vpow.pop %v2980
        %v2982 = vmul.f32 %v2962, 1.442695
        %v2983 = vpow.pop %v2982
        %v2984 = vmul.f32 %v2963, 1.442695
        %v2985 = vpow.pop %v2984
        %v2986 = vmul.f32 %v2964, 1.442695
        %v2987 = vpow.pop %v2986
        %v2988 = vmul.f32 %v2965, 1.442695
        %v2989 = vpow.pop %v2988
        %v2990 = vmul.f32 %v2966, 1.442695
        %v2991 = vpow.pop %v2990
        %v2992 = vmul.f32 %v2967, 1.442695
        %v2993 = vpow.pop %v2992
        %v2994 = vmul.f32 %v2968, 1.442695
        %v2995 = vpow.pop %v2994
        %v2996 = vmul.f32 %v2969, 1.442695
        %v2997 = vpow.pop %v2996
        %v2998 = vmul.f32 %v2970, 1.442695
        %v2999 = vpow.pop %v2998
        %v3000 = vmul.f32 %v2971, 1.442695
        %v3001 = vpow.pop %v3000
        %v3002 = vmul.f32 %v2972, 1.442695
        %v3003 = vpow.pop %v3002
        %v3004 = vmul.f32 %v2973, 1.442695
        %v3005 = vpow.pop %v3004
        %3006 = vadd.xlane.f32.xlu0 %v2975
        %v3007 = vpop.xlane.xlu0 %3006
        %3008 = vadd.xlane.f32.xlu0 %v2977
        %v3009 = vpop.xlane.xlu0 %3008
        %3010 = vadd.xlane.f32.xlu0 %v2979
        %v3011 = vpop.xlane.xlu0 %3010
        %3012 = vadd.xlane.f32.xlu0 %v2981
        %v3013 = vpop.xlane.xlu0 %3012
        %3014 = vadd.xlane.f32.xlu0 %v2983
        %v3015 = vpop.xlane.xlu0 %3014
        %3016 = vadd.xlane.f32.xlu0 %v2985
        %v3017 = vpop.xlane.xlu0 %3016
        %3018 = vadd.xlane.f32.xlu0 %v2987
        %v3019 = vpop.xlane.xlu0 %3018
        %3020 = vadd.xlane.f32.xlu0 %v2989
        %v3021 = vpop.xlane.xlu0 %3020
        %3022 = vadd.xlane.f32.xlu0 %v2991
        %v3023 = vpop.xlane.xlu0 %3022
        %3024 = vadd.xlane.f32.xlu0 %v2993
        %v3025 = vpop.xlane.xlu0 %3024
        %3026 = vadd.xlane.f32.xlu0 %v2995
        %v3027 = vpop.xlane.xlu0 %3026
        %3028 = vadd.xlane.f32.xlu0 %v2997
        %v3029 = vpop.xlane.xlu0 %3028
        %3030 = vadd.xlane.f32.xlu0 %v2999
        %v3031 = vpop.xlane.xlu0 %3030
        %3032 = vadd.xlane.f32.xlu0 %v3001
        %v3033 = vpop.xlane.xlu0 %3032
        %3034 = vadd.xlane.f32.xlu0 %v3003
        %v3035 = vpop.xlane.xlu0 %3034
        %3036 = vadd.xlane.f32.xlu0 %v3005
        %v3037 = vpop.xlane.xlu0 %3036
        %v3038 = vrcp.pop %v3007
        %v3039 = vrcp.pop %v3009
        %v3040 = vrcp.pop %v3011
        %v3041 = vrcp.pop %v3013
        %v3042 = vrcp.pop %v3015
        %v3043 = vrcp.pop %v3017
        %v3044 = vrcp.pop %v3019
        %v3045 = vrcp.pop %v3021
        %v3046 = vrcp.pop %v3023
        %v3047 = vrcp.pop %v3025
        %v3048 = vrcp.pop %v3027
        %v3049 = vrcp.pop %v3029
        %v3050 = vrcp.pop %v3031
        %v3051 = vrcp.pop %v3033
        %v3052 = vrcp.pop %v3035
        %v3053 = vrcp.pop %v3037
        %v3054 = vpack.c.bf16 %v2977, %v2975
        %v3055 = vpack.c.bf16 %v2981, %v2979
        %v3056 = vpack.c.bf16 %v2985, %v2983
        %v3057 = vpack.c.bf16 %v2989, %v2987
        %v3058 = vpack.c.bf16 %v2993, %v2991
        %v3059 = vpack.c.bf16 %v2997, %v2995
        %v3060 = vpack.c.bf16 %v3001, %v2999
        %v3061 = vpack.c.bf16 %v3005, %v3003
        %3062 = vrot.lane.b32.xlu0 %v1701, 32
        %v3063 = vpop.permute.xlu0 %3062
        %3064 = vrot.lane.b32.xlu0 %v1702, 32
        %v3065 = vpop.permute.xlu0 %3064
        %3066 = vrot.lane.b32.xlu0 %v1703, 32
        %v3067 = vpop.permute.xlu0 %3066
        %3068 = vrot.lane.b32.xlu0 %v1704, 32
        %v3069 = vpop.permute.xlu0 %3068
        %3070 = vrot.lane.b32.xlu0 %v1705, 32
        %v3071 = vpop.permute.xlu0 %3070
        %3072 = vrot.lane.b32.xlu0 %v1706, 32
        %v3073 = vpop.permute.xlu0 %3072
        %3074 = vrot.lane.b32.xlu0 %v1707, 32
        %v3075 = vpop.permute.xlu0 %3074
        %3076 = vrot.lane.b32.xlu0 %v1708, 32
        %v3077 = vpop.permute.xlu0 %3076
        %3086 = vmatpush.bf16.msra.mxu0 %v3077
        %3087 = vmatpush.bf16.msra.mxu0 %v3075
        %3088 = vmatpush.bf16.msra.mxu0 %v3073
        %3089 = vmatpush.bf16.msra.mxu0 %v3071
        %3090 = vmatpush.bf16.msra.mxu0 %v3069
        %3091 = vmatpush.bf16.msra.mxu0 %v3067
        %3092 = vmatpush.bf16.msra.mxu0 %v3065
        %3093 = vmatpush.bf16.msra.mxu0 %v3063
        %3094 = vmatmul.bf16.gmra.mxu0 %v3054
        %v3095 = vpop.f32.mrf.mxu0
        %v3096 = vadd.f32 0.0, %v3095
        %v3097 = vpop.f32.mrf.mxu0
        %v3098 = vadd.f32 0.0, %v3097
        %3099 = vmatmul.bf16.gmra.mxu0 %v3055
        %v3100 = vpop.f32.mrf.mxu0
        %v3101 = vadd.f32 0.0, %v3100
        %v3102 = vpop.f32.mrf.mxu0
        %v3103 = vadd.f32 0.0, %v3102
        %3104 = vmatmul.bf16.gmra.mxu0 %v3056
        %v3105 = vpop.f32.mrf.mxu0
        %v3106 = vadd.f32 0.0, %v3105
        %v3107 = vpop.f32.mrf.mxu0
        %v3108 = vadd.f32 0.0, %v3107
        %3109 = vmatmul.bf16.gmra.mxu0 %v3057
        %v3110 = vpop.f32.mrf.mxu0
        %v3111 = vadd.f32 0.0, %v3110
        %v3112 = vpop.f32.mrf.mxu0
        %v3113 = vadd.f32 0.0, %v3112
        %3114 = vmatmul.bf16.gmra.mxu0 %v3058
        %v3115 = vpop.f32.mrf.mxu0
        %v3116 = vadd.f32 0.0, %v3115
        %v3117 = vpop.f32.mrf.mxu0
        %v3118 = vadd.f32 0.0, %v3117
        %3119 = vmatmul.bf16.gmra.mxu0 %v3059
        %v3120 = vpop.f32.mrf.mxu0
        %v3121 = vadd.f32 0.0, %v3120
        %v3122 = vpop.f32.mrf.mxu0
        %v3123 = vadd.f32 0.0, %v3122
        %3124 = vmatmul.bf16.gmra.mxu0 %v3060
        %v3125 = vpop.f32.mrf.mxu0
        %v3126 = vadd.f32 0.0, %v3125
        %v3127 = vpop.f32.mrf.mxu0
        %v3128 = vadd.f32 0.0, %v3127
        %3129 = vmatmul.bf16.gmra.mxu0 %v3061
        %v3130 = vpop.f32.mrf.mxu0
        %v3131 = vadd.f32 0.0, %v3130
        %v3132 = vpop.f32.mrf.mxu0
        %v3133 = vadd.f32 0.0, %v3132
        %3134 = vdwg.mxu0
        %v3135 = vmul.f32 %v3096, %v3038
        %v3136 = vmul.f32 %v3098, %v3039
        %v3137 = vmul.f32 %v3101, %v3040
        %v3138 = vmul.f32 %v3103, %v3041
        %v3139 = vmul.f32 %v3106, %v3042
        %v3140 = vmul.f32 %v3108, %v3043
        %v3141 = vmul.f32 %v3111, %v3044
        %v3142 = vmul.f32 %v3113, %v3045
        %v3143 = vmul.f32 %v3116, %v3046
        %v3144 = vmul.f32 %v3118, %v3047
        %v3145 = vmul.f32 %v3121, %v3048
        %v3146 = vmul.f32 %v3123, %v3049
        %v3147 = vmul.f32 %v3126, %v3050
        %v3148 = vmul.f32 %v3128, %v3051
        %v3149 = vmul.f32 %v3131, %v3052
        %v3150 = vmul.f32 %v3133, %v3053
        %v3151 = vpack.c.bf16 %v3136, %v3135
        %v3152 = vpack.c.bf16 %v3138, %v3137
        %v3153 = vpack.c.bf16 %v3140, %v3139
        %v3154 = vpack.c.bf16 %v3142, %v3141
        %v3155 = vpack.c.bf16 %v3144, %v3143
        %v3156 = vpack.c.bf16 %v3146, %v3145
        %v3157 = vpack.c.bf16 %v3148, %v3147
        %v3158 = vpack.c.bf16 %v3150, %v3149
        %v3159 = vld [vmem:[#allocation10 + $0x30] sm:$0xf]
        %v3160 = vld [vmem:[#allocation10 + $0x34] sm:$0xf]
        %v3161 = vld [vmem:[#allocation10 + $0x38] sm:$0xf]
        %v3162 = vld [vmem:[#allocation10 + $0x3c] sm:$0xf]
        %v3167 = vunpack.c.l.b16 %v3159
        %v3168 = vunpack.c.l.b16 %v3160
        %v3169 = vunpack.c.l.b16 %v3161
        %v3170 = vunpack.c.l.b16 %v3162
        %v3171 = vpack.c.b16 %v3168, %v3167
        %v3172 = vpack.c.b16 %v3170, %v3169
        %v3176 = vsel %vm1435, %v3151, 0
        %v3179 = vsel %vm1435, %v3152, 0
        %v3182 = vsel %vm1435, %v3153, 0
        %v3185 = vsel %vm1435, %v3154, 0
        %v3188 = vsel %vm1435, %v3155, 0
        %v3191 = vsel %vm1435, %v3156, 0
        %v3194 = vsel %vm1435, %v3157, 0
        %v3197 = vsel %vm1435, %v3158, 0
        %3199 = vmatpush.bf16.msra.mxu0 0
        %3200 = vmatpush.bf16.msra.mxu0 0
        %3201 = vmatpush.bf16.msra.mxu0 0
        %3202 = vmatpush.bf16.msra.mxu0 0
        %3203 = vmatpush.bf16.msra.mxu0 0
        %3204 = vmatpush.bf16.msra.mxu0 0
        %3205 = vmatpush.bf16.msra.mxu0 %v3172
        %3206 = vmatpush.bf16.msra.mxu0 %v3171
        %3207 = vmatmul.bf16.gmra.mxu0 %v3176
        %v3208 = vpop.f32.mrf.mxu0
        %v3209 = vadd.f32 0.0, %v3208
        %v3210 = vpop.f32.mrf.mxu0
        %v3211 = vadd.f32 0.0, %v3210
        %3212 = vmatmul.bf16.gmra.mxu0 %v3179
        %v3213 = vpop.f32.mrf.mxu0
        %v3214 = vadd.f32 0.0, %v3213
        %v3215 = vpop.f32.mrf.mxu0
        %v3216 = vadd.f32 0.0, %v3215
        %3217 = vmatmul.bf16.gmra.mxu0 %v3182
        %v3218 = vpop.f32.mrf.mxu0
        %v3219 = vadd.f32 0.0, %v3218
        %v3220 = vpop.f32.mrf.mxu0
        %v3221 = vadd.f32 0.0, %v3220
        %3222 = vmatmul.bf16.gmra.mxu0 %v3185
        %v3223 = vpop.f32.mrf.mxu0
        %v3224 = vadd.f32 0.0, %v3223
        %v3225 = vpop.f32.mrf.mxu0
        %v3226 = vadd.f32 0.0, %v3225
        %3227 = vmatmul.bf16.gmra.mxu0 %v3188
        %v3228 = vpop.f32.mrf.mxu0
        %v3229 = vadd.f32 0.0, %v3228
        %v3230 = vpop.f32.mrf.mxu0
        %v3231 = vadd.f32 0.0, %v3230
        %3232 = vmatmul.bf16.gmra.mxu0 %v3191
        %v3233 = vpop.f32.mrf.mxu0
        %v3234 = vadd.f32 0.0, %v3233
        %v3235 = vpop.f32.mrf.mxu0
        %v3236 = vadd.f32 0.0, %v3235
        %3237 = vmatmul.bf16.gmra.mxu0 %v3194
        %v3238 = vpop.f32.mrf.mxu0
        %v3239 = vadd.f32 0.0, %v3238
        %v3240 = vpop.f32.mrf.mxu0
        %v3241 = vadd.f32 0.0, %v3240
        %3242 = vmatmul.bf16.gmra.mxu0 %v3197
        %v3243 = vpop.f32.mrf.mxu0
        %v3244 = vadd.f32 0.0, %v3243
        %v3245 = vpop.f32.mrf.mxu0
        %v3246 = vadd.f32 0.0, %v3245
        %3247 = vdwg.mxu0
        %v3248 = vadd.f32 %v2781, %v3209
        %v3249 = vadd.f32 %v2782, %v3211
        %v3250 = vadd.f32 %v2783, %v3214
        %v3251 = vadd.f32 %v2784, %v3216
        %v3252 = vadd.f32 %v2785, %v3219
        %v3253 = vadd.f32 %v2786, %v3221
        %v3254 = vadd.f32 %v2787, %v3224
        %v3255 = vadd.f32 %v2788, %v3226
        %v3256 = vadd.f32 %v2789, %v3229
        %v3257 = vadd.f32 %v2790, %v3231
        %v3258 = vadd.f32 %v2791, %v3234
        %v3259 = vadd.f32 %v2792, %v3236
        %v3260 = vadd.f32 %v2793, %v3239
        %v3261 = vadd.f32 %v2794, %v3241
        %v3262 = vadd.f32 %v2795, %v3244
        %v3263 = vadd.f32 %v2796, %v3246
        %v3264 = vadd.f32 %v601, %v3248
        %v3265 = vadd.f32 %v602, %v3249
        %v3266 = vadd.f32 %v603, %v3250
        %v3267 = vadd.f32 %v604, %v3251
        %v3268 = vadd.f32 %v605, %v3252
        %v3269 = vadd.f32 %v606, %v3253
        %v3270 = vadd.f32 %v607, %v3254
        %v3271 = vadd.f32 %v608, %v3255
        %v3272 = vadd.f32 %v609, %v3256
        %v3273 = vadd.f32 %v610, %v3257
        %v3274 = vadd.f32 %v611, %v3258
        %v3275 = vadd.f32 %v612, %v3259
        %v3276 = vadd.f32 %v613, %v3260
        %v3277 = vadd.f32 %v614, %v3261
        %v3278 = vadd.f32 %v615, %v3262
        %v3279 = vadd.f32 %v616, %v3263
        %v3280 = vld [vmem:[#allocation11] sm:$0x1]
        %v3282 = vperm.slane %v3280, 0
        %v3284 = vadd.f32 %v3264, %v3282
        %v3285 = vadd.f32 %v3265, %v3282
        %v3286 = vadd.f32 %v3266, %v3282
        %v3287 = vadd.f32 %v3267, %v3282
        %v3288 = vadd.f32 %v3268, %v3282
        %v3289 = vadd.f32 %v3269, %v3282
        %v3290 = vadd.f32 %v3270, %v3282
        %v3291 = vadd.f32 %v3271, %v3282
        %v3292 = vadd.f32 %v3272, %v3282
        %v3293 = vadd.f32 %v3273, %v3282
        %v3294 = vadd.f32 %v3274, %v3282
        %v3295 = vadd.f32 %v3275, %v3282
        %v3296 = vadd.f32 %v3276, %v3282
        %v3297 = vadd.f32 %v3277, %v3282
        %v3298 = vadd.f32 %v3278, %v3282
        %v3299 = vadd.f32 %v3279, %v3282
        %v3300 = vld [vmem:[#allocation13] sm:$0x1]
        %v3301 = vld [vmem:[#allocation14] sm:$0x1]
        %3302 = vadd.xlane.f32.xlu0 %v3284
        %v3303 = vpop.xlane.xlu0 %3302
        %3304 = vadd.xlane.f32.xlu0 %v3285
        %v3305 = vpop.xlane.xlu0 %3304
        %3306 = vadd.xlane.f32.xlu0 %v3286
        %v3307 = vpop.xlane.xlu0 %3306
        %3308 = vadd.xlane.f32.xlu0 %v3287
        %v3309 = vpop.xlane.xlu0 %3308
        %3310 = vadd.xlane.f32.xlu0 %v3288
        %v3311 = vpop.xlane.xlu0 %3310
        %3312 = vadd.xlane.f32.xlu0 %v3289
        %v3313 = vpop.xlane.xlu0 %3312
        %3314 = vadd.xlane.f32.xlu0 %v3290
        %v3315 = vpop.xlane.xlu0 %3314
        %3316 = vadd.xlane.f32.xlu0 %v3291
        %v3317 = vpop.xlane.xlu0 %3316
        %3318 = vadd.xlane.f32.xlu0 %v3292
        %v3319 = vpop.xlane.xlu0 %3318
        %3320 = vadd.xlane.f32.xlu0 %v3293
        %v3321 = vpop.xlane.xlu0 %3320
        %3322 = vadd.xlane.f32.xlu0 %v3294
        %v3323 = vpop.xlane.xlu0 %3322
        %3324 = vadd.xlane.f32.xlu0 %v3295
        %v3325 = vpop.xlane.xlu0 %3324
        %3326 = vadd.xlane.f32.xlu0 %v3296
        %v3327 = vpop.xlane.xlu0 %3326
        %3328 = vadd.xlane.f32.xlu0 %v3297
        %v3329 = vpop.xlane.xlu0 %3328
        %3330 = vadd.xlane.f32.xlu0 %v3298
        %v3331 = vpop.xlane.xlu0 %3330
        %3332 = vadd.xlane.f32.xlu0 %v3299
        %v3333 = vpop.xlane.xlu0 %3332
        %v3334 = vmul.f32 %v3303, %v657
        %v3335 = vmul.f32 %v3305, %v657
        %v3336 = vmul.f32 %v3307, %v657
        %v3337 = vmul.f32 %v3309, %v657
        %v3338 = vmul.f32 %v3311, %v657
        %v3339 = vmul.f32 %v3313, %v657
        %v3340 = vmul.f32 %v3315, %v657
        %v3341 = vmul.f32 %v3317, %v657
        %v3342 = vmul.f32 %v3319, %v657
        %v3343 = vmul.f32 %v3321, %v657
        %v3344 = vmul.f32 %v3323, %v657
        %v3345 = vmul.f32 %v3325, %v657
        %v3346 = vmul.f32 %v3327, %v657
        %v3347 = vmul.f32 %v3329, %v657
        %v3348 = vmul.f32 %v3331, %v657
        %v3349 = vmul.f32 %v3333, %v657
        %v3350 = vsub.f32 %v3284, %v3334
        %v3351 = vsub.f32 %v3285, %v3335
        %v3352 = vsub.f32 %v3286, %v3336
        %v3353 = vsub.f32 %v3287, %v3337
        %v3354 = vsub.f32 %v3288, %v3338
        %v3355 = vsub.f32 %v3289, %v3339
        %v3356 = vsub.f32 %v3290, %v3340
        %v3357 = vsub.f32 %v3291, %v3341
        %v3358 = vsub.f32 %v3292, %v3342
        %v3359 = vsub.f32 %v3293, %v3343
        %v3360 = vsub.f32 %v3294, %v3344
        %v3361 = vsub.f32 %v3295, %v3345
        %v3362 = vsub.f32 %v3296, %v3346
        %v3363 = vsub.f32 %v3297, %v3347
        %v3364 = vsub.f32 %v3298, %v3348
        %v3365 = vsub.f32 %v3299, %v3349
        %v3366 = vmul.f32 %v3350, %v3350
        %v3367 = vmul.f32 %v3351, %v3351
        %v3368 = vmul.f32 %v3352, %v3352
        %v3369 = vmul.f32 %v3353, %v3353
        %v3370 = vmul.f32 %v3354, %v3354
        %v3371 = vmul.f32 %v3355, %v3355
        %v3372 = vmul.f32 %v3356, %v3356
        %v3373 = vmul.f32 %v3357, %v3357
        %v3374 = vmul.f32 %v3358, %v3358
        %v3375 = vmul.f32 %v3359, %v3359
        %v3376 = vmul.f32 %v3360, %v3360
        %v3377 = vmul.f32 %v3361, %v3361
        %v3378 = vmul.f32 %v3362, %v3362
        %v3379 = vmul.f32 %v3363, %v3363
        %v3380 = vmul.f32 %v3364, %v3364
        %v3381 = vmul.f32 %v3365, %v3365
        %3382 = vadd.xlane.f32.xlu0 %v3366
        %v3383 = vpop.xlane.xlu0 %3382
        %3384 = vadd.xlane.f32.xlu0 %v3367
        %v3385 = vpop.xlane.xlu0 %3384
        %3386 = vadd.xlane.f32.xlu0 %v3368
        %v3387 = vpop.xlane.xlu0 %3386
        %3388 = vadd.xlane.f32.xlu0 %v3369
        %v3389 = vpop.xlane.xlu0 %3388
        %3390 = vadd.xlane.f32.xlu0 %v3370
        %v3391 = vpop.xlane.xlu0 %3390
        %3392 = vadd.xlane.f32.xlu0 %v3371
        %v3393 = vpop.xlane.xlu0 %3392
        %3394 = vadd.xlane.f32.xlu0 %v3372
        %v3395 = vpop.xlane.xlu0 %3394
        %3396 = vadd.xlane.f32.xlu0 %v3373
        %v3397 = vpop.xlane.xlu0 %3396
        %3398 = vadd.xlane.f32.xlu0 %v3374
        %v3399 = vpop.xlane.xlu0 %3398
        %3400 = vadd.xlane.f32.xlu0 %v3375
        %v3401 = vpop.xlane.xlu0 %3400
        %3402 = vadd.xlane.f32.xlu0 %v3376
        %v3403 = vpop.xlane.xlu0 %3402
        %3404 = vadd.xlane.f32.xlu0 %v3377
        %v3405 = vpop.xlane.xlu0 %3404
        %3406 = vadd.xlane.f32.xlu0 %v3378
        %v3407 = vpop.xlane.xlu0 %3406
        %3408 = vadd.xlane.f32.xlu0 %v3379
        %v3409 = vpop.xlane.xlu0 %3408
        %3410 = vadd.xlane.f32.xlu0 %v3380
        %v3411 = vpop.xlane.xlu0 %3410
        %3412 = vadd.xlane.f32.xlu0 %v3381
        %v3413 = vpop.xlane.xlu0 %3412
        %v3414 = vmul.f32 %v3383, %v657
        %v3415 = vmul.f32 %v3385, %v657
        %v3416 = vmul.f32 %v3387, %v657
        %v3417 = vmul.f32 %v3389, %v657
        %v3418 = vmul.f32 %v3391, %v657
        %v3419 = vmul.f32 %v3393, %v657
        %v3420 = vmul.f32 %v3395, %v657
        %v3421 = vmul.f32 %v3397, %v657
        %v3422 = vmul.f32 %v3399, %v657
        %v3423 = vmul.f32 %v3401, %v657
        %v3424 = vmul.f32 %v3403, %v657
        %v3425 = vmul.f32 %v3405, %v657
        %v3426 = vmul.f32 %v3407, %v657
        %v3427 = vmul.f32 %v3409, %v657
        %v3428 = vmul.f32 %v3411, %v657
        %v3429 = vmul.f32 %v3413, %v657
        %v3430 = vadd.f32 %v3414, 1e-06
        %v3431 = vadd.f32 %v3415, 1e-06
        %v3432 = vadd.f32 %v3416, 1e-06
        %v3433 = vadd.f32 %v3417, 1e-06
        %v3434 = vadd.f32 %v3418, 1e-06
        %v3435 = vadd.f32 %v3419, 1e-06
        %v3436 = vadd.f32 %v3420, 1e-06
        %v3437 = vadd.f32 %v3421, 1e-06
        %v3438 = vadd.f32 %v3422, 1e-06
        %v3439 = vadd.f32 %v3423, 1e-06
        %v3440 = vadd.f32 %v3424, 1e-06
        %v3441 = vadd.f32 %v3425, 1e-06
        %v3442 = vadd.f32 %v3426, 1e-06
        %v3443 = vadd.f32 %v3427, 1e-06
        %v3444 = vadd.f32 %v3428, 1e-06
        %v3445 = vadd.f32 %v3429, 1e-06
        %v3446 = vrsqrt.pop %v3430
        %v3447 = vmul.f32 %v3446, %v3430
        %v3448 = vmul.f32 %v3447, %v3446
        %v3449 = vmul.f32 0.5, %v3448
        %v3450 = vsub.f32 1.5, %v3449
        %v3451 = vmul.f32 %v3446, %v3450
        %vm3452 = vweird.f32 %v3430
        %vm3453 = vweird.f32 %v3446
        %vm3454 = vmor %vm3452, %vm3453
        %v3455 = vsel %vm3454, %v3446, %v3451
        %v3456 = vrsqrt.pop %v3431
        %v3457 = vmul.f32 %v3456, %v3431
        %v3458 = vmul.f32 %v3457, %v3456
        %v3459 = vmul.f32 0.5, %v3458
        %v3460 = vsub.f32 1.5, %v3459
        %v3461 = vmul.f32 %v3456, %v3460
        %vm3462 = vweird.f32 %v3431
        %vm3463 = vweird.f32 %v3456
        %vm3464 = vmor %vm3462, %vm3463
        %v3465 = vsel %vm3464, %v3456, %v3461
        %v3466 = vrsqrt.pop %v3432
        %v3467 = vmul.f32 %v3466, %v3432
        %v3468 = vmul.f32 %v3467, %v3466
        %v3469 = vmul.f32 0.5, %v3468
        %v3470 = vsub.f32 1.5, %v3469
        %v3471 = vmul.f32 %v3466, %v3470
        %vm3472 = vweird.f32 %v3432
        %vm3473 = vweird.f32 %v3466
        %vm3474 = vmor %vm3472, %vm3473
        %v3475 = vsel %vm3474, %v3466, %v3471
        %v3476 = vrsqrt.pop %v3433
        %v3477 = vmul.f32 %v3476, %v3433
        %v3478 = vmul.f32 %v3477, %v3476
        %v3479 = vmul.f32 0.5, %v3478
        %v3480 = vsub.f32 1.5, %v3479
        %v3481 = vmul.f32 %v3476, %v3480
        %vm3482 = vweird.f32 %v3433
        %vm3483 = vweird.f32 %v3476
        %vm3484 = vmor %vm3482, %vm3483
        %v3485 = vsel %vm3484, %v3476, %v3481
        %v3486 = vrsqrt.pop %v3434
        %v3487 = vmul.f32 %v3486, %v3434
        %v3488 = vmul.f32 %v3487, %v3486
        %v3489 = vmul.f32 0.5, %v3488
        %v3490 = vsub.f32 1.5, %v3489
        %v3491 = vmul.f32 %v3486, %v3490
        %vm3492 = vweird.f32 %v3434
        %vm3493 = vweird.f32 %v3486
        %vm3494 = vmor %vm3492, %vm3493
        %v3495 = vsel %vm3494, %v3486, %v3491
        %v3496 = vrsqrt.pop %v3435
        %v3497 = vmul.f32 %v3496, %v3435
        %v3498 = vmul.f32 %v3497, %v3496
        %v3499 = vmul.f32 0.5, %v3498
        %v3500 = vsub.f32 1.5, %v3499
        %v3501 = vmul.f32 %v3496, %v3500
        %vm3502 = vweird.f32 %v3435
        %vm3503 = vweird.f32 %v3496
        %vm3504 = vmor %vm3502, %vm3503
        %v3505 = vsel %vm3504, %v3496, %v3501
        %v3506 = vrsqrt.pop %v3436
        %v3507 = vmul.f32 %v3506, %v3436
        %v3508 = vmul.f32 %v3507, %v3506
        %v3509 = vmul.f32 0.5, %v3508
        %v3510 = vsub.f32 1.5, %v3509
        %v3511 = vmul.f32 %v3506, %v3510
        %vm3512 = vweird.f32 %v3436
        %vm3513 = vweird.f32 %v3506
        %vm3514 = vmor %vm3512, %vm3513
        %v3515 = vsel %vm3514, %v3506, %v3511
        %v3516 = vrsqrt.pop %v3437
        %v3517 = vmul.f32 %v3516, %v3437
        %v3518 = vmul.f32 %v3517, %v3516
        %v3519 = vmul.f32 0.5, %v3518
        %v3520 = vsub.f32 1.5, %v3519
        %v3521 = vmul.f32 %v3516, %v3520
        %vm3522 = vweird.f32 %v3437
        %vm3523 = vweird.f32 %v3516
        %vm3524 = vmor %vm3522, %vm3523
        %v3525 = vsel %vm3524, %v3516, %v3521
        %v3526 = vrsqrt.pop %v3438
        %v3527 = vmul.f32 %v3526, %v3438
        %v3528 = vmul.f32 %v3527, %v3526
        %v3529 = vmul.f32 0.5, %v3528
        %v3530 = vsub.f32 1.5, %v3529
        %v3531 = vmul.f32 %v3526, %v3530
        %vm3532 = vweird.f32 %v3438
        %vm3533 = vweird.f32 %v3526
        %vm3534 = vmor %vm3532, %vm3533
        %v3535 = vsel %vm3534, %v3526, %v3531
        %v3536 = vrsqrt.pop %v3439
        %v3537 = vmul.f32 %v3536, %v3439
        %v3538 = vmul.f32 %v3537, %v3536
        %v3539 = vmul.f32 0.5, %v3538
        %v3540 = vsub.f32 1.5, %v3539
        %v3541 = vmul.f32 %v3536, %v3540
        %vm3542 = vweird.f32 %v3439
        %vm3543 = vweird.f32 %v3536
        %vm3544 = vmor %vm3542, %vm3543
        %v3545 = vsel %vm3544, %v3536, %v3541
        %v3546 = vrsqrt.pop %v3440
        %v3547 = vmul.f32 %v3546, %v3440
        %v3548 = vmul.f32 %v3547, %v3546
        %v3549 = vmul.f32 0.5, %v3548
        %v3550 = vsub.f32 1.5, %v3549
        %v3551 = vmul.f32 %v3546, %v3550
        %vm3552 = vweird.f32 %v3440
        %vm3553 = vweird.f32 %v3546
        %vm3554 = vmor %vm3552, %vm3553
        %v3555 = vsel %vm3554, %v3546, %v3551
        %v3556 = vrsqrt.pop %v3441
        %v3557 = vmul.f32 %v3556, %v3441
        %v3558 = vmul.f32 %v3557, %v3556
        %v3559 = vmul.f32 0.5, %v3558
        %v3560 = vsub.f32 1.5, %v3559
        %v3561 = vmul.f32 %v3556, %v3560
        %vm3562 = vweird.f32 %v3441
        %vm3563 = vweird.f32 %v3556
        %vm3564 = vmor %vm3562, %vm3563
        %v3565 = vsel %vm3564, %v3556, %v3561
        %v3566 = vrsqrt.pop %v3442
        %v3567 = vmul.f32 %v3566, %v3442
        %v3568 = vmul.f32 %v3567, %v3566
        %v3569 = vmul.f32 0.5, %v3568
        %v3570 = vsub.f32 1.5, %v3569
        %v3571 = vmul.f32 %v3566, %v3570
        %vm3572 = vweird.f32 %v3442
        %vm3573 = vweird.f32 %v3566
        %vm3574 = vmor %vm3572, %vm3573
        %v3575 = vsel %vm3574, %v3566, %v3571
        %v3576 = vrsqrt.pop %v3443
        %v3577 = vmul.f32 %v3576, %v3443
        %v3578 = vmul.f32 %v3577, %v3576
        %v3579 = vmul.f32 0.5, %v3578
        %v3580 = vsub.f32 1.5, %v3579
        %v3581 = vmul.f32 %v3576, %v3580
        %vm3582 = vweird.f32 %v3443
        %vm3583 = vweird.f32 %v3576
        %vm3584 = vmor %vm3582, %vm3583
        %v3585 = vsel %vm3584, %v3576, %v3581
        %v3586 = vrsqrt.pop %v3444
        %v3587 = vmul.f32 %v3586, %v3444
        %v3588 = vmul.f32 %v3587, %v3586
        %v3589 = vmul.f32 0.5, %v3588
        %v3590 = vsub.f32 1.5, %v3589
        %v3591 = vmul.f32 %v3586, %v3590
        %vm3592 = vweird.f32 %v3444
        %vm3593 = vweird.f32 %v3586
        %vm3594 = vmor %vm3592, %vm3593
        %v3595 = vsel %vm3594, %v3586, %v3591
        %v3596 = vrsqrt.pop %v3445
        %v3597 = vmul.f32 %v3596, %v3445
        %v3598 = vmul.f32 %v3597, %v3596
        %v3599 = vmul.f32 0.5, %v3598
        %v3600 = vsub.f32 1.5, %v3599
        %v3601 = vmul.f32 %v3596, %v3600
        %vm3602 = vweird.f32 %v3445
        %vm3603 = vweird.f32 %v3596
        %vm3604 = vmor %vm3602, %vm3603
        %v3605 = vsel %vm3604, %v3596, %v3601
        %v3606 = vmul.f32 %v3350, %v3455
        %v3607 = vmul.f32 %v3351, %v3465
        %v3608 = vmul.f32 %v3352, %v3475
        %v3609 = vmul.f32 %v3353, %v3485
        %v3610 = vmul.f32 %v3354, %v3495
        %v3611 = vmul.f32 %v3355, %v3505
        %v3612 = vmul.f32 %v3356, %v3515
        %v3613 = vmul.f32 %v3357, %v3525
        %v3614 = vmul.f32 %v3358, %v3535
        %v3615 = vmul.f32 %v3359, %v3545
        %v3616 = vmul.f32 %v3360, %v3555
        %v3617 = vmul.f32 %v3361, %v3565
        %v3618 = vmul.f32 %v3362, %v3575
        %v3619 = vmul.f32 %v3363, %v3585
        %v3620 = vmul.f32 %v3364, %v3595
        %v3621 = vmul.f32 %v3365, %v3605
        %v3623 = vperm.slane %v3300, 0
        %v3625 = vmul.f32 %v3606, %v3623
        %v3626 = vmul.f32 %v3607, %v3623
        %v3627 = vmul.f32 %v3608, %v3623
        %v3628 = vmul.f32 %v3609, %v3623
        %v3629 = vmul.f32 %v3610, %v3623
        %v3630 = vmul.f32 %v3611, %v3623
        %v3631 = vmul.f32 %v3612, %v3623
        %v3632 = vmul.f32 %v3613, %v3623
        %v3633 = vmul.f32 %v3614, %v3623
        %v3634 = vmul.f32 %v3615, %v3623
        %v3635 = vmul.f32 %v3616, %v3623
        %v3636 = vmul.f32 %v3617, %v3623
        %v3637 = vmul.f32 %v3618, %v3623
        %v3638 = vmul.f32 %v3619, %v3623
        %v3639 = vmul.f32 %v3620, %v3623
        %v3640 = vmul.f32 %v3621, %v3623
        %v3642 = vperm.slane %v3301, 0
        %v3644 = vadd.f32 %v3625, %v3642
        %v3645 = vadd.f32 %v3626, %v3642
        %v3646 = vadd.f32 %v3627, %v3642
        %v3647 = vadd.f32 %v3628, %v3642
        %v3648 = vadd.f32 %v3629, %v3642
        %v3649 = vadd.f32 %v3630, %v3642
        %v3650 = vadd.f32 %v3631, %v3642
        %v3651 = vadd.f32 %v3632, %v3642
        %v3652 = vadd.f32 %v3633, %v3642
        %v3653 = vadd.f32 %v3634, %v3642
        %v3654 = vadd.f32 %v3635, %v3642
        %v3655 = vadd.f32 %v3636, %v3642
        %v3656 = vadd.f32 %v3637, %v3642
        %v3657 = vadd.f32 %v3638, %v3642
        %v3658 = vadd.f32 %v3639, %v3642
        %v3659 = vadd.f32 %v3640, %v3642
        %v3660 = vpack.c.bf16 %v3645, %v3644
        %v3661 = vpack.c.bf16 %v3647, %v3646
        %v3662 = vpack.c.bf16 %v3649, %v3648
        %v3663 = vpack.c.bf16 %v3651, %v3650
        %v3664 = vpack.c.bf16 %v3653, %v3652
        %v3665 = vpack.c.bf16 %v3655, %v3654
        %v3666 = vpack.c.bf16 %v3657, %v3656
        %v3667 = vpack.c.bf16 %v3659, %v3658
        %v3668 = vld [vmem:[#allocation16] sm:$0xff]
        %v3669 = vld [vmem:[#allocation16 + $0x8] sm:$0xff]
        %v3670 = vld [vmem:[#allocation16 + $0x10] sm:$0xff]
        %v3671 = vld [vmem:[#allocation16 + $0x18] sm:$0xff]
        %v3672 = vld [vmem:[#allocation16 + $0x20] sm:$0xff]
        %v3673 = vld [vmem:[#allocation16 + $0x28] sm:$0xff]
        %v3674 = vld [vmem:[#allocation16 + $0x30] sm:$0xff]
        %v3675 = vld [vmem:[#allocation16 + $0x38] sm:$0xff]
        %v3676 = vld [vmem:[#allocation16 + $0x40] sm:$0xff]
        %v3677 = vld [vmem:[#allocation16 + $0x48] sm:$0xff]
        %v3678 = vld [vmem:[#allocation16 + $0x50] sm:$0xff]
        %v3679 = vld [vmem:[#allocation16 + $0x58] sm:$0xff]
        %v3680 = vld [vmem:[#allocation16 + $0x60] sm:$0xff]
        %v3681 = vld [vmem:[#allocation16 + $0x68] sm:$0xff]
        %v3682 = vld [vmem:[#allocation16 + $0x70] sm:$0xff]
        %v3683 = vld [vmem:[#allocation16 + $0x78] sm:$0xff]
        %v3684 = vld [vmem:[#allocation16 + $0x80] sm:$0xff]
        %v3685 = vld [vmem:[#allocation16 + $0x88] sm:$0xff]
        %v3686 = vld [vmem:[#allocation16 + $0x90] sm:$0xff]
        %v3687 = vld [vmem:[#allocation16 + $0x98] sm:$0xff]
        %v3688 = vld [vmem:[#allocation16 + $0xa0] sm:$0xff]
        %v3689 = vld [vmem:[#allocation16 + $0xa8] sm:$0xff]
        %v3690 = vld [vmem:[#allocation16 + $0xb0] sm:$0xff]
        %v3691 = vld [vmem:[#allocation16 + $0xb8] sm:$0xff]
        %v3692 = vld [vmem:[#allocation16 + $0xc0] sm:$0xff]
        %v3693 = vld [vmem:[#allocation16 + $0xc8] sm:$0xff]
        %v3694 = vld [vmem:[#allocation16 + $0xd0] sm:$0xff]
        %v3695 = vld [vmem:[#allocation16 + $0xd8] sm:$0xff]
        %v3696 = vld [vmem:[#allocation16 + $0xe0] sm:$0xff]
        %v3697 = vld [vmem:[#allocation16 + $0xe8] sm:$0xff]
        %v3698 = vld [vmem:[#allocation16 + $0xf0] sm:$0xff]
        %v3699 = vld [vmem:[#allocation16 + $0xf8] sm:$0xff]
        %v3700 = vld [vmem:[#allocation16 + $0x100] sm:$0xff]
        %v3701 = vld [vmem:[#allocation16 + $0x108] sm:$0xff]
        %v3702 = vld [vmem:[#allocation16 + $0x110] sm:$0xff]
        %v3703 = vld [vmem:[#allocation16 + $0x118] sm:$0xff]
        %v3704 = vld [vmem:[#allocation16 + $0x120] sm:$0xff]
        %v3705 = vld [vmem:[#allocation16 + $0x128] sm:$0xff]
        %v3706 = vld [vmem:[#allocation16 + $0x130] sm:$0xff]
        %v3707 = vld [vmem:[#allocation16 + $0x138] sm:$0xff]
        %v3708 = vld [vmem:[#allocation16 + $0x140] sm:$0xff]
        %v3709 = vld [vmem:[#allocation16 + $0x148] sm:$0xff]
        %v3710 = vld [vmem:[#allocation16 + $0x150] sm:$0xff]
        %v3711 = vld [vmem:[#allocation16 + $0x158] sm:$0xff]
        %v3712 = vld [vmem:[#allocation16 + $0x160] sm:$0xff]
        %v3713 = vld [vmem:[#allocation16 + $0x168] sm:$0xff]
        %v3714 = vld [vmem:[#allocation16 + $0x170] sm:$0xff]
        %v3715 = vld [vmem:[#allocation16 + $0x178] sm:$0xff]
        %v3716 = vld [vmem:[#allocation16 + $0x180] sm:$0xff]
        %v3717 = vld [vmem:[#allocation16 + $0x188] sm:$0xff]
        %v3718 = vld [vmem:[#allocation16 + $0x190] sm:$0xff]
        %v3719 = vld [vmem:[#allocation16 + $0x198] sm:$0xff]
        %v3720 = vld [vmem:[#allocation16 + $0x1a0] sm:$0xff]
        %v3721 = vld [vmem:[#allocation16 + $0x1a8] sm:$0xff]
        %v3722 = vld [vmem:[#allocation16 + $0x1b0] sm:$0xff]
        %v3723 = vld [vmem:[#allocation16 + $0x1b8] sm:$0xff]
        %v3724 = vld [vmem:[#allocation16 + $0x1c0] sm:$0xff]
        %v3725 = vld [vmem:[#allocation16 + $0x1c8] sm:$0xff]
        %v3726 = vld [vmem:[#allocation16 + $0x1d0] sm:$0xff]
        %v3727 = vld [vmem:[#allocation16 + $0x1d8] sm:$0xff]
        %v3728 = vld [vmem:[#allocation16 + $0x1e0] sm:$0xff]
        %v3729 = vld [vmem:[#allocation16 + $0x1e8] sm:$0xff]
        %v3730 = vld [vmem:[#allocation16 + $0x1f0] sm:$0xff]
        %v3731 = vld [vmem:[#allocation16 + $0x1f8] sm:$0xff]
        %v3732 = vld [vmem:[%s10] sm:$0xff]
        %v3734 = vperm.slane %v3732, 0
        %v3735 = vperm.slane %v3732, 1
        %v3736 = vperm.slane %v3732, 2
        %v3737 = vperm.slane %v3732, 3
        %v3738 = vperm.slane %v3732, 4
        %v3739 = vperm.slane %v3732, 5
        %v3740 = vperm.slane %v3732, 6
        %v3741 = vperm.slane %v3732, 7
        %v3814 = vunpack.c.l.b16 %v3668
        %v3815 = vunpack.c.h.b16 %v3668
        %v3816 = vunpack.c.l.b16 %v3669
        %v3817 = vunpack.c.h.b16 %v3669
        %v3818 = vunpack.c.l.b16 %v3670
        %v3819 = vunpack.c.h.b16 %v3670
        %v3820 = vunpack.c.l.b16 %v3671
        %v3821 = vunpack.c.h.b16 %v3671
        %v3822 = vunpack.c.l.b16 %v3672
        %v3823 = vunpack.c.h.b16 %v3672
        %v3824 = vunpack.c.l.b16 %v3673
        %v3825 = vunpack.c.h.b16 %v3673
        %v3826 = vunpack.c.l.b16 %v3674
        %v3827 = vunpack.c.h.b16 %v3674
        %v3828 = vunpack.c.l.b16 %v3675
        %v3829 = vunpack.c.h.b16 %v3675
        %v3830 = vunpack.c.l.b16 %v3676
        %v3831 = vunpack.c.h.b16 %v3676
        %v3832 = vunpack.c.l.b16 %v3677
        %v3833 = vunpack.c.h.b16 %v3677
        %v3834 = vunpack.c.l.b16 %v3678
        %v3835 = vunpack.c.h.b16 %v3678
        %v3836 = vunpack.c.l.b16 %v3679
        %v3837 = vunpack.c.h.b16 %v3679
        %v3838 = vunpack.c.l.b16 %v3680
        %v3839 = vunpack.c.h.b16 %v3680
        %v3840 = vunpack.c.l.b16 %v3681
        %v3841 = vunpack.c.h.b16 %v3681
        %v3842 = vunpack.c.l.b16 %v3682
        %v3843 = vunpack.c.h.b16 %v3682
        %v3844 = vunpack.c.l.b16 %v3683
        %v3845 = vunpack.c.h.b16 %v3683
        %v3846 = vunpack.c.l.b16 %v3684
        %v3847 = vunpack.c.h.b16 %v3684
        %v3848 = vunpack.c.l.b16 %v3685
        %v3849 = vunpack.c.h.b16 %v3685
        %v3850 = vunpack.c.l.b16 %v3686
        %v3851 = vunpack.c.h.b16 %v3686
        %v3852 = vunpack.c.l.b16 %v3687
        %v3853 = vunpack.c.h.b16 %v3687
        %v3854 = vunpack.c.l.b16 %v3688
        %v3855 = vunpack.c.h.b16 %v3688
        %v3856 = vunpack.c.l.b16 %v3689
        %v3857 = vunpack.c.h.b16 %v3689
        %v3858 = vunpack.c.l.b16 %v3690
        %v3859 = vunpack.c.h.b16 %v3690
        %v3860 = vunpack.c.l.b16 %v3691
        %v3861 = vunpack.c.h.b16 %v3691
        %v3862 = vunpack.c.l.b16 %v3692
        %v3863 = vunpack.c.h.b16 %v3692
        %v3864 = vunpack.c.l.b16 %v3693
        %v3865 = vunpack.c.h.b16 %v3693
        %v3866 = vunpack.c.l.b16 %v3694
        %v3867 = vunpack.c.h.b16 %v3694
        %v3868 = vunpack.c.l.b16 %v3695
        %v3869 = vunpack.c.h.b16 %v3695
        %v3870 = vunpack.c.l.b16 %v3696
        %v3871 = vunpack.c.h.b16 %v3696
        %v3872 = vunpack.c.l.b16 %v3697
        %v3873 = vunpack.c.h.b16 %v3697
        %v3874 = vunpack.c.l.b16 %v3698
        %v3875 = vunpack.c.h.b16 %v3698
        %v3876 = vunpack.c.l.b16 %v3699
        %v3877 = vunpack.c.h.b16 %v3699
        %v3878 = vunpack.c.l.b16 %v3700
        %v3879 = vunpack.c.h.b16 %v3700
        %v3880 = vunpack.c.l.b16 %v3701
        %v3881 = vunpack.c.h.b16 %v3701
        %v3882 = vunpack.c.l.b16 %v3702
        %v3883 = vunpack.c.h.b16 %v3702
        %v3884 = vunpack.c.l.b16 %v3703
        %v3885 = vunpack.c.h.b16 %v3703
        %v3886 = vunpack.c.l.b16 %v3704
        %v3887 = vunpack.c.h.b16 %v3704
        %v3888 = vunpack.c.l.b16 %v3705
        %v3889 = vunpack.c.h.b16 %v3705
        %v3890 = vunpack.c.l.b16 %v3706
        %v3891 = vunpack.c.h.b16 %v3706
        %v3892 = vunpack.c.l.b16 %v3707
        %v3893 = vunpack.c.h.b16 %v3707
        %v3894 = vunpack.c.l.b16 %v3708
        %v3895 = vunpack.c.h.b16 %v3708
        %v3896 = vunpack.c.l.b16 %v3709
        %v3897 = vunpack.c.h.b16 %v3709
        %v3898 = vunpack.c.l.b16 %v3710
        %v3899 = vunpack.c.h.b16 %v3710
        %v3900 = vunpack.c.l.b16 %v3711
        %v3901 = vunpack.c.h.b16 %v3711
        %v3902 = vunpack.c.l.b16 %v3712
        %v3903 = vunpack.c.h.b16 %v3712
        %v3904 = vunpack.c.l.b16 %v3713
        %v3905 = vunpack.c.h.b16 %v3713
        %v3906 = vunpack.c.l.b16 %v3714
        %v3907 = vunpack.c.h.b16 %v3714
        %v3908 = vunpack.c.l.b16 %v3715
        %v3909 = vunpack.c.h.b16 %v3715
        %v3910 = vunpack.c.l.b16 %v3716
        %v3911 = vunpack.c.h.b16 %v3716
        %v3912 = vunpack.c.l.b16 %v3717
        %v3913 = vunpack.c.h.b16 %v3717
        %v3914 = vunpack.c.l.b16 %v3718
        %v3915 = vunpack.c.h.b16 %v3718
        %v3916 = vunpack.c.l.b16 %v3719
        %v3917 = vunpack.c.h.b16 %v3719
        %v3918 = vunpack.c.l.b16 %v3720
        %v3919 = vunpack.c.h.b16 %v3720
        %v3920 = vunpack.c.l.b16 %v3721
        %v3921 = vunpack.c.h.b16 %v3721
        %v3922 = vunpack.c.l.b16 %v3722
        %v3923 = vunpack.c.h.b16 %v3722
        %v3924 = vunpack.c.l.b16 %v3723
        %v3925 = vunpack.c.h.b16 %v3723
        %v3926 = vunpack.c.l.b16 %v3724
        %v3927 = vunpack.c.h.b16 %v3724
        %v3928 = vunpack.c.l.b16 %v3725
        %v3929 = vunpack.c.h.b16 %v3725
        %v3930 = vunpack.c.l.b16 %v3726
        %v3931 = vunpack.c.h.b16 %v3726
        %v3932 = vunpack.c.l.b16 %v3727
        %v3933 = vunpack.c.h.b16 %v3727
        %v3934 = vunpack.c.l.b16 %v3728
        %v3935 = vunpack.c.h.b16 %v3728
        %v3936 = vunpack.c.l.b16 %v3729
        %v3937 = vunpack.c.h.b16 %v3729
        %v3938 = vunpack.c.l.b16 %v3730
        %v3939 = vunpack.c.h.b16 %v3730
        %v3940 = vunpack.c.l.b16 %v3731
        %v3941 = vunpack.c.h.b16 %v3731
        %v3942 = vpack.c.b16 %v3822, %v3814
        %v3943 = vpack.c.b16 %v3823, %v3815
        %v3944 = vpack.c.b16 %v3824, %v3816
        %v3945 = vpack.c.b16 %v3825, %v3817
        %v3946 = vpack.c.b16 %v3826, %v3818
        %v3947 = vpack.c.b16 %v3827, %v3819
        %v3948 = vpack.c.b16 %v3828, %v3820
        %v3949 = vpack.c.b16 %v3829, %v3821
        %v3950 = vpack.c.b16 %v3838, %v3830
        %v3951 = vpack.c.b16 %v3839, %v3831
        %v3952 = vpack.c.b16 %v3840, %v3832
        %v3953 = vpack.c.b16 %v3841, %v3833
        %v3954 = vpack.c.b16 %v3842, %v3834
        %v3955 = vpack.c.b16 %v3843, %v3835
        %v3956 = vpack.c.b16 %v3844, %v3836
        %v3957 = vpack.c.b16 %v3845, %v3837
        %v3958 = vpack.c.b16 %v3854, %v3846
        %v3959 = vpack.c.b16 %v3855, %v3847
        %v3960 = vpack.c.b16 %v3856, %v3848
        %v3961 = vpack.c.b16 %v3857, %v3849
        %v3962 = vpack.c.b16 %v3858, %v3850
        %v3963 = vpack.c.b16 %v3859, %v3851
        %v3964 = vpack.c.b16 %v3860, %v3852
        %v3965 = vpack.c.b16 %v3861, %v3853
        %v3966 = vpack.c.b16 %v3870, %v3862
        %v3967 = vpack.c.b16 %v3871, %v3863
        %v3968 = vpack.c.b16 %v3872, %v3864
        %v3969 = vpack.c.b16 %v3873, %v3865
        %v3970 = vpack.c.b16 %v3874, %v3866
        %v3971 = vpack.c.b16 %v3875, %v3867
        %v3972 = vpack.c.b16 %v3876, %v3868
        %v3973 = vpack.c.b16 %v3877, %v3869
        %v3974 = vpack.c.b16 %v3886, %v3878
        %v3975 = vpack.c.b16 %v3887, %v3879
        %v3976 = vpack.c.b16 %v3888, %v3880
        %v3977 = vpack.c.b16 %v3889, %v3881
        %v3978 = vpack.c.b16 %v3890, %v3882
        %v3979 = vpack.c.b16 %v3891, %v3883
        %v3980 = vpack.c.b16 %v3892, %v3884
        %v3981 = vpack.c.b16 %v3893, %v3885
        %v3982 = vpack.c.b16 %v3902, %v3894
        %v3983 = vpack.c.b16 %v3903, %v3895
        %v3984 = vpack.c.b16 %v3904, %v3896
        %v3985 = vpack.c.b16 %v3905, %v3897
        %v3986 = vpack.c.b16 %v3906, %v3898
        %v3987 = vpack.c.b16 %v3907, %v3899
        %v3988 = vpack.c.b16 %v3908, %v3900
        %v3989 = vpack.c.b16 %v3909, %v3901
        %v3990 = vpack.c.b16 %v3918, %v3910
        %v3991 = vpack.c.b16 %v3919, %v3911
        %v3992 = vpack.c.b16 %v3920, %v3912
        %v3993 = vpack.c.b16 %v3921, %v3913
        %v3994 = vpack.c.b16 %v3922, %v3914
        %v3995 = vpack.c.b16 %v3923, %v3915
        %v3996 = vpack.c.b16 %v3924, %v3916
        %v3997 = vpack.c.b16 %v3925, %v3917
        %v3998 = vpack.c.b16 %v3934, %v3926
        %v3999 = vpack.c.b16 %v3935, %v3927
        %v4000 = vpack.c.b16 %v3936, %v3928
        %v4001 = vpack.c.b16 %v3937, %v3929
        %v4002 = vpack.c.b16 %v3938, %v3930
        %v4003 = vpack.c.b16 %v3939, %v3931
        %v4004 = vpack.c.b16 %v3940, %v3932
        %v4005 = vpack.c.b16 %v3941, %v3933
        %4070 = vmatpush.bf16.msra.mxu0 %v3998
        %4071 = vmatpush.bf16.msra.mxu0 %v3990
        %4072 = vmatpush.bf16.msra.mxu0 %v3982
        %4073 = vmatpush.bf16.msra.mxu0 %v3974
        %4074 = vmatpush.bf16.msra.mxu0 %v3966
        %4075 = vmatpush.bf16.msra.mxu0 %v3958
        %4076 = vmatpush.bf16.msra.mxu0 %v3950
        %4077 = vmatpush.bf16.msra.mxu0 %v3942
        %4078 = vmatmul.bf16.gmra.mxu0 %v3660
        %v4079 = vpop.f32.mrf.mxu0
        %v4080 = vadd.f32 %v3734, %v4079
        %v4081 = vpop.f32.mrf.mxu0
        %v4082 = vadd.f32 %v3734, %v4081
        %4083 = vmatmul.bf16.gmra.mxu0 %v3661
        %v4084 = vpop.f32.mrf.mxu0
        %v4085 = vadd.f32 %v3734, %v4084
        %v4086 = vpop.f32.mrf.mxu0
        %v4087 = vadd.f32 %v3734, %v4086
        %4088 = vmatmul.bf16.gmra.mxu0 %v3662
        %v4089 = vpop.f32.mrf.mxu0
        %v4090 = vadd.f32 %v3734, %v4089
        %v4091 = vpop.f32.mrf.mxu0
        %v4092 = vadd.f32 %v3734, %v4091
        %4093 = vmatmul.bf16.gmra.mxu0 %v3663
        %v4094 = vpop.f32.mrf.mxu0
        %v4095 = vadd.f32 %v3734, %v4094
        %v4096 = vpop.f32.mrf.mxu0
        %v4097 = vadd.f32 %v3734, %v4096
        %4098 = vmatmul.bf16.gmra.mxu0 %v3664
        %v4099 = vpop.f32.mrf.mxu0
        %v4100 = vadd.f32 %v3734, %v4099
        %v4101 = vpop.f32.mrf.mxu0
        %v4102 = vadd.f32 %v3734, %v4101
        %4103 = vmatmul.bf16.gmra.mxu0 %v3665
        %v4104 = vpop.f32.mrf.mxu0
        %v4105 = vadd.f32 %v3734, %v4104
        %v4106 = vpop.f32.mrf.mxu0
        %v4107 = vadd.f32 %v3734, %v4106
        %4108 = vmatmul.bf16.gmra.mxu0 %v3666
        %v4109 = vpop.f32.mrf.mxu0
        %v4110 = vadd.f32 %v3734, %v4109
        %v4111 = vpop.f32.mrf.mxu0
        %v4112 = vadd.f32 %v3734, %v4111
        %4113 = vmatmul.bf16.gmra.mxu0 %v3667
        %v4114 = vpop.f32.mrf.mxu0
        %v4115 = vadd.f32 %v3734, %v4114
        %v4116 = vpop.f32.mrf.mxu0
        %v4117 = vadd.f32 %v3734, %v4116
        %4118 = vdwg.mxu0
        %4119 = vmatpush.bf16.msra.mxu0 %v3999
        %4120 = vmatpush.bf16.msra.mxu0 %v3991
        %4121 = vmatpush.bf16.msra.mxu0 %v3983
        %4122 = vmatpush.bf16.msra.mxu0 %v3975
        %4123 = vmatpush.bf16.msra.mxu0 %v3967
        %4124 = vmatpush.bf16.msra.mxu0 %v3959
        %4125 = vmatpush.bf16.msra.mxu0 %v3951
        %4126 = vmatpush.bf16.msra.mxu0 %v3943
        %4127 = vmatmul.bf16.gmra.mxu0 %v3660
        %v4128 = vpop.f32.mrf.mxu0
        %v4129 = vadd.f32 %v3735, %v4128
        %v4130 = vpop.f32.mrf.mxu0
        %v4131 = vadd.f32 %v3735, %v4130
        %4132 = vmatmul.bf16.gmra.mxu0 %v3661
        %v4133 = vpop.f32.mrf.mxu0
        %v4134 = vadd.f32 %v3735, %v4133
        %v4135 = vpop.f32.mrf.mxu0
        %v4136 = vadd.f32 %v3735, %v4135
        %4137 = vmatmul.bf16.gmra.mxu0 %v3662
        %v4138 = vpop.f32.mrf.mxu0
        %v4139 = vadd.f32 %v3735, %v4138
        %v4140 = vpop.f32.mrf.mxu0
        %v4141 = vadd.f32 %v3735, %v4140
        %4142 = vmatmul.bf16.gmra.mxu0 %v3663
        %v4143 = vpop.f32.mrf.mxu0
        %v4144 = vadd.f32 %v3735, %v4143
        %v4145 = vpop.f32.mrf.mxu0
        %v4146 = vadd.f32 %v3735, %v4145
        %4147 = vmatmul.bf16.gmra.mxu0 %v3664
        %v4148 = vpop.f32.mrf.mxu0
        %v4149 = vadd.f32 %v3735, %v4148
        %v4150 = vpop.f32.mrf.mxu0
        %v4151 = vadd.f32 %v3735, %v4150
        %4152 = vmatmul.bf16.gmra.mxu0 %v3665
        %v4153 = vpop.f32.mrf.mxu0
        %v4154 = vadd.f32 %v3735, %v4153
        %v4155 = vpop.f32.mrf.mxu0
        %v4156 = vadd.f32 %v3735, %v4155
        %4157 = vmatmul.bf16.gmra.mxu0 %v3666
        %v4158 = vpop.f32.mrf.mxu0
        %v4159 = vadd.f32 %v3735, %v4158
        %v4160 = vpop.f32.mrf.mxu0
        %v4161 = vadd.f32 %v3735, %v4160
        %4162 = vmatmul.bf16.gmra.mxu0 %v3667
        %v4163 = vpop.f32.mrf.mxu0
        %v4164 = vadd.f32 %v3735, %v4163
        %v4165 = vpop.f32.mrf.mxu0
        %v4166 = vadd.f32 %v3735, %v4165
        %4167 = vdwg.mxu0
        %4168 = vmatpush.bf16.msra.mxu0 %v4000
        %4169 = vmatpush.bf16.msra.mxu0 %v3992
        %4170 = vmatpush.bf16.msra.mxu0 %v3984
        %4171 = vmatpush.bf16.msra.mxu0 %v3976
        %4172 = vmatpush.bf16.msra.mxu0 %v3968
        %4173 = vmatpush.bf16.msra.mxu0 %v3960
        %4174 = vmatpush.bf16.msra.mxu0 %v3952
        %4175 = vmatpush.bf16.msra.mxu0 %v3944
        %4176 = vmatmul.bf16.gmra.mxu0 %v3660
        %v4177 = vpop.f32.mrf.mxu0
        %v4178 = vadd.f32 %v3736, %v4177
        %v4179 = vpop.f32.mrf.mxu0
        %v4180 = vadd.f32 %v3736, %v4179
        %4181 = vmatmul.bf16.gmra.mxu0 %v3661
        %v4182 = vpop.f32.mrf.mxu0
        %v4183 = vadd.f32 %v3736, %v4182
        %v4184 = vpop.f32.mrf.mxu0
        %v4185 = vadd.f32 %v3736, %v4184
        %4186 = vmatmul.bf16.gmra.mxu0 %v3662
        %v4187 = vpop.f32.mrf.mxu0
        %v4188 = vadd.f32 %v3736, %v4187
        %v4189 = vpop.f32.mrf.mxu0
        %v4190 = vadd.f32 %v3736, %v4189
        %4191 = vmatmul.bf16.gmra.mxu0 %v3663
        %v4192 = vpop.f32.mrf.mxu0
        %v4193 = vadd.f32 %v3736, %v4192
        %v4194 = vpop.f32.mrf.mxu0
        %v4195 = vadd.f32 %v3736, %v4194
        %4196 = vmatmul.bf16.gmra.mxu0 %v3664
        %v4197 = vpop.f32.mrf.mxu0
        %v4198 = vadd.f32 %v3736, %v4197
        %v4199 = vpop.f32.mrf.mxu0
        %v4200 = vadd.f32 %v3736, %v4199
        %4201 = vmatmul.bf16.gmra.mxu0 %v3665
        %v4202 = vpop.f32.mrf.mxu0
        %v4203 = vadd.f32 %v3736, %v4202
        %v4204 = vpop.f32.mrf.mxu0
        %v4205 = vadd.f32 %v3736, %v4204
        %4206 = vmatmul.bf16.gmra.mxu0 %v3666
        %v4207 = vpop.f32.mrf.mxu0
        %v4208 = vadd.f32 %v3736, %v4207
        %v4209 = vpop.f32.mrf.mxu0
        %v4210 = vadd.f32 %v3736, %v4209
        %4211 = vmatmul.bf16.gmra.mxu0 %v3667
        %v4212 = vpop.f32.mrf.mxu0
        %v4213 = vadd.f32 %v3736, %v4212
        %v4214 = vpop.f32.mrf.mxu0
        %v4215 = vadd.f32 %v3736, %v4214
        %4216 = vdwg.mxu0
        %4217 = vmatpush.bf16.msra.mxu0 %v4001
        %4218 = vmatpush.bf16.msra.mxu0 %v3993
        %4219 = vmatpush.bf16.msra.mxu0 %v3985
        %4220 = vmatpush.bf16.msra.mxu0 %v3977
        %4221 = vmatpush.bf16.msra.mxu0 %v3969
        %4222 = vmatpush.bf16.msra.mxu0 %v3961
        %4223 = vmatpush.bf16.msra.mxu0 %v3953
        %4224 = vmatpush.bf16.msra.mxu0 %v3945
        %4225 = vmatmul.bf16.gmra.mxu0 %v3660
        %v4226 = vpop.f32.mrf.mxu0
        %v4227 = vadd.f32 %v3737, %v4226
        %v4228 = vpop.f32.mrf.mxu0
        %v4229 = vadd.f32 %v3737, %v4228
        %4230 = vmatmul.bf16.gmra.mxu0 %v3661
        %v4231 = vpop.f32.mrf.mxu0
        %v4232 = vadd.f32 %v3737, %v4231
        %v4233 = vpop.f32.mrf.mxu0
        %v4234 = vadd.f32 %v3737, %v4233
        %4235 = vmatmul.bf16.gmra.mxu0 %v3662
        %v4236 = vpop.f32.mrf.mxu0
        %v4237 = vadd.f32 %v3737, %v4236
        %v4238 = vpop.f32.mrf.mxu0
        %v4239 = vadd.f32 %v3737, %v4238
        %4240 = vmatmul.bf16.gmra.mxu0 %v3663
        %v4241 = vpop.f32.mrf.mxu0
        %v4242 = vadd.f32 %v3737, %v4241
        %v4243 = vpop.f32.mrf.mxu0
        %v4244 = vadd.f32 %v3737, %v4243
        %4245 = vmatmul.bf16.gmra.mxu0 %v3664
        %v4246 = vpop.f32.mrf.mxu0
        %v4247 = vadd.f32 %v3737, %v4246
        %v4248 = vpop.f32.mrf.mxu0
        %v4249 = vadd.f32 %v3737, %v4248
        %4250 = vmatmul.bf16.gmra.mxu0 %v3665
        %v4251 = vpop.f32.mrf.mxu0
        %v4252 = vadd.f32 %v3737, %v4251
        %v4253 = vpop.f32.mrf.mxu0
        %v4254 = vadd.f32 %v3737, %v4253
        %4255 = vmatmul.bf16.gmra.mxu0 %v3666
        %v4256 = vpop.f32.mrf.mxu0
        %v4257 = vadd.f32 %v3737, %v4256
        %v4258 = vpop.f32.mrf.mxu0
        %v4259 = vadd.f32 %v3737, %v4258
        %4260 = vmatmul.bf16.gmra.mxu0 %v3667
        %v4261 = vpop.f32.mrf.mxu0
        %v4262 = vadd.f32 %v3737, %v4261
        %v4263 = vpop.f32.mrf.mxu0
        %v4264 = vadd.f32 %v3737, %v4263
        %4265 = vdwg.mxu0
        %4266 = vmatpush.bf16.msra.mxu0 %v4002
        %4267 = vmatpush.bf16.msra.mxu0 %v3994
        %4268 = vmatpush.bf16.msra.mxu0 %v3986
        %4269 = vmatpush.bf16.msra.mxu0 %v3978
        %4270 = vmatpush.bf16.msra.mxu0 %v3970
        %4271 = vmatpush.bf16.msra.mxu0 %v3962
        %4272 = vmatpush.bf16.msra.mxu0 %v3954
        %4273 = vmatpush.bf16.msra.mxu0 %v3946
        %4274 = vmatmul.bf16.gmra.mxu0 %v3660
        %v4275 = vpop.f32.mrf.mxu0
        %v4276 = vadd.f32 %v3738, %v4275
        %v4277 = vpop.f32.mrf.mxu0
        %v4278 = vadd.f32 %v3738, %v4277
        %4279 = vmatmul.bf16.gmra.mxu0 %v3661
        %v4280 = vpop.f32.mrf.mxu0
        %v4281 = vadd.f32 %v3738, %v4280
        %v4282 = vpop.f32.mrf.mxu0
        %v4283 = vadd.f32 %v3738, %v4282
        %4284 = vmatmul.bf16.gmra.mxu0 %v3662
        %v4285 = vpop.f32.mrf.mxu0
        %v4286 = vadd.f32 %v3738, %v4285
        %v4287 = vpop.f32.mrf.mxu0
        %v4288 = vadd.f32 %v3738, %v4287
        %4289 = vmatmul.bf16.gmra.mxu0 %v3663
        %v4290 = vpop.f32.mrf.mxu0
        %v4291 = vadd.f32 %v3738, %v4290
        %v4292 = vpop.f32.mrf.mxu0
        %v4293 = vadd.f32 %v3738, %v4292
        %4294 = vmatmul.bf16.gmra.mxu0 %v3664
        %v4295 = vpop.f32.mrf.mxu0
        %v4296 = vadd.f32 %v3738, %v4295
        %v4297 = vpop.f32.mrf.mxu0
        %v4298 = vadd.f32 %v3738, %v4297
        %4299 = vmatmul.bf16.gmra.mxu0 %v3665
        %v4300 = vpop.f32.mrf.mxu0
        %v4301 = vadd.f32 %v3738, %v4300
        %v4302 = vpop.f32.mrf.mxu0
        %v4303 = vadd.f32 %v3738, %v4302
        %4304 = vmatmul.bf16.gmra.mxu0 %v3666
        %v4305 = vpop.f32.mrf.mxu0
        %v4306 = vadd.f32 %v3738, %v4305
        %v4307 = vpop.f32.mrf.mxu0
        %v4308 = vadd.f32 %v3738, %v4307
        %4309 = vmatmul.bf16.gmra.mxu0 %v3667
        %v4310 = vpop.f32.mrf.mxu0
        %v4311 = vadd.f32 %v3738, %v4310
        %v4312 = vpop.f32.mrf.mxu0
        %v4313 = vadd.f32 %v3738, %v4312
        %4314 = vdwg.mxu0
        %4315 = vmatpush.bf16.msra.mxu0 %v4003
        %4316 = vmatpush.bf16.msra.mxu0 %v3995
        %4317 = vmatpush.bf16.msra.mxu0 %v3987
        %4318 = vmatpush.bf16.msra.mxu0 %v3979
        %4319 = vmatpush.bf16.msra.mxu0 %v3971
        %4320 = vmatpush.bf16.msra.mxu0 %v3963
        %4321 = vmatpush.bf16.msra.mxu0 %v3955
        %4322 = vmatpush.bf16.msra.mxu0 %v3947
        %4323 = vmatmul.bf16.gmra.mxu0 %v3660
        %v4324 = vpop.f32.mrf.mxu0
        %v4325 = vadd.f32 %v3739, %v4324
        %v4326 = vpop.f32.mrf.mxu0
        %v4327 = vadd.f32 %v3739, %v4326
        %4328 = vmatmul.bf16.gmra.mxu0 %v3661
        %v4329 = vpop.f32.mrf.mxu0
        %v4330 = vadd.f32 %v3739, %v4329
        %v4331 = vpop.f32.mrf.mxu0
        %v4332 = vadd.f32 %v3739, %v4331
        %4333 = vmatmul.bf16.gmra.mxu0 %v3662
        %v4334 = vpop.f32.mrf.mxu0
        %v4335 = vadd.f32 %v3739, %v4334
        %v4336 = vpop.f32.mrf.mxu0
        %v4337 = vadd.f32 %v3739, %v4336
        %4338 = vmatmul.bf16.gmra.mxu0 %v3663
        %v4339 = vpop.f32.mrf.mxu0
        %v4340 = vadd.f32 %v3739, %v4339
        %v4341 = vpop.f32.mrf.mxu0
        %v4342 = vadd.f32 %v3739, %v4341
        %4343 = vmatmul.bf16.gmra.mxu0 %v3664
        %v4344 = vpop.f32.mrf.mxu0
        %v4345 = vadd.f32 %v3739, %v4344
        %v4346 = vpop.f32.mrf.mxu0
        %v4347 = vadd.f32 %v3739, %v4346
        %4348 = vmatmul.bf16.gmra.mxu0 %v3665
        %v4349 = vpop.f32.mrf.mxu0
        %v4350 = vadd.f32 %v3739, %v4349
        %v4351 = vpop.f32.mrf.mxu0
        %v4352 = vadd.f32 %v3739, %v4351
        %4353 = vmatmul.bf16.gmra.mxu0 %v3666
        %v4354 = vpop.f32.mrf.mxu0
        %v4355 = vadd.f32 %v3739, %v4354
        %v4356 = vpop.f32.mrf.mxu0
        %v4357 = vadd.f32 %v3739, %v4356
        %4358 = vmatmul.bf16.gmra.mxu0 %v3667
        %v4359 = vpop.f32.mrf.mxu0
        %v4360 = vadd.f32 %v3739, %v4359
        %v4361 = vpop.f32.mrf.mxu0
        %v4362 = vadd.f32 %v3739, %v4361
        %4363 = vdwg.mxu0
        %4364 = vmatpush.bf16.msra.mxu0 %v4004
        %4365 = vmatpush.bf16.msra.mxu0 %v3996
        %4366 = vmatpush.bf16.msra.mxu0 %v3988
        %4367 = vmatpush.bf16.msra.mxu0 %v3980
        %4368 = vmatpush.bf16.msra.mxu0 %v3972
        %4369 = vmatpush.bf16.msra.mxu0 %v3964
        %4370 = vmatpush.bf16.msra.mxu0 %v3956
        %4371 = vmatpush.bf16.msra.mxu0 %v3948
        %4372 = vmatmul.bf16.gmra.mxu0 %v3660
        %v4373 = vpop.f32.mrf.mxu0
        %v4374 = vadd.f32 %v3740, %v4373
        %v4375 = vpop.f32.mrf.mxu0
        %v4376 = vadd.f32 %v3740, %v4375
        %4377 = vmatmul.bf16.gmra.mxu0 %v3661
        %v4378 = vpop.f32.mrf.mxu0
        %v4379 = vadd.f32 %v3740, %v4378
        %v4380 = vpop.f32.mrf.mxu0
        %v4381 = vadd.f32 %v3740, %v4380
        %4382 = vmatmul.bf16.gmra.mxu0 %v3662
        %v4383 = vpop.f32.mrf.mxu0
        %v4384 = vadd.f32 %v3740, %v4383
        %v4385 = vpop.f32.mrf.mxu0
        %v4386 = vadd.f32 %v3740, %v4385
        %4387 = vmatmul.bf16.gmra.mxu0 %v3663
        %v4388 = vpop.f32.mrf.mxu0
        %v4389 = vadd.f32 %v3740, %v4388
        %v4390 = vpop.f32.mrf.mxu0
        %v4391 = vadd.f32 %v3740, %v4390
        %4392 = vmatmul.bf16.gmra.mxu0 %v3664
        %v4393 = vpop.f32.mrf.mxu0
        %v4394 = vadd.f32 %v3740, %v4393
        %v4395 = vpop.f32.mrf.mxu0
        %v4396 = vadd.f32 %v3740, %v4395
        %4397 = vmatmul.bf16.gmra.mxu0 %v3665
        %v4398 = vpop.f32.mrf.mxu0
        %v4399 = vadd.f32 %v3740, %v4398
        %v4400 = vpop.f32.mrf.mxu0
        %v4401 = vadd.f32 %v3740, %v4400
        %4402 = vmatmul.bf16.gmra.mxu0 %v3666
        %v4403 = vpop.f32.mrf.mxu0
        %v4404 = vadd.f32 %v3740, %v4403
        %v4405 = vpop.f32.mrf.mxu0
        %v4406 = vadd.f32 %v3740, %v4405
        %4407 = vmatmul.bf16.gmra.mxu0 %v3667
        %v4408 = vpop.f32.mrf.mxu0
        %v4409 = vadd.f32 %v3740, %v4408
        %v4410 = vpop.f32.mrf.mxu0
        %v4411 = vadd.f32 %v3740, %v4410
        %4412 = vdwg.mxu0
        %4413 = vmatpush.bf16.msra.mxu0 %v4005
        %4414 = vmatpush.bf16.msra.mxu0 %v3997
        %4415 = vmatpush.bf16.msra.mxu0 %v3989
        %4416 = vmatpush.bf16.msra.mxu0 %v3981
        %4417 = vmatpush.bf16.msra.mxu0 %v3973
        %4418 = vmatpush.bf16.msra.mxu0 %v3965
        %4419 = vmatpush.bf16.msra.mxu0 %v3957
        %4420 = vmatpush.bf16.msra.mxu0 %v3949
        %4421 = vmatmul.bf16.gmra.mxu0 %v3660
        %v4422 = vpop.f32.mrf.mxu0
        %v4423 = vadd.f32 %v3741, %v4422
        %v4424 = vpop.f32.mrf.mxu0
        %v4425 = vadd.f32 %v3741, %v4424
        %4426 = vmatmul.bf16.gmra.mxu0 %v3661
        %v4427 = vpop.f32.mrf.mxu0
        %v4428 = vadd.f32 %v3741, %v4427
        %v4429 = vpop.f32.mrf.mxu0
        %v4430 = vadd.f32 %v3741, %v4429
        %4431 = vmatmul.bf16.gmra.mxu0 %v3662
        %v4432 = vpop.f32.mrf.mxu0
        %v4433 = vadd.f32 %v3741, %v4432
        %v4434 = vpop.f32.mrf.mxu0
        %v4435 = vadd.f32 %v3741, %v4434
        %4436 = vmatmul.bf16.gmra.mxu0 %v3663
        %v4437 = vpop.f32.mrf.mxu0
        %v4438 = vadd.f32 %v3741, %v4437
        %v4439 = vpop.f32.mrf.mxu0
        %v4440 = vadd.f32 %v3741, %v4439
        %4441 = vmatmul.bf16.gmra.mxu0 %v3664
        %v4442 = vpop.f32.mrf.mxu0
        %v4443 = vadd.f32 %v3741, %v4442
        %v4444 = vpop.f32.mrf.mxu0
        %v4445 = vadd.f32 %v3741, %v4444
        %4446 = vmatmul.bf16.gmra.mxu0 %v3665
        %v4447 = vpop.f32.mrf.mxu0
        %v4448 = vadd.f32 %v3741, %v4447
        %v4449 = vpop.f32.mrf.mxu0
        %v4450 = vadd.f32 %v3741, %v4449
        %4451 = vmatmul.bf16.gmra.mxu0 %v3666
        %v4452 = vpop.f32.mrf.mxu0
        %v4453 = vadd.f32 %v3741, %v4452
        %v4454 = vpop.f32.mrf.mxu0
        %v4455 = vadd.f32 %v3741, %v4454
        %4456 = vmatmul.bf16.gmra.mxu0 %v3667
        %v4457 = vpop.f32.mrf.mxu0
        %v4458 = vadd.f32 %v3741, %v4457
        %v4459 = vpop.f32.mrf.mxu0
        %v4460 = vadd.f32 %v3741, %v4459
        %4461 = vdwg.mxu0
        %v4462 = vmax.f32 %v4080, 0.0
        %v4463 = vmax.f32 %v4129, 0.0
        %v4464 = vmax.f32 %v4178, 0.0
        %v4465 = vmax.f32 %v4227, 0.0
        %v4466 = vmax.f32 %v4276, 0.0
        %v4467 = vmax.f32 %v4325, 0.0
        %v4468 = vmax.f32 %v4374, 0.0
        %v4469 = vmax.f32 %v4423, 0.0
        %v4470 = vmax.f32 %v4082, 0.0
        %v4471 = vmax.f32 %v4131, 0.0
        %v4472 = vmax.f32 %v4180, 0.0
        %v4473 = vmax.f32 %v4229, 0.0
        %v4474 = vmax.f32 %v4278, 0.0
        %v4475 = vmax.f32 %v4327, 0.0
        %v4476 = vmax.f32 %v4376, 0.0
        %v4477 = vmax.f32 %v4425, 0.0
        %v4478 = vmax.f32 %v4085, 0.0
        %v4479 = vmax.f32 %v4134, 0.0
        %v4480 = vmax.f32 %v4183, 0.0
        %v4481 = vmax.f32 %v4232, 0.0
        %v4482 = vmax.f32 %v4281, 0.0
        %v4483 = vmax.f32 %v4330, 0.0
        %v4484 = vmax.f32 %v4379, 0.0
        %v4485 = vmax.f32 %v4428, 0.0
        %v4486 = vmax.f32 %v4087, 0.0
        %v4487 = vmax.f32 %v4136, 0.0
        %v4488 = vmax.f32 %v4185, 0.0
        %v4489 = vmax.f32 %v4234, 0.0
        %v4490 = vmax.f32 %v4283, 0.0
        %v4491 = vmax.f32 %v4332, 0.0
        %v4492 = vmax.f32 %v4381, 0.0
        %v4493 = vmax.f32 %v4430, 0.0
        %v4494 = vmax.f32 %v4090, 0.0
        %v4495 = vmax.f32 %v4139, 0.0
        %v4496 = vmax.f32 %v4188, 0.0
        %v4497 = vmax.f32 %v4237, 0.0
        %v4498 = vmax.f32 %v4286, 0.0
        %v4499 = vmax.f32 %v4335, 0.0
        %v4500 = vmax.f32 %v4384, 0.0
        %v4501 = vmax.f32 %v4433, 0.0
        %v4502 = vmax.f32 %v4092, 0.0
        %v4503 = vmax.f32 %v4141, 0.0
        %v4504 = vmax.f32 %v4190, 0.0
        %v4505 = vmax.f32 %v4239, 0.0
        %v4506 = vmax.f32 %v4288, 0.0
        %v4507 = vmax.f32 %v4337, 0.0
        %v4508 = vmax.f32 %v4386, 0.0
        %v4509 = vmax.f32 %v4435, 0.0
        %v4510 = vmax.f32 %v4095, 0.0
        %v4511 = vmax.f32 %v4144, 0.0
        %v4512 = vmax.f32 %v4193, 0.0
        %v4513 = vmax.f32 %v4242, 0.0
        %v4514 = vmax.f32 %v4291, 0.0
        %v4515 = vmax.f32 %v4340, 0.0
        %v4516 = vmax.f32 %v4389, 0.0
        %v4517 = vmax.f32 %v4438, 0.0
        %v4518 = vmax.f32 %v4097, 0.0
        %v4519 = vmax.f32 %v4146, 0.0
        %v4520 = vmax.f32 %v4195, 0.0
        %v4521 = vmax.f32 %v4244, 0.0
        %v4522 = vmax.f32 %v4293, 0.0
        %v4523 = vmax.f32 %v4342, 0.0
        %v4524 = vmax.f32 %v4391, 0.0
        %v4525 = vmax.f32 %v4440, 0.0
        %v4526 = vmax.f32 %v4100, 0.0
        %v4527 = vmax.f32 %v4149, 0.0
        %v4528 = vmax.f32 %v4198, 0.0
        %v4529 = vmax.f32 %v4247, 0.0
        %v4530 = vmax.f32 %v4296, 0.0
        %v4531 = vmax.f32 %v4345, 0.0
        %v4532 = vmax.f32 %v4394, 0.0
        %v4533 = vmax.f32 %v4443, 0.0
        %v4534 = vmax.f32 %v4102, 0.0
        %v4535 = vmax.f32 %v4151, 0.0
        %v4536 = vmax.f32 %v4200, 0.0
        %v4537 = vmax.f32 %v4249, 0.0
        %v4538 = vmax.f32 %v4298, 0.0
        %v4539 = vmax.f32 %v4347, 0.0
        %v4540 = vmax.f32 %v4396, 0.0
        %v4541 = vmax.f32 %v4445, 0.0
        %v4542 = vmax.f32 %v4105, 0.0
        %v4543 = vmax.f32 %v4154, 0.0
        %v4544 = vmax.f32 %v4203, 0.0
        %v4545 = vmax.f32 %v4252, 0.0
        %v4546 = vmax.f32 %v4301, 0.0
        %v4547 = vmax.f32 %v4350, 0.0
        %v4548 = vmax.f32 %v4399, 0.0
        %v4549 = vmax.f32 %v4448, 0.0
        %v4550 = vmax.f32 %v4107, 0.0
        %v4551 = vmax.f32 %v4156, 0.0
        %v4552 = vmax.f32 %v4205, 0.0
        %v4553 = vmax.f32 %v4254, 0.0
        %v4554 = vmax.f32 %v4303, 0.0
        %v4555 = vmax.f32 %v4352, 0.0
        %v4556 = vmax.f32 %v4401, 0.0
        %v4557 = vmax.f32 %v4450, 0.0
        %v4558 = vmax.f32 %v4110, 0.0
        %v4559 = vmax.f32 %v4159, 0.0
        %v4560 = vmax.f32 %v4208, 0.0
        %v4561 = vmax.f32 %v4257, 0.0
        %v4562 = vmax.f32 %v4306, 0.0
        %v4563 = vmax.f32 %v4355, 0.0
        %v4564 = vmax.f32 %v4404, 0.0
        %v4565 = vmax.f32 %v4453, 0.0
        %v4566 = vmax.f32 %v4112, 0.0
        %v4567 = vmax.f32 %v4161, 0.0
        %v4568 = vmax.f32 %v4210, 0.0
        %v4569 = vmax.f32 %v4259, 0.0
        %v4570 = vmax.f32 %v4308, 0.0
        %v4571 = vmax.f32 %v4357, 0.0
        %v4572 = vmax.f32 %v4406, 0.0
        %v4573 = vmax.f32 %v4455, 0.0
        %v4574 = vmax.f32 %v4115, 0.0
        %v4575 = vmax.f32 %v4164, 0.0
        %v4576 = vmax.f32 %v4213, 0.0
        %v4577 = vmax.f32 %v4262, 0.0
        %v4578 = vmax.f32 %v4311, 0.0
        %v4579 = vmax.f32 %v4360, 0.0
        %v4580 = vmax.f32 %v4409, 0.0
        %v4581 = vmax.f32 %v4458, 0.0
        %v4582 = vmax.f32 %v4117, 0.0
        %v4583 = vmax.f32 %v4166, 0.0
        %v4584 = vmax.f32 %v4215, 0.0
        %v4585 = vmax.f32 %v4264, 0.0
        %v4586 = vmax.f32 %v4313, 0.0
        %v4587 = vmax.f32 %v4362, 0.0
        %v4588 = vmax.f32 %v4411, 0.0
        %v4589 = vmax.f32 %v4460, 0.0
        %v4590 = vpack.c.bf16 %v4470, %v4462
        %v4591 = vpack.c.bf16 %v4471, %v4463
        %v4592 = vpack.c.bf16 %v4472, %v4464
        %v4593 = vpack.c.bf16 %v4473, %v4465
        %v4594 = vpack.c.bf16 %v4474, %v4466
        %v4595 = vpack.c.bf16 %v4475, %v4467
        %v4596 = vpack.c.bf16 %v4476, %v4468
        %v4597 = vpack.c.bf16 %v4477, %v4469
        %v4598 = vpack.c.bf16 %v4486, %v4478
        %v4599 = vpack.c.bf16 %v4487, %v4479
        %v4600 = vpack.c.bf16 %v4488, %v4480
        %v4601 = vpack.c.bf16 %v4489, %v4481
        %v4602 = vpack.c.bf16 %v4490, %v4482
        %v4603 = vpack.c.bf16 %v4491, %v4483
        %v4604 = vpack.c.bf16 %v4492, %v4484
        %v4605 = vpack.c.bf16 %v4493, %v4485
        %v4606 = vpack.c.bf16 %v4502, %v4494
        %v4607 = vpack.c.bf16 %v4503, %v4495
        %v4608 = vpack.c.bf16 %v4504, %v4496
        %v4609 = vpack.c.bf16 %v4505, %v4497
        %v4610 = vpack.c.bf16 %v4506, %v4498
        %v4611 = vpack.c.bf16 %v4507, %v4499
        %v4612 = vpack.c.bf16 %v4508, %v4500
        %v4613 = vpack.c.bf16 %v4509, %v4501
        %v4614 = vpack.c.bf16 %v4518, %v4510
        %v4615 = vpack.c.bf16 %v4519, %v4511
        %v4616 = vpack.c.bf16 %v4520, %v4512
        %v4617 = vpack.c.bf16 %v4521, %v4513
        %v4618 = vpack.c.bf16 %v4522, %v4514
        %v4619 = vpack.c.bf16 %v4523, %v4515
        %v4620 = vpack.c.bf16 %v4524, %v4516
        %v4621 = vpack.c.bf16 %v4525, %v4517
        %v4622 = vpack.c.bf16 %v4534, %v4526
        %v4623 = vpack.c.bf16 %v4535, %v4527
        %v4624 = vpack.c.bf16 %v4536, %v4528
        %v4625 = vpack.c.bf16 %v4537, %v4529
        %v4626 = vpack.c.bf16 %v4538, %v4530
        %v4627 = vpack.c.bf16 %v4539, %v4531
        %v4628 = vpack.c.bf16 %v4540, %v4532
        %v4629 = vpack.c.bf16 %v4541, %v4533
        %v4630 = vpack.c.bf16 %v4550, %v4542
        %v4631 = vpack.c.bf16 %v4551, %v4543
        %v4632 = vpack.c.bf16 %v4552, %v4544
        %v4633 = vpack.c.bf16 %v4553, %v4545
        %v4634 = vpack.c.bf16 %v4554, %v4546
        %v4635 = vpack.c.bf16 %v4555, %v4547
        %v4636 = vpack.c.bf16 %v4556, %v4548
        %v4637 = vpack.c.bf16 %v4557, %v4549
        %v4638 = vpack.c.bf16 %v4566, %v4558
        %v4639 = vpack.c.bf16 %v4567, %v4559
        %v4640 = vpack.c.bf16 %v4568, %v4560
        %v4641 = vpack.c.bf16 %v4569, %v4561
        %v4642 = vpack.c.bf16 %v4570, %v4562
        %v4643 = vpack.c.bf16 %v4571, %v4563
        %v4644 = vpack.c.bf16 %v4572, %v4564
        %v4645 = vpack.c.bf16 %v4573, %v4565
        %v4646 = vpack.c.bf16 %v4582, %v4574
        %v4647 = vpack.c.bf16 %v4583, %v4575
        %v4648 = vpack.c.bf16 %v4584, %v4576
        %v4649 = vpack.c.bf16 %v4585, %v4577
        %v4650 = vpack.c.bf16 %v4586, %v4578
        %v4651 = vpack.c.bf16 %v4587, %v4579
        %v4652 = vpack.c.bf16 %v4588, %v4580
        %v4653 = vpack.c.bf16 %v4589, %v4581
        %v4654 = vld [vmem:[#allocation17] sm:$0xf]
        %v4655 = vld [vmem:[#allocation17 + $0x4] sm:$0xf]
        %v4656 = vld [vmem:[#allocation17 + $0x8] sm:$0xf]
        %v4657 = vld [vmem:[#allocation17 + $0xc] sm:$0xf]
        %v4658 = vld [vmem:[#allocation17 + $0x10] sm:$0xf]
        %v4659 = vld [vmem:[#allocation17 + $0x14] sm:$0xf]
        %v4660 = vld [vmem:[#allocation17 + $0x18] sm:$0xf]
        %v4661 = vld [vmem:[#allocation17 + $0x1c] sm:$0xf]
        %v4662 = vld [vmem:[#allocation17 + $0x20] sm:$0xf]
        %v4663 = vld [vmem:[#allocation17 + $0x24] sm:$0xf]
        %v4664 = vld [vmem:[#allocation17 + $0x28] sm:$0xf]
        %v4665 = vld [vmem:[#allocation17 + $0x2c] sm:$0xf]
        %v4666 = vld [vmem:[#allocation17 + $0x30] sm:$0xf]
        %v4667 = vld [vmem:[#allocation17 + $0x34] sm:$0xf]
        %v4668 = vld [vmem:[#allocation17 + $0x38] sm:$0xf]
        %v4669 = vld [vmem:[#allocation17 + $0x3c] sm:$0xf]
        %v4670 = vld [vmem:[#allocation17 + $0x40] sm:$0xf]
        %v4671 = vld [vmem:[#allocation17 + $0x44] sm:$0xf]
        %v4672 = vld [vmem:[#allocation17 + $0x48] sm:$0xf]
        %v4673 = vld [vmem:[#allocation17 + $0x4c] sm:$0xf]
        %v4674 = vld [vmem:[#allocation17 + $0x50] sm:$0xf]
        %v4675 = vld [vmem:[#allocation17 + $0x54] sm:$0xf]
        %v4676 = vld [vmem:[#allocation17 + $0x58] sm:$0xf]
        %v4677 = vld [vmem:[#allocation17 + $0x5c] sm:$0xf]
        %v4678 = vld [vmem:[#allocation17 + $0x60] sm:$0xf]
        %v4679 = vld [vmem:[#allocation17 + $0x64] sm:$0xf]
        %v4680 = vld [vmem:[#allocation17 + $0x68] sm:$0xf]
        %v4681 = vld [vmem:[#allocation17 + $0x6c] sm:$0xf]
        %v4682 = vld [vmem:[#allocation17 + $0x70] sm:$0xf]
        %v4683 = vld [vmem:[#allocation17 + $0x74] sm:$0xf]
        %v4684 = vld [vmem:[#allocation17 + $0x78] sm:$0xf]
        %v4685 = vld [vmem:[#allocation17 + $0x7c] sm:$0xf]
        %v4686 = vld [vmem:[#allocation17 + $0x80] sm:$0xf]
        %v4687 = vld [vmem:[#allocation17 + $0x84] sm:$0xf]
        %v4688 = vld [vmem:[#allocation17 + $0x88] sm:$0xf]
        %v4689 = vld [vmem:[#allocation17 + $0x8c] sm:$0xf]
        %v4690 = vld [vmem:[#allocation17 + $0x90] sm:$0xf]
        %v4691 = vld [vmem:[#allocation17 + $0x94] sm:$0xf]
        %v4692 = vld [vmem:[#allocation17 + $0x98] sm:$0xf]
        %v4693 = vld [vmem:[#allocation17 + $0x9c] sm:$0xf]
        %v4694 = vld [vmem:[#allocation17 + $0xa0] sm:$0xf]
        %v4695 = vld [vmem:[#allocation17 + $0xa4] sm:$0xf]
        %v4696 = vld [vmem:[#allocation17 + $0xa8] sm:$0xf]
        %v4697 = vld [vmem:[#allocation17 + $0xac] sm:$0xf]
        %v4698 = vld [vmem:[#allocation17 + $0xb0] sm:$0xf]
        %v4699 = vld [vmem:[#allocation17 + $0xb4] sm:$0xf]
        %v4700 = vld [vmem:[#allocation17 + $0xb8] sm:$0xf]
        %v4701 = vld [vmem:[#allocation17 + $0xbc] sm:$0xf]
        %v4702 = vld [vmem:[#allocation17 + $0xc0] sm:$0xf]
        %v4703 = vld [vmem:[#allocation17 + $0xc4] sm:$0xf]
        %v4704 = vld [vmem:[#allocation17 + $0xc8] sm:$0xf]
        %v4705 = vld [vmem:[#allocation17 + $0xcc] sm:$0xf]
        %v4706 = vld [vmem:[#allocation17 + $0xd0] sm:$0xf]
        %v4707 = vld [vmem:[#allocation17 + $0xd4] sm:$0xf]
        %v4708 = vld [vmem:[#allocation17 + $0xd8] sm:$0xf]
        %v4709 = vld [vmem:[#allocation17 + $0xdc] sm:$0xf]
        %v4710 = vld [vmem:[#allocation17 + $0xe0] sm:$0xf]
        %v4711 = vld [vmem:[#allocation17 + $0xe4] sm:$0xf]
        %v4712 = vld [vmem:[#allocation17 + $0xe8] sm:$0xf]
        %v4713 = vld [vmem:[#allocation17 + $0xec] sm:$0xf]
        %v4714 = vld [vmem:[#allocation17 + $0xf0] sm:$0xf]
        %v4715 = vld [vmem:[#allocation17 + $0xf4] sm:$0xf]
        %v4716 = vld [vmem:[#allocation17 + $0xf8] sm:$0xf]
        %v4717 = vld [vmem:[#allocation17 + $0xfc] sm:$0xf]
        %v4718 = vld [vmem:[#allocation17 + $0x100] sm:$0xf]
        %v4719 = vld [vmem:[#allocation17 + $0x104] sm:$0xf]
        %v4720 = vld [vmem:[#allocation17 + $0x108] sm:$0xf]
        %v4721 = vld [vmem:[#allocation17 + $0x10c] sm:$0xf]
        %v4722 = vld [vmem:[#allocation17 + $0x110] sm:$0xf]
        %v4723 = vld [vmem:[#allocation17 + $0x114] sm:$0xf]
        %v4724 = vld [vmem:[#allocation17 + $0x118] sm:$0xf]
        %v4725 = vld [vmem:[#allocation17 + $0x11c] sm:$0xf]
        %v4726 = vld [vmem:[#allocation17 + $0x120] sm:$0xf]
        %v4727 = vld [vmem:[#allocation17 + $0x124] sm:$0xf]
        %v4728 = vld [vmem:[#allocation17 + $0x128] sm:$0xf]
        %v4729 = vld [vmem:[#allocation17 + $0x12c] sm:$0xf]
        %v4730 = vld [vmem:[#allocation17 + $0x130] sm:$0xf]
        %v4731 = vld [vmem:[#allocation17 + $0x134] sm:$0xf]
        %v4732 = vld [vmem:[#allocation17 + $0x138] sm:$0xf]
        %v4733 = vld [vmem:[#allocation17 + $0x13c] sm:$0xf]
        %v4734 = vld [vmem:[#allocation17 + $0x140] sm:$0xf]
        %v4735 = vld [vmem:[#allocation17 + $0x144] sm:$0xf]
        %v4736 = vld [vmem:[#allocation17 + $0x148] sm:$0xf]
        %v4737 = vld [vmem:[#allocation17 + $0x14c] sm:$0xf]
        %v4738 = vld [vmem:[#allocation17 + $0x150] sm:$0xf]
        %v4739 = vld [vmem:[#allocation17 + $0x154] sm:$0xf]
        %v4740 = vld [vmem:[#allocation17 + $0x158] sm:$0xf]
        %v4741 = vld [vmem:[#allocation17 + $0x15c] sm:$0xf]
        %v4742 = vld [vmem:[#allocation17 + $0x160] sm:$0xf]
        %v4743 = vld [vmem:[#allocation17 + $0x164] sm:$0xf]
        %v4744 = vld [vmem:[#allocation17 + $0x168] sm:$0xf]
        %v4745 = vld [vmem:[#allocation17 + $0x16c] sm:$0xf]
        %v4746 = vld [vmem:[#allocation17 + $0x170] sm:$0xf]
        %v4747 = vld [vmem:[#allocation17 + $0x174] sm:$0xf]
        %v4748 = vld [vmem:[#allocation17 + $0x178] sm:$0xf]
        %v4749 = vld [vmem:[#allocation17 + $0x17c] sm:$0xf]
        %v4750 = vld [vmem:[#allocation17 + $0x180] sm:$0xf]
        %v4751 = vld [vmem:[#allocation17 + $0x184] sm:$0xf]
        %v4752 = vld [vmem:[#allocation17 + $0x188] sm:$0xf]
        %v4753 = vld [vmem:[#allocation17 + $0x18c] sm:$0xf]
        %v4754 = vld [vmem:[#allocation17 + $0x190] sm:$0xf]
        %v4755 = vld [vmem:[#allocation17 + $0x194] sm:$0xf]
        %v4756 = vld [vmem:[#allocation17 + $0x198] sm:$0xf]
        %v4757 = vld [vmem:[#allocation17 + $0x19c] sm:$0xf]
        %v4758 = vld [vmem:[#allocation17 + $0x1a0] sm:$0xf]
        %v4759 = vld [vmem:[#allocation17 + $0x1a4] sm:$0xf]
        %v4760 = vld [vmem:[#allocation17 + $0x1a8] sm:$0xf]
        %v4761 = vld [vmem:[#allocation17 + $0x1ac] sm:$0xf]
        %v4762 = vld [vmem:[#allocation17 + $0x1b0] sm:$0xf]
        %v4763 = vld [vmem:[#allocation17 + $0x1b4] sm:$0xf]
        %v4764 = vld [vmem:[#allocation17 + $0x1b8] sm:$0xf]
        %v4765 = vld [vmem:[#allocation17 + $0x1bc] sm:$0xf]
        %v4766 = vld [vmem:[#allocation17 + $0x1c0] sm:$0xf]
        %v4767 = vld [vmem:[#allocation17 + $0x1c4] sm:$0xf]
        %v4768 = vld [vmem:[#allocation17 + $0x1c8] sm:$0xf]
        %v4769 = vld [vmem:[#allocation17 + $0x1cc] sm:$0xf]
        %v4770 = vld [vmem:[#allocation17 + $0x1d0] sm:$0xf]
        %v4771 = vld [vmem:[#allocation17 + $0x1d4] sm:$0xf]
        %v4772 = vld [vmem:[#allocation17 + $0x1d8] sm:$0xf]
        %v4773 = vld [vmem:[#allocation17 + $0x1dc] sm:$0xf]
        %v4774 = vld [vmem:[#allocation17 + $0x1e0] sm:$0xf]
        %v4775 = vld [vmem:[#allocation17 + $0x1e4] sm:$0xf]
        %v4776 = vld [vmem:[#allocation17 + $0x1e8] sm:$0xf]
        %v4777 = vld [vmem:[#allocation17 + $0x1ec] sm:$0xf]
        %v4778 = vld [vmem:[#allocation17 + $0x1f0] sm:$0xf]
        %v4779 = vld [vmem:[#allocation17 + $0x1f4] sm:$0xf]
        %v4780 = vld [vmem:[#allocation17 + $0x1f8] sm:$0xf]
        %v4781 = vld [vmem:[#allocation17 + $0x1fc] sm:$0xf]
        %v4782 = vld [vmem:[%s12] sm:$0x1]
        %v4784 = vperm.slane %v4782, 0
        %v4914 = vunpack.c.l.b16 %v4654
        %v4915 = vunpack.c.l.b16 %v4655
        %v4916 = vunpack.c.l.b16 %v4656
        %v4917 = vunpack.c.l.b16 %v4657
        %v4918 = vunpack.c.l.b16 %v4658
        %v4919 = vunpack.c.l.b16 %v4659
        %v4920 = vunpack.c.l.b16 %v4660
        %v4921 = vunpack.c.l.b16 %v4661
        %v4922 = vunpack.c.l.b16 %v4662
        %v4923 = vunpack.c.l.b16 %v4663
        %v4924 = vunpack.c.l.b16 %v4664
        %v4925 = vunpack.c.l.b16 %v4665
        %v4926 = vunpack.c.l.b16 %v4666
        %v4927 = vunpack.c.l.b16 %v4667
        %v4928 = vunpack.c.l.b16 %v4668
        %v4929 = vunpack.c.l.b16 %v4669
        %v4930 = vunpack.c.l.b16 %v4670
        %v4931 = vunpack.c.l.b16 %v4671
        %v4932 = vunpack.c.l.b16 %v4672
        %v4933 = vunpack.c.l.b16 %v4673
        %v4934 = vunpack.c.l.b16 %v4674
        %v4935 = vunpack.c.l.b16 %v4675
        %v4936 = vunpack.c.l.b16 %v4676
        %v4937 = vunpack.c.l.b16 %v4677
        %v4938 = vunpack.c.l.b16 %v4678
        %v4939 = vunpack.c.l.b16 %v4679
        %v4940 = vunpack.c.l.b16 %v4680
        %v4941 = vunpack.c.l.b16 %v4681
        %v4942 = vunpack.c.l.b16 %v4682
        %v4943 = vunpack.c.l.b16 %v4683
        %v4944 = vunpack.c.l.b16 %v4684
        %v4945 = vunpack.c.l.b16 %v4685
        %v4946 = vunpack.c.l.b16 %v4686
        %v4947 = vunpack.c.l.b16 %v4687
        %v4948 = vunpack.c.l.b16 %v4688
        %v4949 = vunpack.c.l.b16 %v4689
        %v4950 = vunpack.c.l.b16 %v4690
        %v4951 = vunpack.c.l.b16 %v4691
        %v4952 = vunpack.c.l.b16 %v4692
        %v4953 = vunpack.c.l.b16 %v4693
        %v4954 = vunpack.c.l.b16 %v4694
        %v4955 = vunpack.c.l.b16 %v4695
        %v4956 = vunpack.c.l.b16 %v4696
        %v4957 = vunpack.c.l.b16 %v4697
        %v4958 = vunpack.c.l.b16 %v4698
        %v4959 = vunpack.c.l.b16 %v4699
        %v4960 = vunpack.c.l.b16 %v4700
        %v4961 = vunpack.c.l.b16 %v4701
        %v4962 = vunpack.c.l.b16 %v4702
        %v4963 = vunpack.c.l.b16 %v4703
        %v4964 = vunpack.c.l.b16 %v4704
        %v4965 = vunpack.c.l.b16 %v4705
        %v4966 = vunpack.c.l.b16 %v4706
        %v4967 = vunpack.c.l.b16 %v4707
        %v4968 = vunpack.c.l.b16 %v4708
        %v4969 = vunpack.c.l.b16 %v4709
        %v4970 = vunpack.c.l.b16 %v4710
        %v4971 = vunpack.c.l.b16 %v4711
        %v4972 = vunpack.c.l.b16 %v4712
        %v4973 = vunpack.c.l.b16 %v4713
        %v4974 = vunpack.c.l.b16 %v4714
        %v4975 = vunpack.c.l.b16 %v4715
        %v4976 = vunpack.c.l.b16 %v4716
        %v4977 = vunpack.c.l.b16 %v4717
        %v4978 = vunpack.c.l.b16 %v4718
        %v4979 = vunpack.c.l.b16 %v4719
        %v4980 = vunpack.c.l.b16 %v4720
        %v4981 = vunpack.c.l.b16 %v4721
        %v4982 = vunpack.c.l.b16 %v4722
        %v4983 = vunpack.c.l.b16 %v4723
        %v4984 = vunpack.c.l.b16 %v4724
        %v4985 = vunpack.c.l.b16 %v4725
        %v4986 = vunpack.c.l.b16 %v4726
        %v4987 = vunpack.c.l.b16 %v4727
        %v4988 = vunpack.c.l.b16 %v4728
        %v4989 = vunpack.c.l.b16 %v4729
        %v4990 = vunpack.c.l.b16 %v4730
        %v4991 = vunpack.c.l.b16 %v4731
        %v4992 = vunpack.c.l.b16 %v4732
        %v4993 = vunpack.c.l.b16 %v4733
        %v4994 = vunpack.c.l.b16 %v4734
        %v4995 = vunpack.c.l.b16 %v4735
        %v4996 = vunpack.c.l.b16 %v4736
        %v4997 = vunpack.c.l.b16 %v4737
        %v4998 = vunpack.c.l.b16 %v4738
        %v4999 = vunpack.c.l.b16 %v4739
        %v5000 = vunpack.c.l.b16 %v4740
        %v5001 = vunpack.c.l.b16 %v4741
        %v5002 = vunpack.c.l.b16 %v4742
        %v5003 = vunpack.c.l.b16 %v4743
        %v5004 = vunpack.c.l.b16 %v4744
        %v5005 = vunpack.c.l.b16 %v4745
        %v5006 = vunpack.c.l.b16 %v4746
        %v5007 = vunpack.c.l.b16 %v4747
        %v5008 = vunpack.c.l.b16 %v4748
        %v5009 = vunpack.c.l.b16 %v4749
        %v5010 = vunpack.c.l.b16 %v4750
        %v5011 = vunpack.c.l.b16 %v4751
        %v5012 = vunpack.c.l.b16 %v4752
        %v5013 = vunpack.c.l.b16 %v4753
        %v5014 = vunpack.c.l.b16 %v4754
        %v5015 = vunpack.c.l.b16 %v4755
        %v5016 = vunpack.c.l.b16 %v4756
        %v5017 = vunpack.c.l.b16 %v4757
        %v5018 = vunpack.c.l.b16 %v4758
        %v5019 = vunpack.c.l.b16 %v4759
        %v5020 = vunpack.c.l.b16 %v4760
        %v5021 = vunpack.c.l.b16 %v4761
        %v5022 = vunpack.c.l.b16 %v4762
        %v5023 = vunpack.c.l.b16 %v4763
        %v5024 = vunpack.c.l.b16 %v4764
        %v5025 = vunpack.c.l.b16 %v4765
        %v5026 = vunpack.c.l.b16 %v4766
        %v5027 = vunpack.c.l.b16 %v4767
        %v5028 = vunpack.c.l.b16 %v4768
        %v5029 = vunpack.c.l.b16 %v4769
        %v5030 = vunpack.c.l.b16 %v4770
        %v5031 = vunpack.c.l.b16 %v4771
        %v5032 = vunpack.c.l.b16 %v4772
        %v5033 = vunpack.c.l.b16 %v4773
        %v5034 = vunpack.c.l.b16 %v4774
        %v5035 = vunpack.c.l.b16 %v4775
        %v5036 = vunpack.c.l.b16 %v4776
        %v5037 = vunpack.c.l.b16 %v4777
        %v5038 = vunpack.c.l.b16 %v4778
        %v5039 = vunpack.c.l.b16 %v4779
        %v5040 = vunpack.c.l.b16 %v4780
        %v5041 = vunpack.c.l.b16 %v4781
        %v5042 = vpack.c.b16 %v4915, %v4914
        %v5043 = vpack.c.b16 %v4917, %v4916
        %v5044 = vpack.c.b16 %v4919, %v4918
        %v5045 = vpack.c.b16 %v4921, %v4920
        %v5046 = vpack.c.b16 %v4923, %v4922
        %v5047 = vpack.c.b16 %v4925, %v4924
        %v5048 = vpack.c.b16 %v4927, %v4926
        %v5049 = vpack.c.b16 %v4929, %v4928
        %v5050 = vpack.c.b16 %v4931, %v4930
        %v5051 = vpack.c.b16 %v4933, %v4932
        %v5052 = vpack.c.b16 %v4935, %v4934
        %v5053 = vpack.c.b16 %v4937, %v4936
        %v5054 = vpack.c.b16 %v4939, %v4938
        %v5055 = vpack.c.b16 %v4941, %v4940
        %v5056 = vpack.c.b16 %v4943, %v4942
        %v5057 = vpack.c.b16 %v4945, %v4944
        %v5058 = vpack.c.b16 %v4947, %v4946
        %v5059 = vpack.c.b16 %v4949, %v4948
        %v5060 = vpack.c.b16 %v4951, %v4950
        %v5061 = vpack.c.b16 %v4953, %v4952
        %v5062 = vpack.c.b16 %v4955, %v4954
        %v5063 = vpack.c.b16 %v4957, %v4956
        %v5064 = vpack.c.b16 %v4959, %v4958
        %v5065 = vpack.c.b16 %v4961, %v4960
        %v5066 = vpack.c.b16 %v4963, %v4962
        %v5067 = vpack.c.b16 %v4965, %v4964
        %v5068 = vpack.c.b16 %v4967, %v4966
        %v5069 = vpack.c.b16 %v4969, %v4968
        %v5070 = vpack.c.b16 %v4971, %v4970
        %v5071 = vpack.c.b16 %v4973, %v4972
        %v5072 = vpack.c.b16 %v4975, %v4974
        %v5073 = vpack.c.b16 %v4977, %v4976
        %v5074 = vpack.c.b16 %v4979, %v4978
        %v5075 = vpack.c.b16 %v4981, %v4980
        %v5076 = vpack.c.b16 %v4983, %v4982
        %v5077 = vpack.c.b16 %v4985, %v4984
        %v5078 = vpack.c.b16 %v4987, %v4986
        %v5079 = vpack.c.b16 %v4989, %v4988
        %v5080 = vpack.c.b16 %v4991, %v4990
        %v5081 = vpack.c.b16 %v4993, %v4992
        %v5082 = vpack.c.b16 %v4995, %v4994
        %v5083 = vpack.c.b16 %v4997, %v4996
        %v5084 = vpack.c.b16 %v4999, %v4998
        %v5085 = vpack.c.b16 %v5001, %v5000
        %v5086 = vpack.c.b16 %v5003, %v5002
        %v5087 = vpack.c.b16 %v5005, %v5004
        %v5088 = vpack.c.b16 %v5007, %v5006
        %v5089 = vpack.c.b16 %v5009, %v5008
        %v5090 = vpack.c.b16 %v5011, %v5010
        %v5091 = vpack.c.b16 %v5013, %v5012
        %v5092 = vpack.c.b16 %v5015, %v5014
        %v5093 = vpack.c.b16 %v5017, %v5016
        %v5094 = vpack.c.b16 %v5019, %v5018
        %v5095 = vpack.c.b16 %v5021, %v5020
        %v5096 = vpack.c.b16 %v5023, %v5022
        %v5097 = vpack.c.b16 %v5025, %v5024
        %v5098 = vpack.c.b16 %v5027, %v5026
        %v5099 = vpack.c.b16 %v5029, %v5028
        %v5100 = vpack.c.b16 %v5031, %v5030
        %v5101 = vpack.c.b16 %v5033, %v5032
        %v5102 = vpack.c.b16 %v5035, %v5034
        %v5103 = vpack.c.b16 %v5037, %v5036
        %v5104 = vpack.c.b16 %v5039, %v5038
        %v5105 = vpack.c.b16 %v5041, %v5040
        %5170 = vmatpush.bf16.msra.mxu0 %v5049
        %5171 = vmatpush.bf16.msra.mxu0 %v5048
        %5172 = vmatpush.bf16.msra.mxu0 %v5047
        %5173 = vmatpush.bf16.msra.mxu0 %v5046
        %5174 = vmatpush.bf16.msra.mxu0 %v5045
        %5175 = vmatpush.bf16.msra.mxu0 %v5044
        %5176 = vmatpush.bf16.msra.mxu0 %v5043
        %5177 = vmatpush.bf16.msra.mxu0 %v5042
        %5178 = vmatmul.bf16.gmra.mxu0 %v4590
        %v5179 = vpop.f32.mrf.mxu0
        %v5180 = vadd.f32 %v4784, %v5179
        %v5181 = vpop.f32.mrf.mxu0
        %v5182 = vadd.f32 %v4784, %v5181
        %5183 = vmatmul.bf16.gmra.mxu0 %v4598
        %v5184 = vpop.f32.mrf.mxu0
        %v5185 = vadd.f32 %v4784, %v5184
        %v5186 = vpop.f32.mrf.mxu0
        %v5187 = vadd.f32 %v4784, %v5186
        %5188 = vmatmul.bf16.gmra.mxu0 %v4606
        %v5189 = vpop.f32.mrf.mxu0
        %v5190 = vadd.f32 %v4784, %v5189
        %v5191 = vpop.f32.mrf.mxu0
        %v5192 = vadd.f32 %v4784, %v5191
        %5193 = vmatmul.bf16.gmra.mxu0 %v4614
        %v5194 = vpop.f32.mrf.mxu0
        %v5195 = vadd.f32 %v4784, %v5194
        %v5196 = vpop.f32.mrf.mxu0
        %v5197 = vadd.f32 %v4784, %v5196
        %5198 = vmatmul.bf16.gmra.mxu0 %v4622
        %v5199 = vpop.f32.mrf.mxu0
        %v5200 = vadd.f32 %v4784, %v5199
        %v5201 = vpop.f32.mrf.mxu0
        %v5202 = vadd.f32 %v4784, %v5201
        %5203 = vmatmul.bf16.gmra.mxu0 %v4630
        %v5204 = vpop.f32.mrf.mxu0
        %v5205 = vadd.f32 %v4784, %v5204
        %v5206 = vpop.f32.mrf.mxu0
        %v5207 = vadd.f32 %v4784, %v5206
        %5208 = vmatmul.bf16.gmra.mxu0 %v4638
        %v5209 = vpop.f32.mrf.mxu0
        %v5210 = vadd.f32 %v4784, %v5209
        %v5211 = vpop.f32.mrf.mxu0
        %v5212 = vadd.f32 %v4784, %v5211
        %5213 = vmatmul.bf16.gmra.mxu0 %v4646
        %v5214 = vpop.f32.mrf.mxu0
        %v5215 = vadd.f32 %v4784, %v5214
        %v5216 = vpop.f32.mrf.mxu0
        %v5217 = vadd.f32 %v4784, %v5216
        %5218 = vdwg.mxu0
        %5219 = vmatpush.bf16.msra.mxu0 %v5057
        %5220 = vmatpush.bf16.msra.mxu0 %v5056
        %5221 = vmatpush.bf16.msra.mxu0 %v5055
        %5222 = vmatpush.bf16.msra.mxu0 %v5054
        %5223 = vmatpush.bf16.msra.mxu0 %v5053
        %5224 = vmatpush.bf16.msra.mxu0 %v5052
        %5225 = vmatpush.bf16.msra.mxu0 %v5051
        %5226 = vmatpush.bf16.msra.mxu0 %v5050
        %5227 = vmatmul.bf16.gmra.mxu0 %v4591
        %v5228 = vpop.f32.mrf.mxu0
        %v5229 = vadd.f32 %v5180, %v5228
        %v5230 = vpop.f32.mrf.mxu0
        %v5231 = vadd.f32 %v5182, %v5230
        %5232 = vmatmul.bf16.gmra.mxu0 %v4599
        %v5233 = vpop.f32.mrf.mxu0
        %v5234 = vadd.f32 %v5185, %v5233
        %v5235 = vpop.f32.mrf.mxu0
        %v5236 = vadd.f32 %v5187, %v5235
        %5237 = vmatmul.bf16.gmra.mxu0 %v4607
        %v5238 = vpop.f32.mrf.mxu0
        %v5239 = vadd.f32 %v5190, %v5238
        %v5240 = vpop.f32.mrf.mxu0
        %v5241 = vadd.f32 %v5192, %v5240
        %5242 = vmatmul.bf16.gmra.mxu0 %v4615
        %v5243 = vpop.f32.mrf.mxu0
        %v5244 = vadd.f32 %v5195, %v5243
        %v5245 = vpop.f32.mrf.mxu0
        %v5246 = vadd.f32 %v5197, %v5245
        %5247 = vmatmul.bf16.gmra.mxu0 %v4623
        %v5248 = vpop.f32.mrf.mxu0
        %v5249 = vadd.f32 %v5200, %v5248
        %v5250 = vpop.f32.mrf.mxu0
        %v5251 = vadd.f32 %v5202, %v5250
        %5252 = vmatmul.bf16.gmra.mxu0 %v4631
        %v5253 = vpop.f32.mrf.mxu0
        %v5254 = vadd.f32 %v5205, %v5253
        %v5255 = vpop.f32.mrf.mxu0
        %v5256 = vadd.f32 %v5207, %v5255
        %5257 = vmatmul.bf16.gmra.mxu0 %v4639
        %v5258 = vpop.f32.mrf.mxu0
        %v5259 = vadd.f32 %v5210, %v5258
        %v5260 = vpop.f32.mrf.mxu0
        %v5261 = vadd.f32 %v5212, %v5260
        %5262 = vmatmul.bf16.gmra.mxu0 %v4647
        %v5263 = vpop.f32.mrf.mxu0
        %v5264 = vadd.f32 %v5215, %v5263
        %v5265 = vpop.f32.mrf.mxu0
        %v5266 = vadd.f32 %v5217, %v5265
        %5267 = vdwg.mxu0
        %5268 = vmatpush.bf16.msra.mxu0 %v5065
        %5269 = vmatpush.bf16.msra.mxu0 %v5064
        %5270 = vmatpush.bf16.msra.mxu0 %v5063
        %5271 = vmatpush.bf16.msra.mxu0 %v5062
        %5272 = vmatpush.bf16.msra.mxu0 %v5061
        %5273 = vmatpush.bf16.msra.mxu0 %v5060
        %5274 = vmatpush.bf16.msra.mxu0 %v5059
        %5275 = vmatpush.bf16.msra.mxu0 %v5058
        %5276 = vmatmul.bf16.gmra.mxu0 %v4592
        %v5277 = vpop.f32.mrf.mxu0
        %v5278 = vadd.f32 %v5229, %v5277
        %v5279 = vpop.f32.mrf.mxu0
        %v5280 = vadd.f32 %v5231, %v5279
        %5281 = vmatmul.bf16.gmra.mxu0 %v4600
        %v5282 = vpop.f32.mrf.mxu0
        %v5283 = vadd.f32 %v5234, %v5282
        %v5284 = vpop.f32.mrf.mxu0
        %v5285 = vadd.f32 %v5236, %v5284
        %5286 = vmatmul.bf16.gmra.mxu0 %v4608
        %v5287 = vpop.f32.mrf.mxu0
        %v5288 = vadd.f32 %v5239, %v5287
        %v5289 = vpop.f32.mrf.mxu0
        %v5290 = vadd.f32 %v5241, %v5289
        %5291 = vmatmul.bf16.gmra.mxu0 %v4616
        %v5292 = vpop.f32.mrf.mxu0
        %v5293 = vadd.f32 %v5244, %v5292
        %v5294 = vpop.f32.mrf.mxu0
        %v5295 = vadd.f32 %v5246, %v5294
        %5296 = vmatmul.bf16.gmra.mxu0 %v4624
        %v5297 = vpop.f32.mrf.mxu0
        %v5298 = vadd.f32 %v5249, %v5297
        %v5299 = vpop.f32.mrf.mxu0
        %v5300 = vadd.f32 %v5251, %v5299
        %5301 = vmatmul.bf16.gmra.mxu0 %v4632
        %v5302 = vpop.f32.mrf.mxu0
        %v5303 = vadd.f32 %v5254, %v5302
        %v5304 = vpop.f32.mrf.mxu0
        %v5305 = vadd.f32 %v5256, %v5304
        %5306 = vmatmul.bf16.gmra.mxu0 %v4640
        %v5307 = vpop.f32.mrf.mxu0
        %v5308 = vadd.f32 %v5259, %v5307
        %v5309 = vpop.f32.mrf.mxu0
        %v5310 = vadd.f32 %v5261, %v5309
        %5311 = vmatmul.bf16.gmra.mxu0 %v4648
        %v5312 = vpop.f32.mrf.mxu0
        %v5313 = vadd.f32 %v5264, %v5312
        %v5314 = vpop.f32.mrf.mxu0
        %v5315 = vadd.f32 %v5266, %v5314
        %5316 = vdwg.mxu0
        %5317 = vmatpush.bf16.msra.mxu0 %v5073
        %5318 = vmatpush.bf16.msra.mxu0 %v5072
        %5319 = vmatpush.bf16.msra.mxu0 %v5071
        %5320 = vmatpush.bf16.msra.mxu0 %v5070
        %5321 = vmatpush.bf16.msra.mxu0 %v5069
        %5322 = vmatpush.bf16.msra.mxu0 %v5068
        %5323 = vmatpush.bf16.msra.mxu0 %v5067
        %5324 = vmatpush.bf16.msra.mxu0 %v5066
        %5325 = vmatmul.bf16.gmra.mxu0 %v4593
        %v5326 = vpop.f32.mrf.mxu0
        %v5327 = vadd.f32 %v5278, %v5326
        %v5328 = vpop.f32.mrf.mxu0
        %v5329 = vadd.f32 %v5280, %v5328
        %5330 = vmatmul.bf16.gmra.mxu0 %v4601
        %v5331 = vpop.f32.mrf.mxu0
        %v5332 = vadd.f32 %v5283, %v5331
        %v5333 = vpop.f32.mrf.mxu0
        %v5334 = vadd.f32 %v5285, %v5333
        %5335 = vmatmul.bf16.gmra.mxu0 %v4609
        %v5336 = vpop.f32.mrf.mxu0
        %v5337 = vadd.f32 %v5288, %v5336
        %v5338 = vpop.f32.mrf.mxu0
        %v5339 = vadd.f32 %v5290, %v5338
        %5340 = vmatmul.bf16.gmra.mxu0 %v4617
        %v5341 = vpop.f32.mrf.mxu0
        %v5342 = vadd.f32 %v5293, %v5341
        %v5343 = vpop.f32.mrf.mxu0
        %v5344 = vadd.f32 %v5295, %v5343
        %5345 = vmatmul.bf16.gmra.mxu0 %v4625
        %v5346 = vpop.f32.mrf.mxu0
        %v5347 = vadd.f32 %v5298, %v5346
        %v5348 = vpop.f32.mrf.mxu0
        %v5349 = vadd.f32 %v5300, %v5348
        %5350 = vmatmul.bf16.gmra.mxu0 %v4633
        %v5351 = vpop.f32.mrf.mxu0
        %v5352 = vadd.f32 %v5303, %v5351
        %v5353 = vpop.f32.mrf.mxu0
        %v5354 = vadd.f32 %v5305, %v5353
        %5355 = vmatmul.bf16.gmra.mxu0 %v4641
        %v5356 = vpop.f32.mrf.mxu0
        %v5357 = vadd.f32 %v5308, %v5356
        %v5358 = vpop.f32.mrf.mxu0
        %v5359 = vadd.f32 %v5310, %v5358
        %5360 = vmatmul.bf16.gmra.mxu0 %v4649
        %v5361 = vpop.f32.mrf.mxu0
        %v5362 = vadd.f32 %v5313, %v5361
        %v5363 = vpop.f32.mrf.mxu0
        %v5364 = vadd.f32 %v5315, %v5363
        %5365 = vdwg.mxu0
        %5366 = vmatpush.bf16.msra.mxu0 %v5081
        %5367 = vmatpush.bf16.msra.mxu0 %v5080
        %5368 = vmatpush.bf16.msra.mxu0 %v5079
        %5369 = vmatpush.bf16.msra.mxu0 %v5078
        %5370 = vmatpush.bf16.msra.mxu0 %v5077
        %5371 = vmatpush.bf16.msra.mxu0 %v5076
        %5372 = vmatpush.bf16.msra.mxu0 %v5075
        %5373 = vmatpush.bf16.msra.mxu0 %v5074
        %5374 = vmatmul.bf16.gmra.mxu0 %v4594
        %v5375 = vpop.f32.mrf.mxu0
        %v5376 = vadd.f32 %v5327, %v5375
        %v5377 = vpop.f32.mrf.mxu0
        %v5378 = vadd.f32 %v5329, %v5377
        %5379 = vmatmul.bf16.gmra.mxu0 %v4602
        %v5380 = vpop.f32.mrf.mxu0
        %v5381 = vadd.f32 %v5332, %v5380
        %v5382 = vpop.f32.mrf.mxu0
        %v5383 = vadd.f32 %v5334, %v5382
        %5384 = vmatmul.bf16.gmra.mxu0 %v4610
        %v5385 = vpop.f32.mrf.mxu0
        %v5386 = vadd.f32 %v5337, %v5385
        %v5387 = vpop.f32.mrf.mxu0
        %v5388 = vadd.f32 %v5339, %v5387
        %5389 = vmatmul.bf16.gmra.mxu0 %v4618
        %v5390 = vpop.f32.mrf.mxu0
        %v5391 = vadd.f32 %v5342, %v5390
        %v5392 = vpop.f32.mrf.mxu0
        %v5393 = vadd.f32 %v5344, %v5392
        %5394 = vmatmul.bf16.gmra.mxu0 %v4626
        %v5395 = vpop.f32.mrf.mxu0
        %v5396 = vadd.f32 %v5347, %v5395
        %v5397 = vpop.f32.mrf.mxu0
        %v5398 = vadd.f32 %v5349, %v5397
        %5399 = vmatmul.bf16.gmra.mxu0 %v4634
        %v5400 = vpop.f32.mrf.mxu0
        %v5401 = vadd.f32 %v5352, %v5400
        %v5402 = vpop.f32.mrf.mxu0
        %v5403 = vadd.f32 %v5354, %v5402
        %5404 = vmatmul.bf16.gmra.mxu0 %v4642
        %v5405 = vpop.f32.mrf.mxu0
        %v5406 = vadd.f32 %v5357, %v5405
        %v5407 = vpop.f32.mrf.mxu0
        %v5408 = vadd.f32 %v5359, %v5407
        %5409 = vmatmul.bf16.gmra.mxu0 %v4650
        %v5410 = vpop.f32.mrf.mxu0
        %v5411 = vadd.f32 %v5362, %v5410
        %v5412 = vpop.f32.mrf.mxu0
        %v5413 = vadd.f32 %v5364, %v5412
        %5414 = vdwg.mxu0
        %5415 = vmatpush.bf16.msra.mxu0 %v5089
        %5416 = vmatpush.bf16.msra.mxu0 %v5088
        %5417 = vmatpush.bf16.msra.mxu0 %v5087
        %5418 = vmatpush.bf16.msra.mxu0 %v5086
        %5419 = vmatpush.bf16.msra.mxu0 %v5085
        %5420 = vmatpush.bf16.msra.mxu0 %v5084
        %5421 = vmatpush.bf16.msra.mxu0 %v5083
        %5422 = vmatpush.bf16.msra.mxu0 %v5082
        %5423 = vmatmul.bf16.gmra.mxu0 %v4595
        %v5424 = vpop.f32.mrf.mxu0
        %v5425 = vadd.f32 %v5376, %v5424
        %v5426 = vpop.f32.mrf.mxu0
        %v5427 = vadd.f32 %v5378, %v5426
        %5428 = vmatmul.bf16.gmra.mxu0 %v4603
        %v5429 = vpop.f32.mrf.mxu0
        %v5430 = vadd.f32 %v5381, %v5429
        %v5431 = vpop.f32.mrf.mxu0
        %v5432 = vadd.f32 %v5383, %v5431
        %5433 = vmatmul.bf16.gmra.mxu0 %v4611
        %v5434 = vpop.f32.mrf.mxu0
        %v5435 = vadd.f32 %v5386, %v5434
        %v5436 = vpop.f32.mrf.mxu0
        %v5437 = vadd.f32 %v5388, %v5436
        %5438 = vmatmul.bf16.gmra.mxu0 %v4619
        %v5439 = vpop.f32.mrf.mxu0
        %v5440 = vadd.f32 %v5391, %v5439
        %v5441 = vpop.f32.mrf.mxu0
        %v5442 = vadd.f32 %v5393, %v5441
        %5443 = vmatmul.bf16.gmra.mxu0 %v4627
        %v5444 = vpop.f32.mrf.mxu0
        %v5445 = vadd.f32 %v5396, %v5444
        %v5446 = vpop.f32.mrf.mxu0
        %v5447 = vadd.f32 %v5398, %v5446
        %5448 = vmatmul.bf16.gmra.mxu0 %v4635
        %v5449 = vpop.f32.mrf.mxu0
        %v5450 = vadd.f32 %v5401, %v5449
        %v5451 = vpop.f32.mrf.mxu0
        %v5452 = vadd.f32 %v5403, %v5451
        %5453 = vmatmul.bf16.gmra.mxu0 %v4643
        %v5454 = vpop.f32.mrf.mxu0
        %v5455 = vadd.f32 %v5406, %v5454
        %v5456 = vpop.f32.mrf.mxu0
        %v5457 = vadd.f32 %v5408, %v5456
        %5458 = vmatmul.bf16.gmra.mxu0 %v4651
        %v5459 = vpop.f32.mrf.mxu0
        %v5460 = vadd.f32 %v5411, %v5459
        %v5461 = vpop.f32.mrf.mxu0
        %v5462 = vadd.f32 %v5413, %v5461
        %5463 = vdwg.mxu0
        %5464 = vmatpush.bf16.msra.mxu0 %v5097
        %5465 = vmatpush.bf16.msra.mxu0 %v5096
        %5466 = vmatpush.bf16.msra.mxu0 %v5095
        %5467 = vmatpush.bf16.msra.mxu0 %v5094
        %5468 = vmatpush.bf16.msra.mxu0 %v5093
        %5469 = vmatpush.bf16.msra.mxu0 %v5092
        %5470 = vmatpush.bf16.msra.mxu0 %v5091
        %5471 = vmatpush.bf16.msra.mxu0 %v5090
        %5472 = vmatmul.bf16.gmra.mxu0 %v4596
        %v5473 = vpop.f32.mrf.mxu0
        %v5474 = vadd.f32 %v5425, %v5473
        %v5475 = vpop.f32.mrf.mxu0
        %v5476 = vadd.f32 %v5427, %v5475
        %5477 = vmatmul.bf16.gmra.mxu0 %v4604
        %v5478 = vpop.f32.mrf.mxu0
        %v5479 = vadd.f32 %v5430, %v5478
        %v5480 = vpop.f32.mrf.mxu0
        %v5481 = vadd.f32 %v5432, %v5480
        %5482 = vmatmul.bf16.gmra.mxu0 %v4612
        %v5483 = vpop.f32.mrf.mxu0
        %v5484 = vadd.f32 %v5435, %v5483
        %v5485 = vpop.f32.mrf.mxu0
        %v5486 = vadd.f32 %v5437, %v5485
        %5487 = vmatmul.bf16.gmra.mxu0 %v4620
        %v5488 = vpop.f32.mrf.mxu0
        %v5489 = vadd.f32 %v5440, %v5488
        %v5490 = vpop.f32.mrf.mxu0
        %v5491 = vadd.f32 %v5442, %v5490
        %5492 = vmatmul.bf16.gmra.mxu0 %v4628
        %v5493 = vpop.f32.mrf.mxu0
        %v5494 = vadd.f32 %v5445, %v5493
        %v5495 = vpop.f32.mrf.mxu0
        %v5496 = vadd.f32 %v5447, %v5495
        %5497 = vmatmul.bf16.gmra.mxu0 %v4636
        %v5498 = vpop.f32.mrf.mxu0
        %v5499 = vadd.f32 %v5450, %v5498
        %v5500 = vpop.f32.mrf.mxu0
        %v5501 = vadd.f32 %v5452, %v5500
        %5502 = vmatmul.bf16.gmra.mxu0 %v4644
        %v5503 = vpop.f32.mrf.mxu0
        %v5504 = vadd.f32 %v5455, %v5503
        %v5505 = vpop.f32.mrf.mxu0
        %v5506 = vadd.f32 %v5457, %v5505
        %5507 = vmatmul.bf16.gmra.mxu0 %v4652
        %v5508 = vpop.f32.mrf.mxu0
        %v5509 = vadd.f32 %v5460, %v5508
        %v5510 = vpop.f32.mrf.mxu0
        %v5511 = vadd.f32 %v5462, %v5510
        %5512 = vdwg.mxu0
        %5513 = vmatpush.bf16.msra.mxu0 %v5105
        %5514 = vmatpush.bf16.msra.mxu0 %v5104
        %5515 = vmatpush.bf16.msra.mxu0 %v5103
        %5516 = vmatpush.bf16.msra.mxu0 %v5102
        %5517 = vmatpush.bf16.msra.mxu0 %v5101
        %5518 = vmatpush.bf16.msra.mxu0 %v5100
        %5519 = vmatpush.bf16.msra.mxu0 %v5099
        %5520 = vmatpush.bf16.msra.mxu0 %v5098
        %5521 = vmatmul.bf16.gmra.mxu0 %v4597
        %v5522 = vpop.f32.mrf.mxu0
        %v5523 = vadd.f32 %v5474, %v5522
        %v5524 = vpop.f32.mrf.mxu0
        %v5525 = vadd.f32 %v5476, %v5524
        %5526 = vmatmul.bf16.gmra.mxu0 %v4605
        %v5527 = vpop.f32.mrf.mxu0
        %v5528 = vadd.f32 %v5479, %v5527
        %v5529 = vpop.f32.mrf.mxu0
        %v5530 = vadd.f32 %v5481, %v5529
        %5531 = vmatmul.bf16.gmra.mxu0 %v4613
        %v5532 = vpop.f32.mrf.mxu0
        %v5533 = vadd.f32 %v5484, %v5532
        %v5534 = vpop.f32.mrf.mxu0
        %v5535 = vadd.f32 %v5486, %v5534
        %5536 = vmatmul.bf16.gmra.mxu0 %v4621
        %v5537 = vpop.f32.mrf.mxu0
        %v5538 = vadd.f32 %v5489, %v5537
        %v5539 = vpop.f32.mrf.mxu0
        %v5540 = vadd.f32 %v5491, %v5539
        %5541 = vmatmul.bf16.gmra.mxu0 %v4629
        %v5542 = vpop.f32.mrf.mxu0
        %v5543 = vadd.f32 %v5494, %v5542
        %v5544 = vpop.f32.mrf.mxu0
        %v5545 = vadd.f32 %v5496, %v5544
        %5546 = vmatmul.bf16.gmra.mxu0 %v4637
        %v5547 = vpop.f32.mrf.mxu0
        %v5548 = vadd.f32 %v5499, %v5547
        %v5549 = vpop.f32.mrf.mxu0
        %v5550 = vadd.f32 %v5501, %v5549
        %5551 = vmatmul.bf16.gmra.mxu0 %v4645
        %v5552 = vpop.f32.mrf.mxu0
        %v5553 = vadd.f32 %v5504, %v5552
        %v5554 = vpop.f32.mrf.mxu0
        %v5555 = vadd.f32 %v5506, %v5554
        %5556 = vmatmul.bf16.gmra.mxu0 %v4653
        %v5557 = vpop.f32.mrf.mxu0
        %v5558 = vadd.f32 %v5509, %v5557
        %v5559 = vpop.f32.mrf.mxu0
        %v5560 = vadd.f32 %v5511, %v5559
        %5561 = vdwg.mxu0
        %v5562 = vadd.f32 %v3284, %v5523
        %v5563 = vadd.f32 %v3285, %v5525
        %v5564 = vadd.f32 %v3286, %v5528
        %v5565 = vadd.f32 %v3287, %v5530
        %v5566 = vadd.f32 %v3288, %v5533
        %v5567 = vadd.f32 %v3289, %v5535
        %v5568 = vadd.f32 %v3290, %v5538
        %v5569 = vadd.f32 %v3291, %v5540
        %v5570 = vadd.f32 %v3292, %v5543
        %v5571 = vadd.f32 %v3293, %v5545
        %v5572 = vadd.f32 %v3294, %v5548
        %v5573 = vadd.f32 %v3295, %v5550
        %v5574 = vadd.f32 %v3296, %v5553
        %v5575 = vadd.f32 %v3297, %v5555
        %v5576 = vadd.f32 %v3298, %v5558
        %v5577 = vadd.f32 %v3299, %v5560
        %5578 = vst [vmem:[%s599] sm:$0xff] %v5562
        %5579 = vst [vmem:[%s599 + $0x8] sm:$0xff] %v5563
        %5580 = vst [vmem:[%s599 + $0x10] sm:$0xff] %v5564
        %5581 = vst [vmem:[%s599 + $0x18] sm:$0xff] %v5565
        %5582 = vst [vmem:[%s599 + $0x20] sm:$0xff] %v5566
        %5583 = vst [vmem:[%s599 + $0x28] sm:$0xff] %v5567
        %5584 = vst [vmem:[%s599 + $0x30] sm:$0xff] %v5568
        %5585 = vst [vmem:[%s599 + $0x38] sm:$0xff] %v5569
        %5586 = vst [vmem:[%s599 + $0x40] sm:$0xff] %v5570
        %5587 = vst [vmem:[%s599 + $0x48] sm:$0xff] %v5571
        %5588 = vst [vmem:[%s599 + $0x50] sm:$0xff] %v5572
        %5589 = vst [vmem:[%s599 + $0x58] sm:$0xff] %v5573
        %5590 = vst [vmem:[%s599 + $0x60] sm:$0xff] %v5574
        %5591 = vst [vmem:[%s599 + $0x68] sm:$0xff] %v5575
        %5592 = vst [vmem:[%s599 + $0x70] sm:$0xff] %v5576
        %5593 = vst [vmem:[%s599 + $0x78] sm:$0xff] %v5577
        %s5594 = sand.u32 %s321, 1
        %s5595 = scalar_lea.sflag [#allocation4], %s5594
        %s5596 = sand.u32 %s321, 1
        %s5597 = smul.addr %s5596, 128
        %s5598 = scalar_lea.vmem [#allocation19], %s5597
        // Predicated region
        $region113: #{tpu_custom_call.1} parent=71 // pred_check
          %p5599 = pneg %p331
        $region114: #{tpu_custom_call.1} parent=71 // pred_check_branch
          %5601 = sbr.rel (%p5599) target = $region116
        $region115: #{tpu_custom_call.1} parent=71 // pred_region
          %5603 = vsyncadd %s5595, 0
          %s5604 = smul.addr %s35, 16
          %s5605 = smul.addr %s5604, 8
          %s5606 = scalar_lea.hbm %s13, %s5605
          %s5607 = sshll.u32 %s5598, 4
          %s5608 = int_to_ptr.vmem [resolvable:$true] %s5607
          %s5609 = sshll.u32 %s5606, 4
          %s5610 = int_to_ptr.hbm [resolvable:$true] %s5609
          %5615 = dma.vmem_to_hbm [thread:$0]  %s5608, 2048, %s5610, %s5595, 128, 128, 8
        $region116: #{tpu_custom_call.1} parent=71 // pred_fallthru
          _
      $region72: #{tpu_custom_call.1} parent=5 // pred_fallthru
        _
      %p5616 = scmp.le.s32.totalorder 2, %s30
      // Predicated region
      $region117: #{tpu_custom_call.1} parent=5 // pred_check
        %p5617 = pneg %p5616
      $region118: #{tpu_custom_call.1} parent=5 // pred_check_branch
        %5619 = sbr.rel (%p5617) target = $region120
      $region119: #{tpu_custom_call.1} parent=5 // pred_region
        %s5620 = ssub.s32 %s30, 2
        // Predicated region
        $region121: #{tpu_custom_call.1} parent=119 // pred_check
          %p5621 = pneg %p337
        $region122: #{tpu_custom_call.1} parent=119 // pred_check_branch
          %5623 = sbr.rel (%p5621) target = $region124
        $region123: #{tpu_custom_call.1} parent=119 // pred_region
          %s5624 = sand.u32 %s322, 1
          %s5625 = scalar_lea.sflag [#allocation4], %s5624
          %s5626 = sand.u32 %s322, 1
          %s5627 = smul.addr %s5626, 128
          %s5628 = scalar_lea.vmem [#allocation19], %s5627
          %5630 = dma.done %s5625, 2048
        $region124: #{tpu_custom_call.1} parent=119 // pred_fallthru
          _
      $region120: #{tpu_custom_call.1} parent=5 // pred_fallthru
        _
    $region6: #{tpu_custom_call.1} parent=1 // loop_footer
      %s34 = sadd.s32 1, %s30
    $region7: #{tpu_custom_call.1} parent=1 // loop_footer_branch
      %29 = sbr.rel target = $region3
    $region8: #{tpu_custom_call.1} parent=1 // loop_exit
      _
    %5631 = vsyncpa [#allocation3], 1
    %s5632 = scalar_lea.sflag [#allocation3], 1
    %5633 = vsyncpa %s5632, 1
    %5634 = vsyncpa [#allocation6], 1
    %5635 = vsyncpa [#allocation9], 1
    %5636 = vsyncpa [#allocation12], 1
    %5637 = vsyncpa [#allocation15], 1
    %5638 = vsyncpa [#allocation18], 1
    %5639 = vsyncpa [#allocation4], 1
    %s5640 = scalar_lea.sflag [#allocation4], 1
    %5641 = vsyncpa %s5640, 1

</llo_original>
